<compile_context>
chip_gen: v7x
topology: tpu7x:2x2x1
jax: 0.10.0
libtpu: 0.0.40
codegen_flags: <defaults>
</compile_context>

<pallas_src>
import functools

import jax
import jax.numpy as jnp
from jax import lax
from jax.experimental import pallas as pl
from jax.experimental.pallas import tpu as pltpu

EPS = 1e-5
NEG_SLOPE = 0.2
# Max flattened-output rows per tile.  Per-step footprint at tm=1024, K=1024
# is ~2 MiB (x2 buffers) + ~256 KiB weights/outputs: safe on every generation
# (v5e 16 MiB default scoped VMEM, v7x 64 MiB physical).
MAX_TM = 1024


def _cdiv(a, b):
    return (a + b - 1) // b


def _round_up(a, b):
    return _cdiv(a, b) * b


def _lrelu(v):
    return jnp.where(v >= 0, v, NEG_SLOPE * v)


# ------------------------------ Pallas kernel -------------------------------

def _conv_kernel(x_ref, w_ref, b_ref, *out_refs, add_bias, apply_act,
                 emit_stats):
    # x_ref: (tm, K)   bf16 packed im2col rows (all 16 taps folded into K)
    # w_ref: (K, Cout) bf16     b_ref: (1, Cout) f32
    # out_refs[0]: (tm, Cout)   conv output (real channel width)
    # out_refs[1]: (8, Cout) f32  row0 = sum, row1 = sum-of-squares (BN layers)
    o_ref = out_refs[0]
    acc = jnp.dot(x_ref[...], w_ref[...], preferred_element_type=jnp.float32)
    if add_bias:
        acc = acc + b_ref[...]
    if apply_act:                       # LeakyReLU(0.2); no-BN layers only
        acc = jnp.where(acc >= 0, acc, NEG_SLOPE * acc)
    o_ref[...] = acc.astype(o_ref.dtype)
    if emit_stats:                      # per-tile BN partial statistics
        stat_ref = out_refs[1]
        s1 = jnp.sum(acc, axis=0, keepdims=True)          # (1, Cout)
        s2 = jnp.sum(acc * acc, axis=0, keepdims=True)    # (1, Cout)
        rows = lax.broadcasted_iota(jnp.int32, stat_ref.shape, 0)
        stat_ref[...] = jnp.where(rows == 0, s1,
                                  jnp.where(rows == 1, s2, 0.0))


def pallas_conv(lhs, w, bias, *, tm, n_tiles, add_bias, apply_act, emit_stats,
                out_dtype):
    N, m_pad, k_p = lhs.shape
    cout = w.shape[1]
    kernel = functools.partial(_conv_kernel, add_bias=add_bias,
                               apply_act=apply_act, emit_stats=emit_stats)
    out_shape = jax.ShapeDtypeStruct((N, m_pad, cout), out_dtype)
    out_spec = pl.BlockSpec((None, tm, cout), lambda n, m: (n, m, 0))
    if emit_stats:
        out_shape = (out_shape,
                     jax.ShapeDtypeStruct((N, n_tiles * 8, cout), jnp.float32))
        out_spec = (out_spec,
                    pl.BlockSpec((None, 8, cout), lambda n, m: (n, m, 0)))
    return pl.pallas_call(
        kernel,
        out_shape=out_shape,
        grid=(N, n_tiles),
        in_specs=[
            # LHS is row-blocked: each grid step only touches its own tile.
            pl.BlockSpec((None, tm, k_p), lambda n, m: (n, m, 0)),
            pl.BlockSpec((k_p, cout), lambda n, m: (0, 0)),
            pl.BlockSpec((1, cout), lambda n, m: (0, 0)),
        ],
        out_specs=out_spec,
        compiler_params=pltpu.CompilerParams(
            dimension_semantics=("parallel", "parallel")),
    )(lhs, w, bias)


# ------------------------------- layer glue ---------------------------------

def conv_layer(x_nhwc, pre_fn, layer):
    """Conv2d(k=4, p=1, stride 1/2) [+ bias/LeakyReLU fused in-kernel].

    `pre_fn` is the previous layer's folded BN scale/shift + LeakyReLU; it is
    applied here, fused by XLA into the im2col build (no separate HBM pass).
    Returns (conv output NHWC at real channel width, next layer's pre_fn).
    """
    stride, cin, cout = layer["stride"], layer["cin"], layer["cout"]
    w, bias = layer["w"], layer["bias"]
    k_p = w.shape[0]

    x = x_nhwc
    if pre_fn is not None:
        x = pre_fn(x.astype(jnp.float32))
    x = x.astype(jnp.bfloat16)
    N, H, W, C = x.shape
    xp = jnp.pad(x, ((0, 0), (1, 1), (1, 1), (0, 0)))       # spatial pad = 1
    OH = (H + 2 - 4) // stride + 1
    OW = (W + 2 - 4) // stride + 1

    # Packed im2col: taps concatenated along channels -> K = 16*Cin
    # (tap order kh*4+kw, Cin contiguous within a tap; matches weight layout).
    taps = [xp[:, kh:kh + stride * (OH - 1) + 1:stride,
               kw:kw + stride * (OW - 1) + 1:stride, :]
            for kh in range(4) for kw in range(4)]
    lhs = jnp.concatenate(taps, axis=-1).reshape(N, OH * OW, 16 * cin)

    m = OH * OW
    tm = min(MAX_TM, _round_up(m, 16))
    n_tiles = _cdiv(m, tm)
    m_pad = tm * n_tiles
    lhs = jnp.pad(lhs, ((0, 0), (0, m_pad - m), (0, k_p - 16 * cin)))

    has_bn = layer["bn"] is not None
    if has_bn:
        # Raw conv (no bias / no act); in-kernel per-tile BN partial stats.
        y, stats = pallas_conv(lhs, w, bias, tm=tm, n_tiles=n_tiles,
                               add_bias=False, apply_act=False,
                               emit_stats=True, out_dtype=jnp.bfloat16)
        cnt = float(N * m)                       # padded rows contribute zero
        mean = jnp.sum(stats[:, 0::8, :], axis=(0, 1)) / cnt
        meansq = jnp.sum(stats[:, 1::8, :], axis=(0, 1)) / cnt
        var = jnp.maximum(meansq - mean * mean, 0.0)
        gamma, beta = layer["bn"]
        scale = gamma / jnp.sqrt(var + EPS)
        shift = beta - mean * scale
        next_fn = lambda v, s=scale, t=shift: _lrelu(v * s + t)
    else:
        fuse_act = layer["act"]
        out_dtype = jnp.bfloat16 if fuse_act else jnp.float32
        y = pallas_conv(lhs, w, bias, tm=tm, n_tiles=n_tiles,
                        add_bias=True, apply_act=fuse_act,
                        emit_stats=False, out_dtype=out_dtype)
        next_fn = None

    out = y[:, :m, :].reshape(N, OH, OW, cout)
    return out, next_fn


def avgpool_3x3_s2_p1(x_nhwc):
    # nn.AvgPool2d(kernel_size=3, stride=2, padding=1, count_include_pad=False)
    N, H, W, C = x_nhwc.shape
    pad = ((0, 0), (1, 1), (1, 1), (0, 0))
    zero = jnp.array(0.0, x_nhwc.dtype)
    s = lax.reduce_window(x_nhwc, zero, lax.add,
                          (1, 3, 3, 1), (1, 2, 2, 1), pad)
    cnt = lax.reduce_window(jnp.ones((1, H, W, 1), x_nhwc.dtype), zero,
                            lax.add, (1, 3, 3, 1), (1, 2, 2, 1), pad)
    return s / cnt


# --------------------------- parameter building -----------------------------

def _conv_w(key, cout, cin, k_p):
    # nn.init.normal_(w, 0.0, 0.02); torch layout (Cout, Cin, KH, KW)
    w = 0.02 * jax.random.normal(key, (cout, cin, 4, 4), jnp.float32)
    w = jnp.transpose(w, (2, 3, 1, 0)).reshape(16 * cin, cout)  # (kh,kw,cin)→K
    w = jnp.pad(w, ((0, k_p - 16 * cin), (0, 0)))
    return w.astype(jnp.bfloat16)


def init_patchgan(key, in_channels, features_d, n_layers):
    n_convs = n_layers + 2
    keys = jax.random.split(key, 2 * n_convs)
    ki = iter(range(2 * n_convs))
    layers = []

    def make(cin, cout, stride, use_bn, act):
        k_p = max(128, _round_up(16 * cin, 128))       # taps folded into K
        w = _conv_w(keys[next(ki)], cout, cin, k_p)
        bias = jnp.zeros((1, cout), jnp.float32)       # constant 0 init (spec)
        kb = keys[next(ki)]
        bn = None
        if use_bn:
            gamma = 1.0 + 0.02 * jax.random.normal(kb, (cout,), jnp.float32)
            beta = jnp.zeros((cout,), jnp.float32)
            bn = (gamma, beta)
        return dict(w=w, bias=bias, stride=stride, bn=bn, act=act,
                    cin=cin, cout=cout)

    # conv(stride 2, bias) + LeakyReLU
    layers.append(make(in_channels, features_d, 2, False, True))
    nf_mult = 1
    for n in range(1, n_layers):
        nf_prev, nf_mult = nf_mult, min(2 ** n, 8)
        layers.append(make(features_d * nf_prev, features_d * nf_mult,
                           2, True, True))
    nf_prev, nf_mult = nf_mult, min(2 ** n_layers, 8)
    layers.append(make(features_d * nf_prev, features_d * nf_mult,
                       1, True, True))
    # final 1-channel conv (bias, no activation; use_sigmoid=False)
    layers.append(make(features_d * nf_mult, 1, 1, False, False))
    return layers


# --------------------------------- forward ----------------------------------

def patchgan_forward(layers, x_nhwc):
    act, pre_fn = x_nhwc, None
    for layer in layers:
        act, pre_fn = conv_layer(act, pre_fn, layer)
    return act                                  # (N, OH, OW, 1) f32


def multiscale_forward(params_list, rgb_nchw, ms_nchw):
    x = jnp.concatenate([rgb_nchw, ms_nchw], axis=1)    # cat along channels
    x = jnp.transpose(x, (0, 2, 3, 1))                  # NCHW -> NHWC (f32)
    results = []
    for i, layers in enumerate(params_list):
        if i > 0:
            x = avgpool_3x3_s2_p1(x)
        out = patchgan_forward(layers, x)
        results.append(jnp.transpose(out, (0, 3, 1, 2)))    # back to NCHW
    return results


# ----------------------------------- main ------------------------------------

if __name__ == "__main__":
    key = jax.random.PRNGKey(0)
    k_params, k_rgb, k_ms = jax.random.split(key, 3)

    in_channels = 4      # 3 RGB + 1 multispectral
    features_d = 8
    n_scales = 3
    n_layers = 3

    pkeys = jax.random.split(k_params, n_scales)
    params_list = [init_patchgan(pkeys[i], in_channels, features_d, n_layers - i)
                   for i in range(n_scales)]

    N, H, W = 2, 32, 32
    rgb = jax.random.normal(k_rgb, (N, 3, H, W), jnp.float32)
    ms = jax.random.normal(k_ms, (N, in_channels - 3, H, W), jnp.float32)

    fwd = jax.jit(lambda r, m: multiscale_forward(params_list, r, m))
    outs = jax.block_until_ready(fwd(rgb, ms))

    assert len(outs) == n_scales
    for o in outs:
        assert o.shape == (N, 1, 2, 2), o.shape

    print("KERNEL_OK")
</pallas_src>

<mosaic_0001>
module attributes {stable_mosaic.version = 11 : i64} {
  func.func @_conv_kernel(%arg0: i32, %arg1: i32, %arg2: memref<1x256x128xbf16, #tpu.memory_space<vmem>>, %arg3: memref<128x8xbf16, #tpu.memory_space<vmem>>, %arg4: memref<1x8xf32, #tpu.memory_space<vmem>>, %arg5: memref<1x256x8xbf16, #tpu.memory_space<vmem>>) attributes {dimension_semantics = [#tpu.dimension_semantics<parallel>, #tpu.dimension_semantics<parallel>], iteration_bounds = array<i64: 2, 1>, scalar_prefetch = 0 : i64, scratch_operands = 0 : i64, tpu.core_type = #tpu.core_type<tc>, window_params = [{transform_indices = @transform_0, window_bounds = array<i64: 1, 256, 128>}, {pipeline_mode = #tpu.pipeline_mode<synchronous>, transform_indices = @transform_1, window_bounds = array<i64: 128, 8>}, {pipeline_mode = #tpu.pipeline_mode<synchronous>, transform_indices = @transform_2, window_bounds = array<i64: 1, 8>}, {transform_indices = @transform_3, window_bounds = array<i64: 1, 256, 8>}]} {
    %c0 = arith.constant 0 : index
    %c0_0 = arith.constant 0 : index
    %c0_1 = arith.constant 0 : index
    %0 = vector.load %arg2[%c0, %c0_0, %c0_1] : memref<1x256x128xbf16, #tpu.memory_space<vmem>>, vector<1x256x128xbf16>
    %1 = vector.shape_cast %0 : vector<1x256x128xbf16> to vector<256x128xbf16>
    %c0_2 = arith.constant 0 : index
    %c0_3 = arith.constant 0 : index
    %2 = vector.load %arg3[%c0_2, %c0_3] : memref<128x8xbf16, #tpu.memory_space<vmem>>, vector<128x8xbf16>
    %cst = arith.constant dense<0.000000e+00> : vector<256x8xf32>
    %3 = tpu.matmul %1, %2, %cst {dimension_numbers = #tpu.dot_dimension_numbers<[1], [0], [0], [1], [0, 0, 1, 1], [], []>} : vector<256x128xbf16>, vector<128x8xbf16>, vector<256x8xf32> -> vector<256x8xf32>
    %c0_4 = arith.constant 0 : index
    %c0_5 = arith.constant 0 : index
    %4 = vector.load %arg4[%c0_4, %c0_5] : memref<1x8xf32, #tpu.memory_space<vmem>>, vector<1x8xf32>
    %5 = vector.broadcast %4 : vector<1x8xf32> to vector<256x8xf32>
    %6 = arith.addf %3, %5 : vector<256x8xf32>
    %cst_6 = arith.constant 0.000000e+00 : f32
    %7 = vector.broadcast %cst_6 : f32 to vector<256x8xf32>
    %8 = arith.cmpf oge, %6, %7 : vector<256x8xf32>
    %cst_7 = arith.constant 2.000000e-01 : f32
    %9 = vector.broadcast %cst_7 : f32 to vector<256x8xf32>
    %10 = arith.mulf %9, %6 : vector<256x8xf32>
    %11 = arith.select %8, %6, %10 : vector<256x8xi1>, vector<256x8xf32>
    %12 = arith.truncf %11 : vector<256x8xf32> to vector<256x8xbf16>
    %c0_8 = arith.constant 0 : index
    %c0_9 = arith.constant 0 : index
    %c0_10 = arith.constant 0 : index
    %13 = vector.load %arg5[%c0_8, %c0_9, %c0_10] : memref<1x256x8xbf16, #tpu.memory_space<vmem>>, vector<1x256x8xbf16>
    %14 = vector.shape_cast %13 : vector<1x256x8xbf16> to vector<256x8xbf16>
    %15 = vector.shape_cast %12 : vector<256x8xbf16> to vector<1x256x8xbf16>
    tpu.vector_store %arg5[%c0_8, %c0_9, %c0_10], %15 {strides = array<i32>} : memref<1x256x8xbf16, #tpu.memory_space<vmem>>, vector<1x256x8xbf16>,
    return
  }
  func.func @transform_0(%arg0: i32, %arg1: i32) -> (i32, i32, i32) {
    %c0_i32 = arith.constant 0 : i32
    %c0_i32_0 = arith.constant 0 : i32
    return %arg0, %arg1, %c0_i32 : i32, i32, i32
  }
  func.func @transform_1(%arg0: i32, %arg1: i32) -> (i32, i32) {
    %c0_i32 = arith.constant 0 : i32
    %c0_i32_0 = arith.constant 0 : i32
    %c0_i32_1 = arith.constant 0 : i32
    return %c0_i32, %c0_i32_0 : i32, i32
  }
  func.func @transform_2(%arg0: i32, %arg1: i32) -> (i32, i32) {
    %c0_i32 = arith.constant 0 : i32
    %c0_i32_0 = arith.constant 0 : i32
    %c0_i32_1 = arith.constant 0 : i32
    return %c0_i32, %c0_i32_0 : i32, i32
  }
  func.func @transform_3(%arg0: i32, %arg1: i32) -> (i32, i32, i32) {
    %c0_i32 = arith.constant 0 : i32
    %c0_i32_0 = arith.constant 0 : i32
    return %arg0, %arg1, %c0_i32 : i32, i32, i32
  }
}

module attributes {stable_mosaic.version = 11 : i64} {
  func.func @_conv_kernel(%arg0: i32, %arg1: i32, %arg2: memref<1x64x128xbf16, #tpu.memory_space<vmem>>, %arg3: memref<128x16xbf16, #tpu.memory_space<vmem>>, %arg4: memref<1x16xf32, #tpu.memory_space<vmem>>, %arg5: memref<1x64x16xbf16, #tpu.memory_space<vmem>>, %arg6: memref<1x8x16xf32, #tpu.memory_space<vmem>>) attributes {dimension_semantics = [#tpu.dimension_semantics<parallel>, #tpu.dimension_semantics<parallel>], iteration_bounds = array<i64: 2, 1>, scalar_prefetch = 0 : i64, scratch_operands = 0 : i64, tpu.core_type = #tpu.core_type<tc>, window_params = [{transform_indices = @transform_0, window_bounds = array<i64: 1, 64, 128>}, {pipeline_mode = #tpu.pipeline_mode<synchronous>, transform_indices = @transform_1, window_bounds = array<i64: 128, 16>}, {pipeline_mode = #tpu.pipeline_mode<synchronous>, transform_indices = @transform_2, window_bounds = array<i64: 1, 16>}, {transform_indices = @transform_3, window_bounds = array<i64: 1, 64, 16>}, {transform_indices = @transform_4, window_bounds = array<i64: 1, 8, 16>}]} {
    %c0 = arith.constant 0 : index
    %c0_0 = arith.constant 0 : index
    %c0_1 = arith.constant 0 : index
    %0 = vector.load %arg2[%c0, %c0_0, %c0_1] : memref<1x64x128xbf16, #tpu.memory_space<vmem>>, vector<1x64x128xbf16>
    %1 = vector.shape_cast %0 : vector<1x64x128xbf16> to vector<64x128xbf16>
    %c0_2 = arith.constant 0 : index
    %c0_3 = arith.constant 0 : index
    %2 = vector.load %arg3[%c0_2, %c0_3] : memref<128x16xbf16, #tpu.memory_space<vmem>>, vector<128x16xbf16>
    %cst = arith.constant dense<0.000000e+00> : vector<64x16xf32>
    %3 = tpu.matmul %1, %2, %cst {dimension_numbers = #tpu.dot_dimension_numbers<[1], [0], [0], [1], [0, 0, 1, 1], [], []>} : vector<64x128xbf16>, vector<128x16xbf16>, vector<64x16xf32> -> vector<64x16xf32>
    %4 = arith.truncf %3 : vector<64x16xf32> to vector<64x16xbf16>
    %c0_4 = arith.constant 0 : index
    %c0_5 = arith.constant 0 : index
    %c0_6 = arith.constant 0 : index
    %5 = vector.load %arg5[%c0_4, %c0_5, %c0_6] : memref<1x64x16xbf16, #tpu.memory_space<vmem>>, vector<1x64x16xbf16>
    %6 = vector.shape_cast %5 : vector<1x64x16xbf16> to vector<64x16xbf16>
    %7 = vector.shape_cast %4 : vector<64x16xbf16> to vector<1x64x16xbf16>
    tpu.vector_store %arg5[%c0_4, %c0_5, %c0_6], %7 {strides = array<i32>} : memref<1x64x16xbf16, #tpu.memory_space<vmem>>, vector<1x64x16xbf16>,
    %cst_7 = arith.constant dense<0.000000e+00> : vector<16xf32>
    %8 = vector.multi_reduction <add>, %3, %cst_7 [0] : vector<64x16xf32> to vector<16xf32>
    %9 = vector.shape_cast %8 : vector<16xf32> to vector<1x16xf32>
    %10 = arith.mulf %3, %3 : vector<64x16xf32>
    %cst_8 = arith.constant dense<0.000000e+00> : vector<16xf32>
    %11 = vector.multi_reduction <add>, %10, %cst_8 [0] : vector<64x16xf32> to vector<16xf32>
    %12 = vector.shape_cast %11 : vector<16xf32> to vector<1x16xf32>
    %13 = tpu.iota {dimensions = array<i32: 0>} : vector<8x16xi32>
    %c0_i32 = arith.constant 0 : i32
    %14 = vector.broadcast %c0_i32 : i32 to vector<8x16xi32>
    %15 = arith.cmpi eq, %13, %14 : vector<8x16xi32>
    %c1_i32 = arith.constant 1 : i32
    %16 = vector.broadcast %c1_i32 : i32 to vector<8x16xi32>
    %17 = arith.cmpi eq, %13, %16 : vector<8x16xi32>
    %cst_9 = arith.constant 0.000000e+00 : f32
    %18 = vector.shape_cast %12 : vector<1x16xf32> to vector<1x16xf32>
    %19 = vector.broadcast %18 : vector<1x16xf32> to vector<8x16xf32>
    %20 = vector.broadcast %cst_9 : f32 to vector<8x16xf32>
    %21 = arith.select %17, %19, %20 : vector<8x16xi1>, vector<8x16xf32>
    %22 = vector.shape_cast %9 : vector<1x16xf32> to vector<1x16xf32>
    %23 = vector.broadcast %22 : vector<1x16xf32> to vector<8x16xf32>
    %24 = arith.select %15, %23, %21 : vector<8x16xi1>, vector<8x16xf32>
    %c0_10 = arith.constant 0 : index
    %c0_11 = arith.constant 0 : index
    %c0_12 = arith.constant 0 : index
    %25 = vector.load %arg6[%c0_10, %c0_11, %c0_12] : memref<1x8x16xf32, #tpu.memory_space<vmem>>, vector<1x8x16xf32>
    %26 = vector.shape_cast %25 : vector<1x8x16xf32> to vector<8x16xf32>
    %27 = vector.shape_cast %24 : vector<8x16xf32> to vector<1x8x16xf32>
    tpu.vector_store %arg6[%c0_10, %c0_11, %c0_12], %27 {strides = array<i32>} : memref<1x8x16xf32, #tpu.memory_space<vmem>>, vector<1x8x16xf32>,
    return
  }
  func.func @transform_0(%arg0: i32, %arg1: i32) -> (i32, i32, i32) {
    %c0_i32 = arith.constant 0 : i32
    %c0_i32_0 = arith.constant 0 : i32
    return %arg0, %arg1, %c0_i32 : i32, i32, i32
  }
  func.func @transform_1(%arg0: i32, %arg1: i32) -> (i32, i32) {
    %c0_i32 = arith.constant 0 : i32
    %c0_i32_0 = arith.constant 0 : i32
    %c0_i32_1 = arith.constant 0 : i32
    return %c0_i32, %c0_i32_0 : i32, i32
  }
  func.func @transform_2(%arg0: i32, %arg1: i32) -> (i32, i32) {
    %c0_i32 = arith.constant 0 : i32
    %c0_i32_0 = arith.constant 0 : i32
    %c0_i32_1 = arith.constant 0 : i32
    return %c0_i32, %c0_i32_0 : i32, i32
  }
  func.func @transform_3(%arg0: i32, %arg1: i32) -> (i32, i32, i32) {
    %c0_i32 = arith.constant 0 : i32
    %c0_i32_0 = arith.constant 0 : i32
    return %arg0, %arg1, %c0_i32 : i32, i32, i32
  }
  func.func @transform_4(%arg0: i32, %arg1: i32) -> (i32, i32, i32) {
    %c0_i32 = arith.constant 0 : i32
    %c0_i32_0 = arith.constant 0 : i32
    return %arg0, %arg1, %c0_i32 : i32, i32, i32
  }
}

module attributes {stable_mosaic.version = 11 : i64} {
  func.func @_conv_kernel(%arg0: i32, %arg1: i32, %arg2: memref<1x16x256xbf16, #tpu.memory_space<vmem>>, %arg3: memref<256x32xbf16, #tpu.memory_space<vmem>>, %arg4: memref<1x32xf32, #tpu.memory_space<vmem>>, %arg5: memref<1x16x32xbf16, #tpu.memory_space<vmem>>, %arg6: memref<1x8x32xf32, #tpu.memory_space<vmem>>) attributes {dimension_semantics = [#tpu.dimension_semantics<parallel>, #tpu.dimension_semantics<parallel>], iteration_bounds = array<i64: 2, 1>, scalar_prefetch = 0 : i64, scratch_operands = 0 : i64, tpu.core_type = #tpu.core_type<tc>, window_params = [{transform_indices = @transform_0, window_bounds = array<i64: 1, 16, 256>}, {pipeline_mode = #tpu.pipeline_mode<synchronous>, transform_indices = @transform_1, window_bounds = array<i64: 256, 32>}, {pipeline_mode = #tpu.pipeline_mode<synchronous>, transform_indices = @transform_2, window_bounds = array<i64: 1, 32>}, {transform_indices = @transform_3, window_bounds = array<i64: 1, 16, 32>}, {transform_indices = @transform_4, window_bounds = array<i64: 1, 8, 32>}]} {
    %c0 = arith.constant 0 : index
    %c0_0 = arith.constant 0 : index
    %c0_1 = arith.constant 0 : index
    %0 = vector.load %arg2[%c0, %c0_0, %c0_1] : memref<1x16x256xbf16, #tpu.memory_space<vmem>>, vector<1x16x256xbf16>
    %1 = vector.shape_cast %0 : vector<1x16x256xbf16> to vector<16x256xbf16>
    %c0_2 = arith.constant 0 : index
    %c0_3 = arith.constant 0 : index
    %2 = vector.load %arg3[%c0_2, %c0_3] : memref<256x32xbf16, #tpu.memory_space<vmem>>, vector<256x32xbf16>
    %cst = arith.constant dense<0.000000e+00> : vector<16x32xf32>
    %3 = tpu.matmul %1, %2, %cst {dimension_numbers = #tpu.dot_dimension_numbers<[1], [0], [0], [1], [0, 0, 1, 1], [], []>} : vector<16x256xbf16>, vector<256x32xbf16>, vector<16x32xf32> -> vector<16x32xf32>
    %4 = arith.truncf %3 : vector<16x32xf32> to vector<16x32xbf16>
    %c0_4 = arith.constant 0 : index
    %c0_5 = arith.constant 0 : index
    %c0_6 = arith.constant 0 : index
    %5 = vector.load %arg5[%c0_4, %c0_5, %c0_6] : memref<1x16x32xbf16, #tpu.memory_space<vmem>>, vector<1x16x32xbf16>
    %6 = vector.shape_cast %5 : vector<1x16x32xbf16> to vector<16x32xbf16>
    %7 = vector.shape_cast %4 : vector<16x32xbf16> to vector<1x16x32xbf16>
    tpu.vector_store %arg5[%c0_4, %c0_5, %c0_6], %7 {strides = array<i32>} : memref<1x16x32xbf16, #tpu.memory_space<vmem>>, vector<1x16x32xbf16>,
    %cst_7 = arith.constant dense<0.000000e+00> : vector<32xf32>
    %8 = vector.multi_reduction <add>, %3, %cst_7 [0] : vector<16x32xf32> to vector<32xf32>
    %9 = vector.shape_cast %8 : vector<32xf32> to vector<1x32xf32>
    %10 = arith.mulf %3, %3 : vector<16x32xf32>
    %cst_8 = arith.constant dense<0.000000e+00> : vector<32xf32>
    %11 = vector.multi_reduction <add>, %10, %cst_8 [0] : vector<16x32xf32> to vector<32xf32>
    %12 = vector.shape_cast %11 : vector<32xf32> to vector<1x32xf32>
    %13 = tpu.iota {dimensions = array<i32: 0>} : vector<8x32xi32>
    %c0_i32 = arith.constant 0 : i32
    %14 = vector.broadcast %c0_i32 : i32 to vector<8x32xi32>
    %15 = arith.cmpi eq, %13, %14 : vector<8x32xi32>
    %c1_i32 = arith.constant 1 : i32
    %16 = vector.broadcast %c1_i32 : i32 to vector<8x32xi32>
    %17 = arith.cmpi eq, %13, %16 : vector<8x32xi32>
    %cst_9 = arith.constant 0.000000e+00 : f32
    %18 = vector.shape_cast %12 : vector<1x32xf32> to vector<1x32xf32>
    %19 = vector.broadcast %18 : vector<1x32xf32> to vector<8x32xf32>
    %20 = vector.broadcast %cst_9 : f32 to vector<8x32xf32>
    %21 = arith.select %17, %19, %20 : vector<8x32xi1>, vector<8x32xf32>
    %22 = vector.shape_cast %9 : vector<1x32xf32> to vector<1x32xf32>
    %23 = vector.broadcast %22 : vector<1x32xf32> to vector<8x32xf32>
    %24 = arith.select %15, %23, %21 : vector<8x32xi1>, vector<8x32xf32>
    %c0_10 = arith.constant 0 : index
    %c0_11 = arith.constant 0 : index
    %c0_12 = arith.constant 0 : index
    %25 = vector.load %arg6[%c0_10, %c0_11, %c0_12] : memref<1x8x32xf32, #tpu.memory_space<vmem>>, vector<1x8x32xf32>
    %26 = vector.shape_cast %25 : vector<1x8x32xf32> to vector<8x32xf32>
    %27 = vector.shape_cast %24 : vector<8x32xf32> to vector<1x8x32xf32>
    tpu.vector_store %arg6[%c0_10, %c0_11, %c0_12], %27 {strides = array<i32>} : memref<1x8x32xf32, #tpu.memory_space<vmem>>, vector<1x8x32xf32>,
    return
  }
  func.func @transform_0(%arg0: i32, %arg1: i32) -> (i32, i32, i32) {
    %c0_i32 = arith.constant 0 : i32
    %c0_i32_0 = arith.constant 0 : i32
    return %arg0, %arg1, %c0_i32 : i32, i32, i32
  }
  func.func @transform_1(%arg0: i32, %arg1: i32) -> (i32, i32) {
    %c0_i32 = arith.constant 0 : i32
    %c0_i32_0 = arith.constant 0 : i32
    %c0_i32_1 = arith.constant 0 : i32
    return %c0_i32, %c0_i32_0 : i32, i32
  }
  func.func @transform_2(%arg0: i32, %arg1: i32) -> (i32, i32) {
    %c0_i32 = arith.constant 0 : i32
    %c0_i32_0 = arith.constant 0 : i32
    %c0_i32_1 = arith.constant 0 : i32
    return %c0_i32, %c0_i32_0 : i32, i32
  }
  func.func @transform_3(%arg0: i32, %arg1: i32) -> (i32, i32, i32) {
    %c0_i32 = arith.constant 0 : i32
    %c0_i32_0 = arith.constant 0 : i32
    return %arg0, %arg1, %c0_i32 : i32, i32, i32
  }
  func.func @transform_4(%arg0: i32, %arg1: i32) -> (i32, i32, i32) {
    %c0_i32 = arith.constant 0 : i32
    %c0_i32_0 = arith.constant 0 : i32
    return %arg0, %arg1, %c0_i32 : i32, i32, i32
  }
}

module attributes {stable_mosaic.version = 11 : i64} {
  func.func @_conv_kernel(%arg0: i32, %arg1: i32, %arg2: memref<1x16x512xbf16, #tpu.memory_space<vmem>>, %arg3: memref<512x64xbf16, #tpu.memory_space<vmem>>, %arg4: memref<1x64xf32, #tpu.memory_space<vmem>>, %arg5: memref<1x16x64xbf16, #tpu.memory_space<vmem>>, %arg6: memref<1x8x64xf32, #tpu.memory_space<vmem>>) attributes {dimension_semantics = [#tpu.dimension_semantics<parallel>, #tpu.dimension_semantics<parallel>], iteration_bounds = array<i64: 2, 1>, scalar_prefetch = 0 : i64, scratch_operands = 0 : i64, tpu.core_type = #tpu.core_type<tc>, window_params = [{transform_indices = @transform_0, window_bounds = array<i64: 1, 16, 512>}, {pipeline_mode = #tpu.pipeline_mode<synchronous>, transform_indices = @transform_1, window_bounds = array<i64: 512, 64>}, {pipeline_mode = #tpu.pipeline_mode<synchronous>, transform_indices = @transform_2, window_bounds = array<i64: 1, 64>}, {transform_indices = @transform_3, window_bounds = array<i64: 1, 16, 64>}, {transform_indices = @transform_4, window_bounds = array<i64: 1, 8, 64>}]} {
    %c0 = arith.constant 0 : index
    %c0_0 = arith.constant 0 : index
    %c0_1 = arith.constant 0 : index
    %0 = vector.load %arg2[%c0, %c0_0, %c0_1] : memref<1x16x512xbf16, #tpu.memory_space<vmem>>, vector<1x16x512xbf16>
    %1 = vector.shape_cast %0 : vector<1x16x512xbf16> to vector<16x512xbf16>
    %c0_2 = arith.constant 0 : index
    %c0_3 = arith.constant 0 : index
    %2 = vector.load %arg3[%c0_2, %c0_3] : memref<512x64xbf16, #tpu.memory_space<vmem>>, vector<512x64xbf16>
    %cst = arith.constant dense<0.000000e+00> : vector<16x64xf32>
    %3 = tpu.matmul %1, %2, %cst {dimension_numbers = #tpu.dot_dimension_numbers<[1], [0], [0], [1], [0, 0, 1, 1], [], []>} : vector<16x512xbf16>, vector<512x64xbf16>, vector<16x64xf32> -> vector<16x64xf32>
    %4 = arith.truncf %3 : vector<16x64xf32> to vector<16x64xbf16>
    %c0_4 = arith.constant 0 : index
    %c0_5 = arith.constant 0 : index
    %c0_6 = arith.constant 0 : index
    %5 = vector.load %arg5[%c0_4, %c0_5, %c0_6] : memref<1x16x64xbf16, #tpu.memory_space<vmem>>, vector<1x16x64xbf16>
    %6 = vector.shape_cast %5 : vector<1x16x64xbf16> to vector<16x64xbf16>
    %7 = vector.shape_cast %4 : vector<16x64xbf16> to vector<1x16x64xbf16>
    tpu.vector_store %arg5[%c0_4, %c0_5, %c0_6], %7 {strides = array<i32>} : memref<1x16x64xbf16, #tpu.memory_space<vmem>>, vector<1x16x64xbf16>,
    %cst_7 = arith.constant dense<0.000000e+00> : vector<64xf32>
    %8 = vector.multi_reduction <add>, %3, %cst_7 [0] : vector<16x64xf32> to vector<64xf32>
    %9 = vector.shape_cast %8 : vector<64xf32> to vector<1x64xf32>
    %10 = arith.mulf %3, %3 : vector<16x64xf32>
    %cst_8 = arith.constant dense<0.000000e+00> : vector<64xf32>
    %11 = vector.multi_reduction <add>, %10, %cst_8 [0] : vector<16x64xf32> to vector<64xf32>
    %12 = vector.shape_cast %11 : vector<64xf32> to vector<1x64xf32>
    %13 = tpu.iota {dimensions = array<i32: 0>} : vector<8x64xi32>
    %c0_i32 = arith.constant 0 : i32
    %14 = vector.broadcast %c0_i32 : i32 to vector<8x64xi32>
    %15 = arith.cmpi eq, %13, %14 : vector<8x64xi32>
    %c1_i32 = arith.constant 1 : i32
    %16 = vector.broadcast %c1_i32 : i32 to vector<8x64xi32>
    %17 = arith.cmpi eq, %13, %16 : vector<8x64xi32>
    %cst_9 = arith.constant 0.000000e+00 : f32
    %18 = vector.shape_cast %12 : vector<1x64xf32> to vector<1x64xf32>
    %19 = vector.broadcast %18 : vector<1x64xf32> to vector<8x64xf32>
    %20 = vector.broadcast %cst_9 : f32 to vector<8x64xf32>
    %21 = arith.select %17, %19, %20 : vector<8x64xi1>, vector<8x64xf32>
    %22 = vector.shape_cast %9 : vector<1x64xf32> to vector<1x64xf32>
    %23 = vector.broadcast %22 : vector<1x64xf32> to vector<8x64xf32>
    %24 = arith.select %15, %23, %21 : vector<8x64xi1>, vector<8x64xf32>
    %c0_10 = arith.constant 0 : index
    %c0_11 = arith.constant 0 : index
    %c0_12 = arith.constant 0 : index
    %25 = vector.load %arg6[%c0_10, %c0_11, %c0_12] : memref<1x8x64xf32, #tpu.memory_space<vmem>>, vector<1x8x64xf32>
    %26 = vector.shape_cast %25 : vector<1x8x64xf32> to vector<8x64xf32>
    %27 = vector.shape_cast %24 : vector<8x64xf32> to vector<1x8x64xf32>
    tpu.vector_store %arg6[%c0_10, %c0_11, %c0_12], %27 {strides = array<i32>} : memref<1x8x64xf32, #tpu.memory_space<vmem>>, vector<1x8x64xf32>,
    return
  }
  func.func @transform_0(%arg0: i32, %arg1: i32) -> (i32, i32, i32) {
    %c0_i32 = arith.constant 0 : i32
    %c0_i32_0 = arith.constant 0 : i32
    return %arg0, %arg1, %c0_i32 : i32, i32, i32
  }
  func.func @transform_1(%arg0: i32, %arg1: i32) -> (i32, i32) {
    %c0_i32 = arith.constant 0 : i32
    %c0_i32_0 = arith.constant 0 : i32
    %c0_i32_1 = arith.constant 0 : i32
    return %c0_i32, %c0_i32_0 : i32, i32
  }
  func.func @transform_2(%arg0: i32, %arg1: i32) -> (i32, i32) {
    %c0_i32 = arith.constant 0 : i32
    %c0_i32_0 = arith.constant 0 : i32
    %c0_i32_1 = arith.constant 0 : i32
    return %c0_i32, %c0_i32_0 : i32, i32
  }
  func.func @transform_3(%arg0: i32, %arg1: i32) -> (i32, i32, i32) {
    %c0_i32 = arith.constant 0 : i32
    %c0_i32_0 = arith.constant 0 : i32
    return %arg0, %arg1, %c0_i32 : i32, i32, i32
  }
  func.func @transform_4(%arg0: i32, %arg1: i32) -> (i32, i32, i32) {
    %c0_i32 = arith.constant 0 : i32
    %c0_i32_0 = arith.constant 0 : i32
    return %arg0, %arg1, %c0_i32 : i32, i32, i32
  }
}

module attributes {stable_mosaic.version = 11 : i64} {
  func.func @_conv_kernel(%arg0: i32, %arg1: i32, %arg2: memref<1x16x1024xbf16, #tpu.memory_space<vmem>>, %arg3: memref<1024x1xbf16, #tpu.memory_space<vmem>>, %arg4: memref<1x1xf32, #tpu.memory_space<vmem>>, %arg5: memref<1x16x1xf32, #tpu.memory_space<vmem>>) attributes {dimension_semantics = [#tpu.dimension_semantics<parallel>, #tpu.dimension_semantics<parallel>], iteration_bounds = array<i64: 2, 1>, scalar_prefetch = 0 : i64, scratch_operands = 0 : i64, tpu.core_type = #tpu.core_type<tc>, window_params = [{transform_indices = @transform_0, window_bounds = array<i64: 1, 16, 1024>}, {pipeline_mode = #tpu.pipeline_mode<synchronous>, transform_indices = @transform_1, window_bounds = array<i64: 1024, 1>}, {pipeline_mode = #tpu.pipeline_mode<synchronous>, transform_indices = @transform_2, window_bounds = array<i64: 1, 1>}, {transform_indices = @transform_3, window_bounds = array<i64: 1, 16, 1>}]} {
    %c0 = arith.constant 0 : index
    %c0_0 = arith.constant 0 : index
    %c0_1 = arith.constant 0 : index
    %0 = vector.load %arg2[%c0, %c0_0, %c0_1] : memref<1x16x1024xbf16, #tpu.memory_space<vmem>>, vector<1x16x1024xbf16>
    %1 = vector.shape_cast %0 : vector<1x16x1024xbf16> to vector<16x1024xbf16>
    %c0_2 = arith.constant 0 : index
    %c0_3 = arith.constant 0 : index
    %2 = vector.load %arg3[%c0_2, %c0_3] : memref<1024x1xbf16, #tpu.memory_space<vmem>>, vector<1024x1xbf16>
    %cst = arith.constant dense<0.000000e+00> : vector<16x1xf32>
    %3 = tpu.matmul %1, %2, %cst {dimension_numbers = #tpu.dot_dimension_numbers<[1], [0], [0], [1], [0, 0, 1, 1], [], []>} : vector<16x1024xbf16>, vector<1024x1xbf16>, vector<16x1xf32> -> vector<16x1xf32>
    %c0_4 = arith.constant 0 : index
    %c0_5 = arith.constant 0 : index
    %4 = vector.load %arg4[%c0_4, %c0_5] : memref<1x1xf32, #tpu.memory_space<vmem>>, vector<1x1xf32>
    %5 = vector.broadcast %4 : vector<1x1xf32> to vector<16x1xf32>
    %6 = arith.addf %3, %5 : vector<16x1xf32>
    %c0_6 = arith.constant 0 : index
    %c0_7 = arith.constant 0 : index
    %c0_8 = arith.constant 0 : index
    %7 = vector.load %arg5[%c0_6, %c0_7, %c0_8] : memref<1x16x1xf32, #tpu.memory_space<vmem>>, vector<1x16x1xf32>
    %8 = vector.shape_cast %7 : vector<1x16x1xf32> to vector<16x1xf32>
    %9 = vector.shape_cast %6 : vector<16x1xf32> to vector<1x16x1xf32>
    tpu.vector_store %arg5[%c0_6, %c0_7, %c0_8], %9 {strides = array<i32>} : memref<1x16x1xf32, #tpu.memory_space<vmem>>, vector<1x16x1xf32>,
    return
  }
  func.func @transform_0(%arg0: i32, %arg1: i32) -> (i32, i32, i32) {
    %c0_i32 = arith.constant 0 : i32
    %c0_i32_0 = arith.constant 0 : i32
    return %arg0, %arg1, %c0_i32 : i32, i32, i32
  }
  func.func @transform_1(%arg0: i32, %arg1: i32) -> (i32, i32) {
    %c0_i32 = arith.constant 0 : i32
    %c0_i32_0 = arith.constant 0 : i32
    %c0_i32_1 = arith.constant 0 : i32
    return %c0_i32, %c0_i32_0 : i32, i32
  }
  func.func @transform_2(%arg0: i32, %arg1: i32) -> (i32, i32) {
    %c0_i32 = arith.constant 0 : i32
    %c0_i32_0 = arith.constant 0 : i32
    %c0_i32_1 = arith.constant 0 : i32
    return %c0_i32, %c0_i32_0 : i32, i32
  }
  func.func @transform_3(%arg0: i32, %arg1: i32) -> (i32, i32, i32) {
    %c0_i32 = arith.constant 0 : i32
    %c0_i32_0 = arith.constant 0 : i32
    return %arg0, %arg1, %c0_i32 : i32, i32, i32
  }
}

module attributes {stable_mosaic.version = 11 : i64} {
  func.func @_conv_kernel(%arg0: i32, %arg1: i32, %arg2: memref<1x64x128xbf16, #tpu.memory_space<vmem>>, %arg3: memref<128x8xbf16, #tpu.memory_space<vmem>>, %arg4: memref<1x8xf32, #tpu.memory_space<vmem>>, %arg5: memref<1x64x8xbf16, #tpu.memory_space<vmem>>) attributes {dimension_semantics = [#tpu.dimension_semantics<parallel>, #tpu.dimension_semantics<parallel>], iteration_bounds = array<i64: 2, 1>, scalar_prefetch = 0 : i64, scratch_operands = 0 : i64, tpu.core_type = #tpu.core_type<tc>, window_params = [{transform_indices = @transform_0, window_bounds = array<i64: 1, 64, 128>}, {pipeline_mode = #tpu.pipeline_mode<synchronous>, transform_indices = @transform_1, window_bounds = array<i64: 128, 8>}, {pipeline_mode = #tpu.pipeline_mode<synchronous>, transform_indices = @transform_2, window_bounds = array<i64: 1, 8>}, {transform_indices = @transform_3, window_bounds = array<i64: 1, 64, 8>}]} {
    %c0 = arith.constant 0 : index
    %c0_0 = arith.constant 0 : index
    %c0_1 = arith.constant 0 : index
    %0 = vector.load %arg2[%c0, %c0_0, %c0_1] : memref<1x64x128xbf16, #tpu.memory_space<vmem>>, vector<1x64x128xbf16>
    %1 = vector.shape_cast %0 : vector<1x64x128xbf16> to vector<64x128xbf16>
    %c0_2 = arith.constant 0 : index
    %c0_3 = arith.constant 0 : index
    %2 = vector.load %arg3[%c0_2, %c0_3] : memref<128x8xbf16, #tpu.memory_space<vmem>>, vector<128x8xbf16>
    %cst = arith.constant dense<0.000000e+00> : vector<64x8xf32>
    %3 = tpu.matmul %1, %2, %cst {dimension_numbers = #tpu.dot_dimension_numbers<[1], [0], [0], [1], [0, 0, 1, 1], [], []>} : vector<64x128xbf16>, vector<128x8xbf16>, vector<64x8xf32> -> vector<64x8xf32>
    %c0_4 = arith.constant 0 : index
    %c0_5 = arith.constant 0 : index
    %4 = vector.load %arg4[%c0_4, %c0_5] : memref<1x8xf32, #tpu.memory_space<vmem>>, vector<1x8xf32>
    %5 = vector.broadcast %4 : vector<1x8xf32> to vector<64x8xf32>
    %6 = arith.addf %3, %5 : vector<64x8xf32>
    %cst_6 = arith.constant 0.000000e+00 : f32
    %7 = vector.broadcast %cst_6 : f32 to vector<64x8xf32>
    %8 = arith.cmpf oge, %6, %7 : vector<64x8xf32>
    %cst_7 = arith.constant 2.000000e-01 : f32
    %9 = vector.broadcast %cst_7 : f32 to vector<64x8xf32>
    %10 = arith.mulf %9, %6 : vector<64x8xf32>
    %11 = arith.select %8, %6, %10 : vector<64x8xi1>, vector<64x8xf32>
    %12 = arith.truncf %11 : vector<64x8xf32> to vector<64x8xbf16>
    %c0_8 = arith.constant 0 : index
    %c0_9 = arith.constant 0 : index
    %c0_10 = arith.constant 0 : index
    %13 = vector.load %arg5[%c0_8, %c0_9, %c0_10] : memref<1x64x8xbf16, #tpu.memory_space<vmem>>, vector<1x64x8xbf16>
    %14 = vector.shape_cast %13 : vector<1x64x8xbf16> to vector<64x8xbf16>
    %15 = vector.shape_cast %12 : vector<64x8xbf16> to vector<1x64x8xbf16>
    tpu.vector_store %arg5[%c0_8, %c0_9, %c0_10], %15 {strides = array<i32>} : memref<1x64x8xbf16, #tpu.memory_space<vmem>>, vector<1x64x8xbf16>,
    return
  }
  func.func @transform_0(%arg0: i32, %arg1: i32) -> (i32, i32, i32) {
    %c0_i32 = arith.constant 0 : i32
    %c0_i32_0 = arith.constant 0 : i32
    return %arg0, %arg1, %c0_i32 : i32, i32, i32
  }
  func.func @transform_1(%arg0: i32, %arg1: i32) -> (i32, i32) {
    %c0_i32 = arith.constant 0 : i32
    %c0_i32_0 = arith.constant 0 : i32
    %c0_i32_1 = arith.constant 0 : i32
    return %c0_i32, %c0_i32_0 : i32, i32
  }
  func.func @transform_2(%arg0: i32, %arg1: i32) -> (i32, i32) {
    %c0_i32 = arith.constant 0 : i32
    %c0_i32_0 = arith.constant 0 : i32
    %c0_i32_1 = arith.constant 0 : i32
    return %c0_i32, %c0_i32_0 : i32, i32
  }
  func.func @transform_3(%arg0: i32, %arg1: i32) -> (i32, i32, i32) {
    %c0_i32 = arith.constant 0 : i32
    %c0_i32_0 = arith.constant 0 : i32
    return %arg0, %arg1, %c0_i32 : i32, i32, i32
  }
}

module attributes {stable_mosaic.version = 11 : i64} {
  func.func @_conv_kernel(%arg0: i32, %arg1: i32, %arg2: memref<1x16x128xbf16, #tpu.memory_space<vmem>>, %arg3: memref<128x16xbf16, #tpu.memory_space<vmem>>, %arg4: memref<1x16xf32, #tpu.memory_space<vmem>>, %arg5: memref<1x16x16xbf16, #tpu.memory_space<vmem>>, %arg6: memref<1x8x16xf32, #tpu.memory_space<vmem>>) attributes {dimension_semantics = [#tpu.dimension_semantics<parallel>, #tpu.dimension_semantics<parallel>], iteration_bounds = array<i64: 2, 1>, scalar_prefetch = 0 : i64, scratch_operands = 0 : i64, tpu.core_type = #tpu.core_type<tc>, window_params = [{transform_indices = @transform_0, window_bounds = array<i64: 1, 16, 128>}, {pipeline_mode = #tpu.pipeline_mode<synchronous>, transform_indices = @transform_1, window_bounds = array<i64: 128, 16>}, {pipeline_mode = #tpu.pipeline_mode<synchronous>, transform_indices = @transform_2, window_bounds = array<i64: 1, 16>}, {transform_indices = @transform_3, window_bounds = array<i64: 1, 16, 16>}, {transform_indices = @transform_4, window_bounds = array<i64: 1, 8, 16>}]} {
    %c0 = arith.constant 0 : index
    %c0_0 = arith.constant 0 : index
    %c0_1 = arith.constant 0 : index
    %0 = vector.load %arg2[%c0, %c0_0, %c0_1] : memref<1x16x128xbf16, #tpu.memory_space<vmem>>, vector<1x16x128xbf16>
    %1 = vector.shape_cast %0 : vector<1x16x128xbf16> to vector<16x128xbf16>
    %c0_2 = arith.constant 0 : index
    %c0_3 = arith.constant 0 : index
    %2 = vector.load %arg3[%c0_2, %c0_3] : memref<128x16xbf16, #tpu.memory_space<vmem>>, vector<128x16xbf16>
    %cst = arith.constant dense<0.000000e+00> : vector<16x16xf32>
    %3 = tpu.matmul %1, %2, %cst {dimension_numbers = #tpu.dot_dimension_numbers<[1], [0], [0], [1], [0, 0, 1, 1], [], []>} : vector<16x128xbf16>, vector<128x16xbf16>, vector<16x16xf32> -> vector<16x16xf32>
    %4 = arith.truncf %3 : vector<16x16xf32> to vector<16x16xbf16>
    %c0_4 = arith.constant 0 : index
    %c0_5 = arith.constant 0 : index
    %c0_6 = arith.constant 0 : index
    %5 = vector.load %arg5[%c0_4, %c0_5, %c0_6] : memref<1x16x16xbf16, #tpu.memory_space<vmem>>, vector<1x16x16xbf16>
    %6 = vector.shape_cast %5 : vector<1x16x16xbf16> to vector<16x16xbf16>
    %7 = vector.shape_cast %4 : vector<16x16xbf16> to vector<1x16x16xbf16>
    tpu.vector_store %arg5[%c0_4, %c0_5, %c0_6], %7 {strides = array<i32>} : memref<1x16x16xbf16, #tpu.memory_space<vmem>>, vector<1x16x16xbf16>,
    %cst_7 = arith.constant dense<0.000000e+00> : vector<16xf32>
    %8 = vector.multi_reduction <add>, %3, %cst_7 [0] : vector<16x16xf32> to vector<16xf32>
    %9 = vector.shape_cast %8 : vector<16xf32> to vector<1x16xf32>
    %10 = arith.mulf %3, %3 : vector<16x16xf32>
    %cst_8 = arith.constant dense<0.000000e+00> : vector<16xf32>
    %11 = vector.multi_reduction <add>, %10, %cst_8 [0] : vector<16x16xf32> to vector<16xf32>
    %12 = vector.shape_cast %11 : vector<16xf32> to vector<1x16xf32>
    %13 = tpu.iota {dimensions = array<i32: 0>} : vector<8x16xi32>
    %c0_i32 = arith.constant 0 : i32
    %14 = vector.broadcast %c0_i32 : i32 to vector<8x16xi32>
    %15 = arith.cmpi eq, %13, %14 : vector<8x16xi32>
    %c1_i32 = arith.constant 1 : i32
    %16 = vector.broadcast %c1_i32 : i32 to vector<8x16xi32>
    %17 = arith.cmpi eq, %13, %16 : vector<8x16xi32>
    %cst_9 = arith.constant 0.000000e+00 : f32
    %18 = vector.shape_cast %12 : vector<1x16xf32> to vector<1x16xf32>
    %19 = vector.broadcast %18 : vector<1x16xf32> to vector<8x16xf32>
    %20 = vector.broadcast %cst_9 : f32 to vector<8x16xf32>
    %21 = arith.select %17, %19, %20 : vector<8x16xi1>, vector<8x16xf32>
    %22 = vector.shape_cast %9 : vector<1x16xf32> to vector<1x16xf32>
    %23 = vector.broadcast %22 : vector<1x16xf32> to vector<8x16xf32>
    %24 = arith.select %15, %23, %21 : vector<8x16xi1>, vector<8x16xf32>
    %c0_10 = arith.constant 0 : index
    %c0_11 = arith.constant 0 : index
    %c0_12 = arith.constant 0 : index
    %25 = vector.load %arg6[%c0_10, %c0_11, %c0_12] : memref<1x8x16xf32, #tpu.memory_space<vmem>>, vector<1x8x16xf32>
    %26 = vector.shape_cast %25 : vector<1x8x16xf32> to vector<8x16xf32>
    %27 = vector.shape_cast %24 : vector<8x16xf32> to vector<1x8x16xf32>
    tpu.vector_store %arg6[%c0_10, %c0_11, %c0_12], %27 {strides = array<i32>} : memref<1x8x16xf32, #tpu.memory_space<vmem>>, vector<1x8x16xf32>,
    return
  }
  func.func @transform_0(%arg0: i32, %arg1: i32) -> (i32, i32, i32) {
    %c0_i32 = arith.constant 0 : i32
    %c0_i32_0 = arith.constant 0 : i32
    return %arg0, %arg1, %c0_i32 : i32, i32, i32
  }
  func.func @transform_1(%arg0: i32, %arg1: i32) -> (i32, i32) {
    %c0_i32 = arith.constant 0 : i32
    %c0_i32_0 = arith.constant 0 : i32
    %c0_i32_1 = arith.constant 0 : i32
    return %c0_i32, %c0_i32_0 : i32, i32
  }
  func.func @transform_2(%arg0: i32, %arg1: i32) -> (i32, i32) {
    %c0_i32 = arith.constant 0 : i32
    %c0_i32_0 = arith.constant 0 : i32
    %c0_i32_1 = arith.constant 0 : i32
    return %c0_i32, %c0_i32_0 : i32, i32
  }
  func.func @transform_3(%arg0: i32, %arg1: i32) -> (i32, i32, i32) {
    %c0_i32 = arith.constant 0 : i32
    %c0_i32_0 = arith.constant 0 : i32
    return %arg0, %arg1, %c0_i32 : i32, i32, i32
  }
  func.func @transform_4(%arg0: i32, %arg1: i32) -> (i32, i32, i32) {
    %c0_i32 = arith.constant 0 : i32
    %c0_i32_0 = arith.constant 0 : i32
    return %arg0, %arg1, %c0_i32 : i32, i32, i32
  }
}

module attributes {stable_mosaic.version = 11 : i64} {
  func.func @_conv_kernel(%arg0: i32, %arg1: i32, %arg2: memref<1x16x512xbf16, #tpu.memory_space<vmem>>, %arg3: memref<512x1xbf16, #tpu.memory_space<vmem>>, %arg4: memref<1x1xf32, #tpu.memory_space<vmem>>, %arg5: memref<1x16x1xf32, #tpu.memory_space<vmem>>) attributes {dimension_semantics = [#tpu.dimension_semantics<parallel>, #tpu.dimension_semantics<parallel>], iteration_bounds = array<i64: 2, 1>, scalar_prefetch = 0 : i64, scratch_operands = 0 : i64, tpu.core_type = #tpu.core_type<tc>, window_params = [{transform_indices = @transform_0, window_bounds = array<i64: 1, 16, 512>}, {pipeline_mode = #tpu.pipeline_mode<synchronous>, transform_indices = @transform_1, window_bounds = array<i64: 512, 1>}, {pipeline_mode = #tpu.pipeline_mode<synchronous>, transform_indices = @transform_2, window_bounds = array<i64: 1, 1>}, {transform_indices = @transform_3, window_bounds = array<i64: 1, 16, 1>}]} {
    %c0 = arith.constant 0 : index
    %c0_0 = arith.constant 0 : index
    %c0_1 = arith.constant 0 : index
    %0 = vector.load %arg2[%c0, %c0_0, %c0_1] : memref<1x16x512xbf16, #tpu.memory_space<vmem>>, vector<1x16x512xbf16>
    %1 = vector.shape_cast %0 : vector<1x16x512xbf16> to vector<16x512xbf16>
    %c0_2 = arith.constant 0 : index
    %c0_3 = arith.constant 0 : index
    %2 = vector.load %arg3[%c0_2, %c0_3] : memref<512x1xbf16, #tpu.memory_space<vmem>>, vector<512x1xbf16>
    %cst = arith.constant dense<0.000000e+00> : vector<16x1xf32>
    %3 = tpu.matmul %1, %2, %cst {dimension_numbers = #tpu.dot_dimension_numbers<[1], [0], [0], [1], [0, 0, 1, 1], [], []>} : vector<16x512xbf16>, vector<512x1xbf16>, vector<16x1xf32> -> vector<16x1xf32>
    %c0_4 = arith.constant 0 : index
    %c0_5 = arith.constant 0 : index
    %4 = vector.load %arg4[%c0_4, %c0_5] : memref<1x1xf32, #tpu.memory_space<vmem>>, vector<1x1xf32>
    %5 = vector.broadcast %4 : vector<1x1xf32> to vector<16x1xf32>
    %6 = arith.addf %3, %5 : vector<16x1xf32>
    %c0_6 = arith.constant 0 : index
    %c0_7 = arith.constant 0 : index
    %c0_8 = arith.constant 0 : index
    %7 = vector.load %arg5[%c0_6, %c0_7, %c0_8] : memref<1x16x1xf32, #tpu.memory_space<vmem>>, vector<1x16x1xf32>
    %8 = vector.shape_cast %7 : vector<1x16x1xf32> to vector<16x1xf32>
    %9 = vector.shape_cast %6 : vector<16x1xf32> to vector<1x16x1xf32>
    tpu.vector_store %arg5[%c0_6, %c0_7, %c0_8], %9 {strides = array<i32>} : memref<1x16x1xf32, #tpu.memory_space<vmem>>, vector<1x16x1xf32>,
    return
  }
  func.func @transform_0(%arg0: i32, %arg1: i32) -> (i32, i32, i32) {
    %c0_i32 = arith.constant 0 : i32
    %c0_i32_0 = arith.constant 0 : i32
    return %arg0, %arg1, %c0_i32 : i32, i32, i32
  }
  func.func @transform_1(%arg0: i32, %arg1: i32) -> (i32, i32) {
    %c0_i32 = arith.constant 0 : i32
    %c0_i32_0 = arith.constant 0 : i32
    %c0_i32_1 = arith.constant 0 : i32
    return %c0_i32, %c0_i32_0 : i32, i32
  }
  func.func @transform_2(%arg0: i32, %arg1: i32) -> (i32, i32) {
    %c0_i32 = arith.constant 0 : i32
    %c0_i32_0 = arith.constant 0 : i32
    %c0_i32_1 = arith.constant 0 : i32
    return %c0_i32, %c0_i32_0 : i32, i32
  }
  func.func @transform_3(%arg0: i32, %arg1: i32) -> (i32, i32, i32) {
    %c0_i32 = arith.constant 0 : i32
    %c0_i32_0 = arith.constant 0 : i32
    return %arg0, %arg1, %c0_i32 : i32, i32, i32
  }
}

module attributes {stable_mosaic.version = 11 : i64} {
  func.func @_conv_kernel(%arg0: i32, %arg1: i32, %arg2: memref<1x16x128xbf16, #tpu.memory_space<vmem>>, %arg3: memref<128x8xbf16, #tpu.memory_space<vmem>>, %arg4: memref<1x8xf32, #tpu.memory_space<vmem>>, %arg5: memref<1x16x8xbf16, #tpu.memory_space<vmem>>) attributes {dimension_semantics = [#tpu.dimension_semantics<parallel>, #tpu.dimension_semantics<parallel>], iteration_bounds = array<i64: 2, 1>, scalar_prefetch = 0 : i64, scratch_operands = 0 : i64, tpu.core_type = #tpu.core_type<tc>, window_params = [{transform_indices = @transform_0, window_bounds = array<i64: 1, 16, 128>}, {pipeline_mode = #tpu.pipeline_mode<synchronous>, transform_indices = @transform_1, window_bounds = array<i64: 128, 8>}, {pipeline_mode = #tpu.pipeline_mode<synchronous>, transform_indices = @transform_2, window_bounds = array<i64: 1, 8>}, {transform_indices = @transform_3, window_bounds = array<i64: 1, 16, 8>}]} {
    %c0 = arith.constant 0 : index
    %c0_0 = arith.constant 0 : index
    %c0_1 = arith.constant 0 : index
    %0 = vector.load %arg2[%c0, %c0_0, %c0_1] : memref<1x16x128xbf16, #tpu.memory_space<vmem>>, vector<1x16x128xbf16>
    %1 = vector.shape_cast %0 : vector<1x16x128xbf16> to vector<16x128xbf16>
    %c0_2 = arith.constant 0 : index
    %c0_3 = arith.constant 0 : index
    %2 = vector.load %arg3[%c0_2, %c0_3] : memref<128x8xbf16, #tpu.memory_space<vmem>>, vector<128x8xbf16>
    %cst = arith.constant dense<0.000000e+00> : vector<16x8xf32>
    %3 = tpu.matmul %1, %2, %cst {dimension_numbers = #tpu.dot_dimension_numbers<[1], [0], [0], [1], [0, 0, 1, 1], [], []>} : vector<16x128xbf16>, vector<128x8xbf16>, vector<16x8xf32> -> vector<16x8xf32>
    %c0_4 = arith.constant 0 : index
    %c0_5 = arith.constant 0 : index
    %4 = vector.load %arg4[%c0_4, %c0_5] : memref<1x8xf32, #tpu.memory_space<vmem>>, vector<1x8xf32>
    %5 = vector.broadcast %4 : vector<1x8xf32> to vector<16x8xf32>
    %6 = arith.addf %3, %5 : vector<16x8xf32>
    %cst_6 = arith.constant 0.000000e+00 : f32
    %7 = vector.broadcast %cst_6 : f32 to vector<16x8xf32>
    %8 = arith.cmpf oge, %6, %7 : vector<16x8xf32>
    %cst_7 = arith.constant 2.000000e-01 : f32
    %9 = vector.broadcast %cst_7 : f32 to vector<16x8xf32>
    %10 = arith.mulf %9, %6 : vector<16x8xf32>
    %11 = arith.select %8, %6, %10 : vector<16x8xi1>, vector<16x8xf32>
    %12 = arith.truncf %11 : vector<16x8xf32> to vector<16x8xbf16>
    %c0_8 = arith.constant 0 : index
    %c0_9 = arith.constant 0 : index
    %c0_10 = arith.constant 0 : index
    %13 = vector.load %arg5[%c0_8, %c0_9, %c0_10] : memref<1x16x8xbf16, #tpu.memory_space<vmem>>, vector<1x16x8xbf16>
    %14 = vector.shape_cast %13 : vector<1x16x8xbf16> to vector<16x8xbf16>
    %15 = vector.shape_cast %12 : vector<16x8xbf16> to vector<1x16x8xbf16>
    tpu.vector_store %arg5[%c0_8, %c0_9, %c0_10], %15 {strides = array<i32>} : memref<1x16x8xbf16, #tpu.memory_space<vmem>>, vector<1x16x8xbf16>,
    return
  }
  func.func @transform_0(%arg0: i32, %arg1: i32) -> (i32, i32, i32) {
    %c0_i32 = arith.constant 0 : i32
    %c0_i32_0 = arith.constant 0 : i32
    return %arg0, %arg1, %c0_i32 : i32, i32, i32
  }
  func.func @transform_1(%arg0: i32, %arg1: i32) -> (i32, i32) {
    %c0_i32 = arith.constant 0 : i32
    %c0_i32_0 = arith.constant 0 : i32
    %c0_i32_1 = arith.constant 0 : i32
    return %c0_i32, %c0_i32_0 : i32, i32
  }
  func.func @transform_2(%arg0: i32, %arg1: i32) -> (i32, i32) {
    %c0_i32 = arith.constant 0 : i32
    %c0_i32_0 = arith.constant 0 : i32
    %c0_i32_1 = arith.constant 0 : i32
    return %c0_i32, %c0_i32_0 : i32, i32
  }
  func.func @transform_3(%arg0: i32, %arg1: i32) -> (i32, i32, i32) {
    %c0_i32 = arith.constant 0 : i32
    %c0_i32_0 = arith.constant 0 : i32
    return %arg0, %arg1, %c0_i32 : i32, i32, i32
  }
}

module attributes {stable_mosaic.version = 11 : i64} {
  func.func @_conv_kernel(%arg0: i32, %arg1: i32, %arg2: memref<1x16x256xbf16, #tpu.memory_space<vmem>>, %arg3: memref<256x1xbf16, #tpu.memory_space<vmem>>, %arg4: memref<1x1xf32, #tpu.memory_space<vmem>>, %arg5: memref<1x16x1xf32, #tpu.memory_space<vmem>>) attributes {dimension_semantics = [#tpu.dimension_semantics<parallel>, #tpu.dimension_semantics<parallel>], iteration_bounds = array<i64: 2, 1>, scalar_prefetch = 0 : i64, scratch_operands = 0 : i64, tpu.core_type = #tpu.core_type<tc>, window_params = [{transform_indices = @transform_0, window_bounds = array<i64: 1, 16, 256>}, {pipeline_mode = #tpu.pipeline_mode<synchronous>, transform_indices = @transform_1, window_bounds = array<i64: 256, 1>}, {pipeline_mode = #tpu.pipeline_mode<synchronous>, transform_indices = @transform_2, window_bounds = array<i64: 1, 1>}, {transform_indices = @transform_3, window_bounds = array<i64: 1, 16, 1>}]} {
    %c0 = arith.constant 0 : index
    %c0_0 = arith.constant 0 : index
    %c0_1 = arith.constant 0 : index
    %0 = vector.load %arg2[%c0, %c0_0, %c0_1] : memref<1x16x256xbf16, #tpu.memory_space<vmem>>, vector<1x16x256xbf16>
    %1 = vector.shape_cast %0 : vector<1x16x256xbf16> to vector<16x256xbf16>
    %c0_2 = arith.constant 0 : index
    %c0_3 = arith.constant 0 : index
    %2 = vector.load %arg3[%c0_2, %c0_3] : memref<256x1xbf16, #tpu.memory_space<vmem>>, vector<256x1xbf16>
    %cst = arith.constant dense<0.000000e+00> : vector<16x1xf32>
    %3 = tpu.matmul %1, %2, %cst {dimension_numbers = #tpu.dot_dimension_numbers<[1], [0], [0], [1], [0, 0, 1, 1], [], []>} : vector<16x256xbf16>, vector<256x1xbf16>, vector<16x1xf32> -> vector<16x1xf32>
    %c0_4 = arith.constant 0 : index
    %c0_5 = arith.constant 0 : index
    %4 = vector.load %arg4[%c0_4, %c0_5] : memref<1x1xf32, #tpu.memory_space<vmem>>, vector<1x1xf32>
    %5 = vector.broadcast %4 : vector<1x1xf32> to vector<16x1xf32>
    %6 = arith.addf %3, %5 : vector<16x1xf32>
    %c0_6 = arith.constant 0 : index
    %c0_7 = arith.constant 0 : index
    %c0_8 = arith.constant 0 : index
    %7 = vector.load %arg5[%c0_6, %c0_7, %c0_8] : memref<1x16x1xf32, #tpu.memory_space<vmem>>, vector<1x16x1xf32>
    %8 = vector.shape_cast %7 : vector<1x16x1xf32> to vector<16x1xf32>
    %9 = vector.shape_cast %6 : vector<16x1xf32> to vector<1x16x1xf32>
    tpu.vector_store %arg5[%c0_6, %c0_7, %c0_8], %9 {strides = array<i32>} : memref<1x16x1xf32, #tpu.memory_space<vmem>>, vector<1x16x1xf32>,
    return
  }
  func.func @transform_0(%arg0: i32, %arg1: i32) -> (i32, i32, i32) {
    %c0_i32 = arith.constant 0 : i32
    %c0_i32_0 = arith.constant 0 : i32
    return %arg0, %arg1, %c0_i32 : i32, i32, i32
  }
  func.func @transform_1(%arg0: i32, %arg1: i32) -> (i32, i32) {
    %c0_i32 = arith.constant 0 : i32
    %c0_i32_0 = arith.constant 0 : i32
    %c0_i32_1 = arith.constant 0 : i32
    return %c0_i32, %c0_i32_0 : i32, i32
  }
  func.func @transform_2(%arg0: i32, %arg1: i32) -> (i32, i32) {
    %c0_i32 = arith.constant 0 : i32
    %c0_i32_0 = arith.constant 0 : i32
    %c0_i32_1 = arith.constant 0 : i32
    return %c0_i32, %c0_i32_0 : i32, i32
  }
  func.func @transform_3(%arg0: i32, %arg1: i32) -> (i32, i32, i32) {
    %c0_i32 = arith.constant 0 : i32
    %c0_i32_0 = arith.constant 0 : i32
    return %arg0, %arg1, %c0_i32 : i32, i32, i32
  }
}

</mosaic_0001>

<llo_original>
// kernel: _lambda_.12
$region0: #{_lambda_.12}
  #allocation0 [shape = 'u32[]', space=smem, size = 0x4, offset = 0x4, fixed_abs, tag = 'smem constant byte address 0x4 - core index']
  #allocation1 [shape = 'u32[144,128]{1,0:T(1,128)}', space=vmem, size = 0x12000, scoped, tag = 'internal scratch']
  %s0 = inlined_call_operand.vmem [shape: bf16[2,256,128], index: 0, kind: input, shape index: {}]
  %s1 = inlined_call_operand.vmem [shape: bf16[128,8], index: 1, kind: input, shape index: {}]
  %s2 = inlined_call_operand.vmem [shape: f32[1,8], index: 2, kind: input, shape index: {}]
  %s3 = inlined_call_operand.vmem [shape: bf16[2,256,8], index: 3, kind: output, shape index: {}]
  %s4 = sld [smem:[#allocation0]]
  $region45: #{_lambda_.12} parent=0
    _
  %s6 = ssub.s32 1, %s4
  %s7 = scalar_select 0, %s6, %s4
  loop: start=0, step=1, limit=4
  $region2: #{_lambda_.12} parent=0 // loop_pre_header
    _
  $region3: #{_lambda_.12} parent=0 // loop_header
    %s9 = sphi 0, %s13
    %p10 = scmp.ge.s32.totalorder %s9, 4
    %s16 = sphi 0, %s28
    %s17 = sphi 0, %s24
    %s18 = sphi 0, %s16
    %s19 = sphi 0, %s17
    %s20 = sphi 0, %s18
    %s21 = sphi 0, %s19
    %s33 = sphi 0, %s35
    %s36 = sphi 0, %s33
    %s37 = sphi 0, %s36
    %s53 = sphi 0, %s37
    %s57 = sphi 0, %s57
    %s59 = sphi 0, %s57
    %s60 = sphi 0, %s59
    %s74 = sphi 0, %s60
    %s78 = sphi 0, %s78
    %s80 = sphi 0, %s78
    %s81 = sphi 0, %s80
    %s95 = sphi 0, %s81
    %s103 = sphi 0, %s105
    %s106 = sphi 0, %s103
    %s107 = sphi 0, %s106
    %s123 = sphi 0, %s107
  $region4: #{_lambda_.12} parent=0 // loop_header_branch
    %12 = sbr.rel (%p10) target = $region8
  $region5: #{_lambda_.12} parent=0 // loop_body
    %s14 = ssub.s32 %s9, 1
    %s15 = ssub.s32 %s9, 2
    %s22 = sadd.s32 1, %s17
    %p23 = scmp.ge.s32.totalorder %s22, 1
    %s24 = scalar_select %p23, 0, %s22
    %s25 = sadd.s32 1, %s16
    %s26 = scalar_select %p23, %s25, %s16
    %p27 = scmp.ge.s32.totalorder %s26, 2
    %s28 = scalar_select %p27, 0, %s26
    %s29 = ssub.s32 %s16, %s28
    %s30 = ssub.s32 %s17, %s24
    %s31 = sor.u32 %s29, %s30
    %p32 = scmp.eq.s32.totalorder %s31, 0
    %s34 = sadd.s32 %s33, 1
    %s35 = scalar_select %p32, %s33, %s34
    %p38 = pneg %p32
    %p39 = scmp.eq.s32.totalorder %s9, 1
    %p40 = por %p38, %p39
    %p41 = scmp.ne.s32.totalorder %s33, %s36
    %p42 = scmp.eq.s32.totalorder %s9, 0
    %p43 = por %p41, %p42
    %p44 = scmp.ne.s32.totalorder %s33, %s36
    %p45 = scmp.eq.s32.totalorder %s14, 1
    %p46 = por %p44, %p45
    %p47 = scmp.ne.s32.totalorder %s36, %s37
    %p48 = scmp.eq.s32.totalorder %s14, 0
    %p49 = por %p47, %p48
    %p50 = scmp.ne.s32.totalorder %s36, %s37
    %p51 = scmp.eq.s32.totalorder %s15, 1
    %p52 = por %p50, %p51
    %p54 = scmp.ne.s32.totalorder %s37, %s53
    %p55 = scmp.eq.s32.totalorder %s15, 0
    %p56 = por %p54, %p55
    %s58 = sadd.s32 %s57, 1
    %p61 = scmp.eq.s32.totalorder %s9, 1
    %p62 = scmp.ne.s32.totalorder %s57, %s59
    %p63 = scmp.eq.s32.totalorder %s9, 0
    %p64 = por %p62, %p63
    %p65 = scmp.ne.s32.totalorder %s57, %s59
    %p66 = scmp.eq.s32.totalorder %s14, 1
    %p67 = por %p65, %p66
    %p68 = scmp.ne.s32.totalorder %s59, %s60
    %p69 = scmp.eq.s32.totalorder %s14, 0
    %p70 = por %p68, %p69
    %p71 = scmp.ne.s32.totalorder %s59, %s60
    %p72 = scmp.eq.s32.totalorder %s15, 1
    %p73 = por %p71, %p72
    %p75 = scmp.ne.s32.totalorder %s60, %s74
    %p76 = scmp.eq.s32.totalorder %s15, 0
    %p77 = por %p75, %p76
    %s79 = sadd.s32 %s78, 1
    %p82 = scmp.eq.s32.totalorder %s9, 1
    %p83 = scmp.ne.s32.totalorder %s78, %s80
    %p84 = scmp.eq.s32.totalorder %s9, 0
    %p85 = por %p83, %p84
    %p86 = scmp.ne.s32.totalorder %s78, %s80
    %p87 = scmp.eq.s32.totalorder %s14, 1
    %p88 = por %p86, %p87
    %p89 = scmp.ne.s32.totalorder %s80, %s81
    %p90 = scmp.eq.s32.totalorder %s14, 0
    %p91 = por %p89, %p90
    %p92 = scmp.ne.s32.totalorder %s80, %s81
    %p93 = scmp.eq.s32.totalorder %s15, 1
    %p94 = por %p92, %p93
    %p96 = scmp.ne.s32.totalorder %s81, %s95
    %p97 = scmp.eq.s32.totalorder %s15, 0
    %p98 = por %p96, %p97
    %s99 = ssub.s32 %s16, %s28
    %s100 = ssub.s32 %s17, %s24
    %s101 = sor.u32 %s99, %s100
    %p102 = scmp.eq.s32.totalorder %s101, 0
    %s104 = sadd.s32 %s103, 1
    %s105 = scalar_select %p102, %s103, %s104
    %p108 = pneg %p102
    %p109 = scmp.eq.s32.totalorder %s9, 1
    %p110 = por %p108, %p109
    %p111 = scmp.ne.s32.totalorder %s103, %s106
    %p112 = scmp.eq.s32.totalorder %s9, 0
    %p113 = por %p111, %p112
    %p114 = scmp.ne.s32.totalorder %s103, %s106
    %p115 = scmp.eq.s32.totalorder %s14, 1
    %p116 = por %p114, %p115
    %p117 = scmp.ne.s32.totalorder %s106, %s107
    %p118 = scmp.eq.s32.totalorder %s14, 0
    %p119 = por %p117, %p118
    %p120 = scmp.ne.s32.totalorder %s106, %s107
    %p121 = scmp.eq.s32.totalorder %s15, 1
    %p122 = por %p120, %p121
    %p124 = scmp.ne.s32.totalorder %s107, %s123
    %p125 = scmp.eq.s32.totalorder %s15, 0
    %p126 = por %p124, %p125
    %p127 = scmp.le.s32.totalorder 1, %s9
    %p128 = scmp.lt.s32.totalorder %s9, 3
    %p129 = pnand %p127, %p128
    %p130 = pneg %p129
    // Predicated region
    $region9: #{_lambda_.12} parent=5 // pred_check
      _
    $region10: #{_lambda_.12} parent=5 // pred_check_branch
      %132 = sbr.rel (%p129) target = $region12
    $region11: #{_lambda_.12} parent=5 // pred_region
      %s133 = ssub.s32 %s9, 1
      // Predicated region
      $region13: #{_lambda_.12} parent=11 // pred_check
        %p134 = pneg %p70
      $region14: #{_lambda_.12} parent=11 // pred_check_branch
        %136 = sbr.rel (%p134) target = $region16
      $region15: #{_lambda_.12} parent=11 // pred_region
        _
      $region16: #{_lambda_.12} parent=11 // pred_fallthru
        _
      // Predicated region
      $region17: #{_lambda_.12} parent=11 // pred_check
        %p137 = pneg %p91
      $region18: #{_lambda_.12} parent=11 // pred_check_branch
        %139 = sbr.rel (%p137) target = $region20
      $region19: #{_lambda_.12} parent=11 // pred_region
        _
      $region20: #{_lambda_.12} parent=11 // pred_fallthru
        _
    $region12: #{_lambda_.12} parent=5 // pred_fallthru
      _
    %p140 = scmp.lt.s32.totalorder %s9, 2
    // Predicated region
    $region21: #{_lambda_.12} parent=5 // pred_check
      %p141 = pneg %p140
    $region22: #{_lambda_.12} parent=5 // pred_check_branch
      %143 = sbr.rel (%p141) target = $region24
    $region23: #{_lambda_.12} parent=5 // pred_region
      // Predicated region
      $region25: #{_lambda_.12} parent=23 // pred_check
        %p144 = pneg %p43
      $region26: #{_lambda_.12} parent=23 // pred_check_branch
        %146 = sbr.rel (%p144) target = $region28
      $region27: #{_lambda_.12} parent=23 // pred_region
        %s147 = smul.u32 32, %s17
        %p148 = scmp.lt.s32.totalorder %s16, 1
        %s149 = scalar_select %p148, %s16, 1
        %p150 = scmp.lt.s32.totalorder %s147, 31
        %s151 = scalar_select %p150, %s147, 31
        %s152 = smul.addr %s149, 32
        %s153 = sadd.s32 %s151, %s152
        %s154 = smul.addr %s153, 4
        %s155 = scalar_lea.vmem %s0, %s154
        %s156 = smul.u32 32, %s17
      $region28: #{_lambda_.12} parent=23 // pred_fallthru
        _
    $region24: #{_lambda_.12} parent=5 // pred_fallthru
      _
    %p157 = scmp.le.s32.totalorder 1, %s9
    %p158 = scmp.lt.s32.totalorder %s9, 3
    %p159 = pnand %p157, %p158
    %p160 = pneg %p159
    // Predicated region
    $region29: #{_lambda_.12} parent=5 // pred_check
      _
    $region30: #{_lambda_.12} parent=5 // pred_check_branch
      %162 = sbr.rel (%p159) target = $region32
    $region31: #{_lambda_.12} parent=5 // pred_region
      %s163 = ssub.s32 %s9, 1
      %s164 = smul.u32 32, %s19
      %p165 = scmp.lt.s32.totalorder %s18, 1
      %s166 = scalar_select %p165, %s18, 1
      %p167 = scmp.lt.s32.totalorder %s164, 31
      %s168 = scalar_select %p167, %s164, 31
      %s169 = smul.addr %s166, 32
      %s170 = sadd.s32 %s168, %s169
      %s171 = smul.addr %s170, 4
      %s172 = scalar_lea.vmem %s0, %s171
      %p173 = pneg %p49
      %p174 = pneg %p46
      %p175 = pneg %p70
      %p176 = pneg %p67
      %p177 = pneg %p91
      %p178 = pneg %p88
      %p179 = pneg %p119
      %p180 = pneg %p116
      %s181 = smul.u32 32, %s19
      %p182 = scmp.lt.s32.totalorder %s18, 1
      %s183 = scalar_select %p182, %s18, 1
      %p184 = scmp.lt.s32.totalorder %s181, 31
      %s185 = scalar_select %p184, %s181, 31
      %s186 = smul.addr %s183, 32
      %s187 = sadd.s32 %s185, %s186
      %s188 = smul.addr %s187, 4
      %s189 = scalar_lea.vmem %s3, %s188
      %s190 = smul.u32 32, %s19
      %p191 = scmp.lt.s32.totalorder %s18, 1
      %s192 = scalar_select %p191, %s18, 1
      %p193 = scmp.lt.s32.totalorder %s190, 31
      %s194 = scalar_select %p193, %s190, 31
      %s195 = smul.addr %s192, 32
      %s196 = sadd.s32 %s194, %s195
      %s197 = smul.addr %s196, 4
      %s198 = scalar_lea.vmem %s0, %s197
      %s199 = smul.u32 32, %s19
      %s200 = smul.u32 32, %s19
      %p201 = scmp.lt.s32.totalorder %s18, 1
      %s202 = scalar_select %p201, %s18, 1
      %p203 = scmp.lt.s32.totalorder %s200, 31
      %s204 = scalar_select %p203, %s200, 31
      %s205 = smul.addr %s202, 32
      %s206 = sadd.s32 %s204, %s205
      %s207 = smul.addr %s206, 4
      %s208 = scalar_lea.vmem %s3, %s207
      %s209 = smul.u32 32, %s19
      %v211 = vld [vmem:[%s198] sm:$0xf]
      %v212 = vld [vmem:[%s198 + $0x4] sm:$0xf]
      %v213 = vld [vmem:[%s198 + $0x8] sm:$0xf]
      %v214 = vld [vmem:[%s198 + $0xc] sm:$0xf]
      %v215 = vld [vmem:[%s198 + $0x10] sm:$0xf]
      %v216 = vld [vmem:[%s198 + $0x14] sm:$0xf]
      %v217 = vld [vmem:[%s198 + $0x18] sm:$0xf]
      %v218 = vld [vmem:[%s198 + $0x1c] sm:$0xf]
      %v219 = vld [vmem:[%s198 + $0x20] sm:$0xf]
      %v220 = vld [vmem:[%s198 + $0x24] sm:$0xf]
      %v221 = vld [vmem:[%s198 + $0x28] sm:$0xf]
      %v222 = vld [vmem:[%s198 + $0x2c] sm:$0xf]
      %v223 = vld [vmem:[%s198 + $0x30] sm:$0xf]
      %v224 = vld [vmem:[%s198 + $0x34] sm:$0xf]
      %v225 = vld [vmem:[%s198 + $0x38] sm:$0xf]
      %v226 = vld [vmem:[%s198 + $0x3c] sm:$0xf]
      %v227 = vld [vmem:[%s198 + $0x40] sm:$0xf]
      %v228 = vld [vmem:[%s198 + $0x44] sm:$0xf]
      %v229 = vld [vmem:[%s198 + $0x48] sm:$0xf]
      %v230 = vld [vmem:[%s198 + $0x4c] sm:$0xf]
      %v231 = vld [vmem:[%s198 + $0x50] sm:$0xf]
      %v232 = vld [vmem:[%s198 + $0x54] sm:$0xf]
      %v233 = vld [vmem:[%s198 + $0x58] sm:$0xf]
      %v234 = vld [vmem:[%s198 + $0x5c] sm:$0xf]
      %v235 = vld [vmem:[%s198 + $0x60] sm:$0xf]
      %v236 = vld [vmem:[%s198 + $0x64] sm:$0xf]
      %v237 = vld [vmem:[%s198 + $0x68] sm:$0xf]
      %v238 = vld [vmem:[%s198 + $0x6c] sm:$0xf]
      %v239 = vld [vmem:[%s198 + $0x70] sm:$0xf]
      %v240 = vld [vmem:[%s198 + $0x74] sm:$0xf]
      %v241 = vld [vmem:[%s198 + $0x78] sm:$0xf]
      %v242 = vld [vmem:[%s198 + $0x7c] sm:$0xf]
      %v243 = vld [vmem:[%s1] sm:$0xf]
      %v244 = vld [vmem:[%s1 + $0x4] sm:$0xf]
      %v245 = vld [vmem:[%s1 + $0x8] sm:$0xf]
      %v246 = vld [vmem:[%s1 + $0xc] sm:$0xf]
      %v247 = vld [vmem:[%s1 + $0x10] sm:$0xf]
      %v248 = vld [vmem:[%s1 + $0x14] sm:$0xf]
      %v249 = vld [vmem:[%s1 + $0x18] sm:$0xf]
      %v250 = vld [vmem:[%s1 + $0x1c] sm:$0xf]
      %v251 = vld [vmem:[%s1 + $0x20] sm:$0xf]
      %v252 = vld [vmem:[%s1 + $0x24] sm:$0xf]
      %v253 = vld [vmem:[%s1 + $0x28] sm:$0xf]
      %v254 = vld [vmem:[%s1 + $0x2c] sm:$0xf]
      %v255 = vld [vmem:[%s1 + $0x30] sm:$0xf]
      %v256 = vld [vmem:[%s1 + $0x34] sm:$0xf]
      %v257 = vld [vmem:[%s1 + $0x38] sm:$0xf]
      %v258 = vld [vmem:[%s1 + $0x3c] sm:$0xf]
      %v259 = vld [vmem:[%s2] sm:$0x1]
      %v261 = vlaneseq
      %v262 = vshrl.u32 %v261, 7
      %v263 = vsub.s32 0, %v262
      %v264 = vrot.slane %v259, %v263
      %v298 = vunpack.c.l.b16 %v211
      %v299 = vunpack.c.l.b16 %v212
      %v300 = vunpack.c.l.b16 %v213
      %v301 = vunpack.c.l.b16 %v214
      %v302 = vunpack.c.l.b16 %v215
      %v303 = vunpack.c.l.b16 %v216
      %v304 = vunpack.c.l.b16 %v217
      %v305 = vunpack.c.l.b16 %v218
      %v306 = vunpack.c.l.b16 %v219
      %v307 = vunpack.c.l.b16 %v220
      %v308 = vunpack.c.l.b16 %v221
      %v309 = vunpack.c.l.b16 %v222
      %v310 = vunpack.c.l.b16 %v223
      %v311 = vunpack.c.l.b16 %v224
      %v312 = vunpack.c.l.b16 %v225
      %v313 = vunpack.c.l.b16 %v226
      %v314 = vunpack.c.l.b16 %v227
      %v315 = vunpack.c.l.b16 %v228
      %v316 = vunpack.c.l.b16 %v229
      %v317 = vunpack.c.l.b16 %v230
      %v318 = vunpack.c.l.b16 %v231
      %v319 = vunpack.c.l.b16 %v232
      %v320 = vunpack.c.l.b16 %v233
      %v321 = vunpack.c.l.b16 %v234
      %v322 = vunpack.c.l.b16 %v235
      %v323 = vunpack.c.l.b16 %v236
      %v324 = vunpack.c.l.b16 %v237
      %v325 = vunpack.c.l.b16 %v238
      %v326 = vunpack.c.l.b16 %v239
      %v327 = vunpack.c.l.b16 %v240
      %v328 = vunpack.c.l.b16 %v241
      %v329 = vunpack.c.l.b16 %v242
      %v330 = vpack.c.b16 %v299, %v298
      %v331 = vpack.c.b16 %v301, %v300
      %v332 = vpack.c.b16 %v303, %v302
      %v333 = vpack.c.b16 %v305, %v304
      %v334 = vpack.c.b16 %v307, %v306
      %v335 = vpack.c.b16 %v309, %v308
      %v336 = vpack.c.b16 %v311, %v310
      %v337 = vpack.c.b16 %v313, %v312
      %v338 = vpack.c.b16 %v315, %v314
      %v339 = vpack.c.b16 %v317, %v316
      %v340 = vpack.c.b16 %v319, %v318
      %v341 = vpack.c.b16 %v321, %v320
      %v342 = vpack.c.b16 %v323, %v322
      %v343 = vpack.c.b16 %v325, %v324
      %v344 = vpack.c.b16 %v327, %v326
      %v345 = vpack.c.b16 %v329, %v328
      %v378 = vunpack.c.l.b16 %v243
      %v379 = vunpack.c.l.b16 %v244
      %v380 = vunpack.c.l.b16 %v245
      %v381 = vunpack.c.l.b16 %v246
      %v382 = vunpack.c.l.b16 %v247
      %v383 = vunpack.c.l.b16 %v248
      %v384 = vunpack.c.l.b16 %v249
      %v385 = vunpack.c.l.b16 %v250
      %v386 = vunpack.c.l.b16 %v251
      %v387 = vunpack.c.l.b16 %v252
      %v388 = vunpack.c.l.b16 %v253
      %v389 = vunpack.c.l.b16 %v254
      %v390 = vunpack.c.l.b16 %v255
      %v391 = vunpack.c.l.b16 %v256
      %v392 = vunpack.c.l.b16 %v257
      %v393 = vunpack.c.l.b16 %v258
      %v394 = vpack.c.b16 %v379, %v378
      %v395 = vpack.c.b16 %v381, %v380
      %v396 = vpack.c.b16 %v383, %v382
      %v397 = vpack.c.b16 %v385, %v384
      %v398 = vpack.c.b16 %v387, %v386
      %v399 = vpack.c.b16 %v389, %v388
      %v400 = vpack.c.b16 %v391, %v390
      %v401 = vpack.c.b16 %v393, %v392
      %410 = vmatprep.subr.bf16.mxu0 0
      %411 = vmatpush1.bf16.msra.mxu0 %v394
      %412 = vmatprep.subr.bf16.mxu0 0
      %413 = vmatpush1.bf16.msra.mxu0 %v395
      %414 = vmatprep.subr.bf16.mxu0 0
      %415 = vmatpush1.bf16.msra.mxu0 %v396
      %416 = vmatprep.subr.bf16.mxu0 0
      %417 = vmatpush1.bf16.msra.mxu0 %v397
      %418 = vmatprep.subr.bf16.mxu0 0
      %419 = vmatpush1.bf16.msra.mxu0 %v398
      %420 = vmatprep.subr.bf16.mxu0 0
      %421 = vmatpush1.bf16.msra.mxu0 %v399
      %422 = vmatprep.subr.bf16.mxu0 0
      %423 = vmatpush1.bf16.msra.mxu0 %v400
      %424 = vmatprep.subr.bf16.mxu0 0
      %425 = vmatpush1.bf16.msra.mxu0 %v401
      %426 = vmatprep.subr.bf16.mxu0 0
      %427 = vmatpush1.bf16.msra.mxu0 0
      %428 = vmatprep.subr.bf16.mxu0 0
      %429 = vmatpush1.bf16.msra.mxu0 0
      %430 = vmatprep.subr.bf16.mxu0 0
      %431 = vmatpush1.bf16.msra.mxu0 0
      %432 = vmatprep.subr.bf16.mxu0 0
      %433 = vmatpush1.bf16.msra.mxu0 0
      %434 = vmatprep.subr.bf16.mxu0 0
      %435 = vmatpush1.bf16.msra.mxu0 0
      %436 = vmatprep.subr.bf16.mxu0 0
      %437 = vmatpush1.bf16.msra.mxu0 0
      %438 = vmatprep.subr.bf16.mxu0 0
      %439 = vmatpush1.bf16.msra.mxu0 0
      %440 = vmatprep.subr.bf16.mxu0 0
      %441 = vmatpush1.bf16.msra.mxu0 0
      %442 = vmatprep.mubr.bf16.mxu0 0
      %443 = vmatmul.mubr.bf16.gmra.mrb[0].mxu0 %v330
      %v444 = vpop.f32.mrb[0].mxu0
      %v445 = vadd.f32 %v264, %v444
      %v446 = vpop.f32.mrb[0].mxu0
      %v447 = vpop.f32.mrb[0].mxu0
      %v448 = vadd.f32 %v264, %v447
      %v449 = vpop.f32.mrb[0].mxu0
      %450 = vmatprep.mubr.bf16.mxu0 0
      %451 = vmatmul.mubr.bf16.gmra.mrb[0].mxu0 %v331
      %v452 = vpop.f32.mrb[0].mxu0
      %v453 = vadd.f32 %v264, %v452
      %v454 = vpop.f32.mrb[0].mxu0
      %v455 = vpop.f32.mrb[0].mxu0
      %v456 = vadd.f32 %v264, %v455
      %v457 = vpop.f32.mrb[0].mxu0
      %458 = vmatprep.mubr.bf16.mxu0 0
      %459 = vmatmul.mubr.bf16.gmra.mrb[0].mxu0 %v332
      %v460 = vpop.f32.mrb[0].mxu0
      %v461 = vadd.f32 %v264, %v460
      %v462 = vpop.f32.mrb[0].mxu0
      %v463 = vpop.f32.mrb[0].mxu0
      %v464 = vadd.f32 %v264, %v463
      %v465 = vpop.f32.mrb[0].mxu0
      %466 = vmatprep.mubr.bf16.mxu0 0
      %467 = vmatmul.mubr.bf16.gmra.mrb[0].mxu0 %v333
      %v468 = vpop.f32.mrb[0].mxu0
      %v469 = vadd.f32 %v264, %v468
      %v470 = vpop.f32.mrb[0].mxu0
      %v471 = vpop.f32.mrb[0].mxu0
      %v472 = vadd.f32 %v264, %v471
      %v473 = vpop.f32.mrb[0].mxu0
      %474 = vmatprep.mubr.bf16.mxu0 0
      %475 = vmatmul.mubr.bf16.gmra.mrb[0].mxu0 %v334
      %v476 = vpop.f32.mrb[0].mxu0
      %v477 = vadd.f32 %v264, %v476
      %v478 = vpop.f32.mrb[0].mxu0
      %v479 = vpop.f32.mrb[0].mxu0
      %v480 = vadd.f32 %v264, %v479
      %v481 = vpop.f32.mrb[0].mxu0
      %482 = vmatprep.mubr.bf16.mxu0 0
      %483 = vmatmul.mubr.bf16.gmra.mrb[0].mxu0 %v335
      %v484 = vpop.f32.mrb[0].mxu0
      %v485 = vadd.f32 %v264, %v484
      %v486 = vpop.f32.mrb[0].mxu0
      %v487 = vpop.f32.mrb[0].mxu0
      %v488 = vadd.f32 %v264, %v487
      %v489 = vpop.f32.mrb[0].mxu0
      %490 = vmatprep.mubr.bf16.mxu0 0
      %491 = vmatmul.mubr.bf16.gmra.mrb[0].mxu0 %v336
      %v492 = vpop.f32.mrb[0].mxu0
      %v493 = vadd.f32 %v264, %v492
      %v494 = vpop.f32.mrb[0].mxu0
      %v495 = vpop.f32.mrb[0].mxu0
      %v496 = vadd.f32 %v264, %v495
      %v497 = vpop.f32.mrb[0].mxu0
      %498 = vmatprep.mubr.bf16.mxu0 0
      %499 = vmatmul.mubr.bf16.gmra.mrb[0].mxu0 %v337
      %v500 = vpop.f32.mrb[0].mxu0
      %v501 = vadd.f32 %v264, %v500
      %v502 = vpop.f32.mrb[0].mxu0
      %v503 = vpop.f32.mrb[0].mxu0
      %v504 = vadd.f32 %v264, %v503
      %v505 = vpop.f32.mrb[0].mxu0
      %506 = vmatprep.mubr.bf16.mxu0 0
      %507 = vmatmul.mubr.bf16.gmra.mrb[0].mxu0 %v338
      %v508 = vpop.f32.mrb[0].mxu0
      %v509 = vadd.f32 %v264, %v508
      %v510 = vpop.f32.mrb[0].mxu0
      %v511 = vpop.f32.mrb[0].mxu0
      %v512 = vadd.f32 %v264, %v511
      %v513 = vpop.f32.mrb[0].mxu0
      %514 = vmatprep.mubr.bf16.mxu0 0
      %515 = vmatmul.mubr.bf16.gmra.mrb[0].mxu0 %v339
      %v516 = vpop.f32.mrb[0].mxu0
      %v517 = vadd.f32 %v264, %v516
      %v518 = vpop.f32.mrb[0].mxu0
      %v519 = vpop.f32.mrb[0].mxu0
      %v520 = vadd.f32 %v264, %v519
      %v521 = vpop.f32.mrb[0].mxu0
      %522 = vmatprep.mubr.bf16.mxu0 0
      %523 = vmatmul.mubr.bf16.gmra.mrb[0].mxu0 %v340
      %v524 = vpop.f32.mrb[0].mxu0
      %v525 = vadd.f32 %v264, %v524
      %v526 = vpop.f32.mrb[0].mxu0
      %v527 = vpop.f32.mrb[0].mxu0
      %v528 = vadd.f32 %v264, %v527
      %v529 = vpop.f32.mrb[0].mxu0
      %530 = vmatprep.mubr.bf16.mxu0 0
      %531 = vmatmul.mubr.bf16.gmra.mrb[0].mxu0 %v341
      %v532 = vpop.f32.mrb[0].mxu0
      %v533 = vadd.f32 %v264, %v532
      %v534 = vpop.f32.mrb[0].mxu0
      %v535 = vpop.f32.mrb[0].mxu0
      %v536 = vadd.f32 %v264, %v535
      %v537 = vpop.f32.mrb[0].mxu0
      %538 = vmatprep.mubr.bf16.mxu0 0
      %539 = vmatmul.mubr.bf16.gmra.mrb[0].mxu0 %v342
      %v540 = vpop.f32.mrb[0].mxu0
      %v541 = vadd.f32 %v264, %v540
      %v542 = vpop.f32.mrb[0].mxu0
      %v543 = vpop.f32.mrb[0].mxu0
      %v544 = vadd.f32 %v264, %v543
      %v545 = vpop.f32.mrb[0].mxu0
      %546 = vmatprep.mubr.bf16.mxu0 0
      %547 = vmatmul.mubr.bf16.gmra.mrb[0].mxu0 %v343
      %v548 = vpop.f32.mrb[0].mxu0
      %v549 = vadd.f32 %v264, %v548
      %v550 = vpop.f32.mrb[0].mxu0
      %v551 = vpop.f32.mrb[0].mxu0
      %v552 = vadd.f32 %v264, %v551
      %v553 = vpop.f32.mrb[0].mxu0
      %554 = vmatprep.mubr.bf16.mxu0 0
      %555 = vmatmul.mubr.bf16.gmra.mrb[0].mxu0 %v344
      %v556 = vpop.f32.mrb[0].mxu0
      %v557 = vadd.f32 %v264, %v556
      %v558 = vpop.f32.mrb[0].mxu0
      %v559 = vpop.f32.mrb[0].mxu0
      %v560 = vadd.f32 %v264, %v559
      %v561 = vpop.f32.mrb[0].mxu0
      %562 = vmatprep.mubr.bf16.mxu0 0
      %563 = vmatmul.mubr.bf16.gmra.mrb[0].mxu0 %v345
      %v564 = vpop.f32.mrb[0].mxu0
      %v565 = vadd.f32 %v264, %v564
      %v566 = vpop.f32.mrb[0].mxu0
      %v567 = vpop.f32.mrb[0].mxu0
      %v568 = vadd.f32 %v264, %v567
      %v569 = vpop.f32.mrb[0].mxu0
      %570 = vdwg.mxu0
      %vm571 = vcmp.ge.f32.partialorder %v445, 0.0
      %vm572 = vcmp.ge.f32.partialorder %v448, 0.0
      %vm573 = vcmp.ge.f32.partialorder %v453, 0.0
      %vm574 = vcmp.ge.f32.partialorder %v456, 0.0
      %vm575 = vcmp.ge.f32.partialorder %v461, 0.0
      %vm576 = vcmp.ge.f32.partialorder %v464, 0.0
      %vm577 = vcmp.ge.f32.partialorder %v469, 0.0
      %vm578 = vcmp.ge.f32.partialorder %v472, 0.0
      %vm579 = vcmp.ge.f32.partialorder %v477, 0.0
      %vm580 = vcmp.ge.f32.partialorder %v480, 0.0
      %vm581 = vcmp.ge.f32.partialorder %v485, 0.0
      %vm582 = vcmp.ge.f32.partialorder %v488, 0.0
      %vm583 = vcmp.ge.f32.partialorder %v493, 0.0
      %vm584 = vcmp.ge.f32.partialorder %v496, 0.0
      %vm585 = vcmp.ge.f32.partialorder %v501, 0.0
      %vm586 = vcmp.ge.f32.partialorder %v504, 0.0
      %vm587 = vcmp.ge.f32.partialorder %v509, 0.0
      %vm588 = vcmp.ge.f32.partialorder %v512, 0.0
      %vm589 = vcmp.ge.f32.partialorder %v517, 0.0
      %vm590 = vcmp.ge.f32.partialorder %v520, 0.0
      %vm591 = vcmp.ge.f32.partialorder %v525, 0.0
      %vm592 = vcmp.ge.f32.partialorder %v528, 0.0
      %vm593 = vcmp.ge.f32.partialorder %v533, 0.0
      %vm594 = vcmp.ge.f32.partialorder %v536, 0.0
      %vm595 = vcmp.ge.f32.partialorder %v541, 0.0
      %vm596 = vcmp.ge.f32.partialorder %v544, 0.0
      %vm597 = vcmp.ge.f32.partialorder %v549, 0.0
      %vm598 = vcmp.ge.f32.partialorder %v552, 0.0
      %vm599 = vcmp.ge.f32.partialorder %v557, 0.0
      %vm600 = vcmp.ge.f32.partialorder %v560, 0.0
      %vm601 = vcmp.ge.f32.partialorder %v565, 0.0
      %vm602 = vcmp.ge.f32.partialorder %v568, 0.0
      %v603 = vmul.f32 %v445, 0.2
      %v604 = vmul.f32 %v448, 0.2
      %v605 = vmul.f32 %v453, 0.2
      %v606 = vmul.f32 %v456, 0.2
      %v607 = vmul.f32 %v461, 0.2
      %v608 = vmul.f32 %v464, 0.2
      %v609 = vmul.f32 %v469, 0.2
      %v610 = vmul.f32 %v472, 0.2
      %v611 = vmul.f32 %v477, 0.2
      %v612 = vmul.f32 %v480, 0.2
      %v613 = vmul.f32 %v485, 0.2
      %v614 = vmul.f32 %v488, 0.2
      %v615 = vmul.f32 %v493, 0.2
      %v616 = vmul.f32 %v496, 0.2
      %v617 = vmul.f32 %v501, 0.2
      %v618 = vmul.f32 %v504, 0.2
      %v619 = vmul.f32 %v509, 0.2
      %v620 = vmul.f32 %v512, 0.2
      %v621 = vmul.f32 %v517, 0.2
      %v622 = vmul.f32 %v520, 0.2
      %v623 = vmul.f32 %v525, 0.2
      %v624 = vmul.f32 %v528, 0.2
      %v625 = vmul.f32 %v533, 0.2
      %v626 = vmul.f32 %v536, 0.2
      %v627 = vmul.f32 %v541, 0.2
      %v628 = vmul.f32 %v544, 0.2
      %v629 = vmul.f32 %v549, 0.2
      %v630 = vmul.f32 %v552, 0.2
      %v631 = vmul.f32 %v557, 0.2
      %v632 = vmul.f32 %v560, 0.2
      %v633 = vmul.f32 %v565, 0.2
      %v634 = vmul.f32 %v568, 0.2
      %v635 = vsel %vm571, %v445, %v603
      %v636 = vsel %vm572, %v448, %v604
      %v637 = vsel %vm573, %v453, %v605
      %v638 = vsel %vm574, %v456, %v606
      %v639 = vsel %vm575, %v461, %v607
      %v640 = vsel %vm576, %v464, %v608
      %v641 = vsel %vm577, %v469, %v609
      %v642 = vsel %vm578, %v472, %v610
      %v643 = vsel %vm579, %v477, %v611
      %v644 = vsel %vm580, %v480, %v612
      %v645 = vsel %vm581, %v485, %v613
      %v646 = vsel %vm582, %v488, %v614
      %v647 = vsel %vm583, %v493, %v615
      %v648 = vsel %vm584, %v496, %v616
      %v649 = vsel %vm585, %v501, %v617
      %v650 = vsel %vm586, %v504, %v618
      %v651 = vsel %vm587, %v509, %v619
      %v652 = vsel %vm588, %v512, %v620
      %v653 = vsel %vm589, %v517, %v621
      %v654 = vsel %vm590, %v520, %v622
      %v655 = vsel %vm591, %v525, %v623
      %v656 = vsel %vm592, %v528, %v624
      %v657 = vsel %vm593, %v533, %v625
      %v658 = vsel %vm594, %v536, %v626
      %v659 = vsel %vm595, %v541, %v627
      %v660 = vsel %vm596, %v544, %v628
      %v661 = vsel %vm597, %v549, %v629
      %v662 = vsel %vm598, %v552, %v630
      %v663 = vsel %vm599, %v557, %v631
      %v664 = vsel %vm600, %v560, %v632
      %v665 = vsel %vm601, %v565, %v633
      %v666 = vsel %vm602, %v568, %v634
      %v667 = vpack.c.bf16 %v636, %v635
      %v668 = vpack.c.bf16 %v638, %v637
      %v669 = vpack.c.bf16 %v640, %v639
      %v670 = vpack.c.bf16 %v642, %v641
      %v671 = vpack.c.bf16 %v644, %v643
      %v672 = vpack.c.bf16 %v646, %v645
      %v673 = vpack.c.bf16 %v648, %v647
      %v674 = vpack.c.bf16 %v650, %v649
      %v675 = vpack.c.bf16 %v652, %v651
      %v676 = vpack.c.bf16 %v654, %v653
      %v677 = vpack.c.bf16 %v656, %v655
      %v678 = vpack.c.bf16 %v658, %v657
      %v679 = vpack.c.bf16 %v660, %v659
      %v680 = vpack.c.bf16 %v662, %v661
      %v681 = vpack.c.bf16 %v664, %v663
      %v682 = vpack.c.bf16 %v666, %v665
      %v699 = vunpack.c.l.b16 %v667
      %v700 = vunpack.c.h.b16 %v667
      %v701 = vunpack.c.l.b16 %v668
      %v702 = vunpack.c.h.b16 %v668
      %v703 = vunpack.c.l.b16 %v669
      %v704 = vunpack.c.h.b16 %v669
      %v705 = vunpack.c.l.b16 %v670
      %v706 = vunpack.c.h.b16 %v670
      %v707 = vunpack.c.l.b16 %v671
      %v708 = vunpack.c.h.b16 %v671
      %v709 = vunpack.c.l.b16 %v672
      %v710 = vunpack.c.h.b16 %v672
      %v711 = vunpack.c.l.b16 %v673
      %v712 = vunpack.c.h.b16 %v673
      %v713 = vunpack.c.l.b16 %v674
      %v714 = vunpack.c.h.b16 %v674
      %v715 = vunpack.c.l.b16 %v675
      %v716 = vunpack.c.h.b16 %v675
      %v717 = vunpack.c.l.b16 %v676
      %v718 = vunpack.c.h.b16 %v676
      %v719 = vunpack.c.l.b16 %v677
      %v720 = vunpack.c.h.b16 %v677
      %v721 = vunpack.c.l.b16 %v678
      %v722 = vunpack.c.h.b16 %v678
      %v723 = vunpack.c.l.b16 %v679
      %v724 = vunpack.c.h.b16 %v679
      %v725 = vunpack.c.l.b16 %v680
      %v726 = vunpack.c.h.b16 %v680
      %v727 = vunpack.c.l.b16 %v681
      %v728 = vunpack.c.h.b16 %v681
      %v729 = vunpack.c.l.b16 %v682
      %v730 = vunpack.c.h.b16 %v682
      %v731 = vpack.c.b16 %v699, %v699
      %v732 = vpack.c.b16 %v700, %v700
      %v733 = vpack.c.b16 %v701, %v701
      %v734 = vpack.c.b16 %v702, %v702
      %v735 = vpack.c.b16 %v703, %v703
      %v736 = vpack.c.b16 %v704, %v704
      %v737 = vpack.c.b16 %v705, %v705
      %v738 = vpack.c.b16 %v706, %v706
      %v739 = vpack.c.b16 %v707, %v707
      %v740 = vpack.c.b16 %v708, %v708
      %v741 = vpack.c.b16 %v709, %v709
      %v742 = vpack.c.b16 %v710, %v710
      %v743 = vpack.c.b16 %v711, %v711
      %v744 = vpack.c.b16 %v712, %v712
      %v745 = vpack.c.b16 %v713, %v713
      %v746 = vpack.c.b16 %v714, %v714
      %v747 = vpack.c.b16 %v715, %v715
      %v748 = vpack.c.b16 %v716, %v716
      %v749 = vpack.c.b16 %v717, %v717
      %v750 = vpack.c.b16 %v718, %v718
      %v751 = vpack.c.b16 %v719, %v719
      %v752 = vpack.c.b16 %v720, %v720
      %v753 = vpack.c.b16 %v721, %v721
      %v754 = vpack.c.b16 %v722, %v722
      %v755 = vpack.c.b16 %v723, %v723
      %v756 = vpack.c.b16 %v724, %v724
      %v757 = vpack.c.b16 %v725, %v725
      %v758 = vpack.c.b16 %v726, %v726
      %v759 = vpack.c.b16 %v727, %v727
      %v760 = vpack.c.b16 %v728, %v728
      %v761 = vpack.c.b16 %v729, %v729
      %v762 = vpack.c.b16 %v730, %v730
      %vm795 = vcmask 60416
      %796 = vst.msk [vmem:[%s208] sm:$0xf] %vm795, %v731
      %797 = vst.msk [vmem:[%s208 + $0x4] sm:$0xf] %vm795, %v732
      %798 = vst.msk [vmem:[%s208 + $0x8] sm:$0xf] %vm795, %v733
      %799 = vst.msk [vmem:[%s208 + $0xc] sm:$0xf] %vm795, %v734
      %800 = vst.msk [vmem:[%s208 + $0x10] sm:$0xf] %vm795, %v735
      %801 = vst.msk [vmem:[%s208 + $0x14] sm:$0xf] %vm795, %v736
      %802 = vst.msk [vmem:[%s208 + $0x18] sm:$0xf] %vm795, %v737
      %803 = vst.msk [vmem:[%s208 + $0x1c] sm:$0xf] %vm795, %v738
      %804 = vst.msk [vmem:[%s208 + $0x20] sm:$0xf] %vm795, %v739
      %805 = vst.msk [vmem:[%s208 + $0x24] sm:$0xf] %vm795, %v740
      %806 = vst.msk [vmem:[%s208 + $0x28] sm:$0xf] %vm795, %v741
      %807 = vst.msk [vmem:[%s208 + $0x2c] sm:$0xf] %vm795, %v742
      %808 = vst.msk [vmem:[%s208 + $0x30] sm:$0xf] %vm795, %v743
      %809 = vst.msk [vmem:[%s208 + $0x34] sm:$0xf] %vm795, %v744
      %810 = vst.msk [vmem:[%s208 + $0x38] sm:$0xf] %vm795, %v745
      %811 = vst.msk [vmem:[%s208 + $0x3c] sm:$0xf] %vm795, %v746
      %812 = vst.msk [vmem:[%s208 + $0x40] sm:$0xf] %vm795, %v747
      %813 = vst.msk [vmem:[%s208 + $0x44] sm:$0xf] %vm795, %v748
      %814 = vst.msk [vmem:[%s208 + $0x48] sm:$0xf] %vm795, %v749
      %815 = vst.msk [vmem:[%s208 + $0x4c] sm:$0xf] %vm795, %v750
      %816 = vst.msk [vmem:[%s208 + $0x50] sm:$0xf] %vm795, %v751
      %817 = vst.msk [vmem:[%s208 + $0x54] sm:$0xf] %vm795, %v752
      %818 = vst.msk [vmem:[%s208 + $0x58] sm:$0xf] %vm795, %v753
      %819 = vst.msk [vmem:[%s208 + $0x5c] sm:$0xf] %vm795, %v754
      %820 = vst.msk [vmem:[%s208 + $0x60] sm:$0xf] %vm795, %v755
      %821 = vst.msk [vmem:[%s208 + $0x64] sm:$0xf] %vm795, %v756
      %822 = vst.msk [vmem:[%s208 + $0x68] sm:$0xf] %vm795, %v757
      %823 = vst.msk [vmem:[%s208 + $0x6c] sm:$0xf] %vm795, %v758
      %824 = vst.msk [vmem:[%s208 + $0x70] sm:$0xf] %vm795, %v759
      %825 = vst.msk [vmem:[%s208 + $0x74] sm:$0xf] %vm795, %v760
      %826 = vst.msk [vmem:[%s208 + $0x78] sm:$0xf] %vm795, %v761
      %827 = vst.msk [vmem:[%s208 + $0x7c] sm:$0xf] %vm795, %v762
      %s828 = smul.u32 32, %s19
      %p829 = scmp.lt.s32.totalorder %s18, 1
      %s830 = scalar_select %p829, %s18, 1
      %p831 = scmp.lt.s32.totalorder %s828, 31
      %s832 = scalar_select %p831, %s828, 31
      %s833 = smul.addr %s830, 32
      %s834 = sadd.s32 %s832, %s833
      %s835 = smul.addr %s834, 4
      %s836 = scalar_lea.vmem %s3, %s835
      // Predicated region
      $region33: #{_lambda_.12} parent=31 // pred_check
        %p837 = pneg %p116
      $region34: #{_lambda_.12} parent=31 // pred_check_branch
        %839 = sbr.rel (%p837) target = $region36
      $region35: #{_lambda_.12} parent=31 // pred_region
        %s840 = smul.u32 32, %s19
      $region36: #{_lambda_.12} parent=31 // pred_fallthru
        _
    $region32: #{_lambda_.12} parent=5 // pred_fallthru
      _
    %p841 = scmp.le.s32.totalorder 2, %s9
    // Predicated region
    $region37: #{_lambda_.12} parent=5 // pred_check
      %p842 = pneg %p841
    $region38: #{_lambda_.12} parent=5 // pred_check_branch
      %844 = sbr.rel (%p842) target = $region40
    $region39: #{_lambda_.12} parent=5 // pred_region
      %s845 = ssub.s32 %s9, 2
      // Predicated region
      $region41: #{_lambda_.12} parent=39 // pred_check
        %p846 = pneg %p122
      $region42: #{_lambda_.12} parent=39 // pred_check_branch
        %848 = sbr.rel (%p846) target = $region44
      $region43: #{_lambda_.12} parent=39 // pred_region
        %s849 = smul.u32 32, %s21
        %p850 = scmp.lt.s32.totalorder %s20, 1
        %s851 = scalar_select %p850, %s20, 1
        %p852 = scmp.lt.s32.totalorder %s849, 31
        %s853 = scalar_select %p852, %s849, 31
        %s854 = smul.addr %s851, 32
        %s855 = sadd.s32 %s853, %s854
        %s856 = smul.addr %s855, 4
        %s857 = scalar_lea.vmem %s3, %s856
      $region44: #{_lambda_.12} parent=39 // pred_fallthru
        _
    $region40: #{_lambda_.12} parent=5 // pred_fallthru
      _
  $region6: #{_lambda_.12} parent=0 // loop_footer
    %s13 = sadd.s32 1, %s9
  $region7: #{_lambda_.12} parent=0 // loop_footer_branch
    %8 = sbr.rel target = $region3
  $region8: #{_lambda_.12} parent=0 // loop_exit
    _

// kernel: _lambda_.13
$region0: #{_lambda_.13}
  #allocation0 [shape = 'u32[]', space=smem, size = 0x4, offset = 0x4, fixed_abs, tag = 'smem constant byte address 0x4 - core index']
  #allocation1 [shape = 'u32[144,128]{1,0:T(1,128)}', space=vmem, size = 0x12000, scoped, tag = 'internal scratch']
  %s0 = inlined_call_operand.vmem [shape: bf16[2,64,128], index: 0, kind: input, shape index: {}]
  %s1 = inlined_call_operand.vmem [shape: bf16[128,16], index: 1, kind: input, shape index: {}]
  %s2 = inlined_call_operand.vmem [shape: f32[1,16], index: 2, kind: input, shape index: {}]
  %s3 = inlined_call_operand.vmem [shape: bf16[2,64,16], index: 3, kind: output, shape index: {0}]
  %s4 = inlined_call_operand.vmem [shape: f32[2,8,16], index: 4, kind: output, shape index: {1}]
  %5 = xla_tuple %s3, %s4
  %s6 = sld [smem:[#allocation0]]
  $region53: #{_lambda_.13} parent=0
    _
  %s8 = ssub.s32 1, %s6
  %s9 = scalar_select 0, %s8, %s6
  loop: start=0, step=1, limit=4
  $region2: #{_lambda_.13} parent=0 // loop_pre_header
    _
  $region3: #{_lambda_.13} parent=0 // loop_header
    %s11 = sphi 0, %s15
    %p12 = scmp.ge.s32.totalorder %s11, 4
    %s18 = sphi 0, %s30
    %s19 = sphi 0, %s26
    %s20 = sphi 0, %s18
    %s21 = sphi 0, %s19
    %s22 = sphi 0, %s20
    %s23 = sphi 0, %s21
    %s35 = sphi 0, %s37
    %s38 = sphi 0, %s35
    %s39 = sphi 0, %s38
    %s55 = sphi 0, %s39
    %s59 = sphi 0, %s59
    %s61 = sphi 0, %s59
    %s62 = sphi 0, %s61
    %s76 = sphi 0, %s62
    %s80 = sphi 0, %s80
    %s82 = sphi 0, %s80
    %s83 = sphi 0, %s82
    %s97 = sphi 0, %s83
    %s105 = sphi 0, %s107
    %s108 = sphi 0, %s105
    %s109 = sphi 0, %s108
    %s125 = sphi 0, %s109
    %s133 = sphi 0, %s135
    %s136 = sphi 0, %s133
    %s137 = sphi 0, %s136
    %s153 = sphi 0, %s137
  $region4: #{_lambda_.13} parent=0 // loop_header_branch
    %14 = sbr.rel (%p12) target = $region8
  $region5: #{_lambda_.13} parent=0 // loop_body
    %s16 = ssub.s32 %s11, 1
    %s17 = ssub.s32 %s11, 2
    %s24 = sadd.s32 1, %s19
    %p25 = scmp.ge.s32.totalorder %s24, 1
    %s26 = scalar_select %p25, 0, %s24
    %s27 = sadd.s32 1, %s18
    %s28 = scalar_select %p25, %s27, %s18
    %p29 = scmp.ge.s32.totalorder %s28, 2
    %s30 = scalar_select %p29, 0, %s28
    %s31 = ssub.s32 %s18, %s30
    %s32 = ssub.s32 %s19, %s26
    %s33 = sor.u32 %s31, %s32
    %p34 = scmp.eq.s32.totalorder %s33, 0
    %s36 = sadd.s32 %s35, 1
    %s37 = scalar_select %p34, %s35, %s36
    %p40 = pneg %p34
    %p41 = scmp.eq.s32.totalorder %s11, 1
    %p42 = por %p40, %p41
    %p43 = scmp.ne.s32.totalorder %s35, %s38
    %p44 = scmp.eq.s32.totalorder %s11, 0
    %p45 = por %p43, %p44
    %p46 = scmp.ne.s32.totalorder %s35, %s38
    %p47 = scmp.eq.s32.totalorder %s16, 1
    %p48 = por %p46, %p47
    %p49 = scmp.ne.s32.totalorder %s38, %s39
    %p50 = scmp.eq.s32.totalorder %s16, 0
    %p51 = por %p49, %p50
    %p52 = scmp.ne.s32.totalorder %s38, %s39
    %p53 = scmp.eq.s32.totalorder %s17, 1
    %p54 = por %p52, %p53
    %p56 = scmp.ne.s32.totalorder %s39, %s55
    %p57 = scmp.eq.s32.totalorder %s17, 0
    %p58 = por %p56, %p57
    %s60 = sadd.s32 %s59, 1
    %p63 = scmp.eq.s32.totalorder %s11, 1
    %p64 = scmp.ne.s32.totalorder %s59, %s61
    %p65 = scmp.eq.s32.totalorder %s11, 0
    %p66 = por %p64, %p65
    %p67 = scmp.ne.s32.totalorder %s59, %s61
    %p68 = scmp.eq.s32.totalorder %s16, 1
    %p69 = por %p67, %p68
    %p70 = scmp.ne.s32.totalorder %s61, %s62
    %p71 = scmp.eq.s32.totalorder %s16, 0
    %p72 = por %p70, %p71
    %p73 = scmp.ne.s32.totalorder %s61, %s62
    %p74 = scmp.eq.s32.totalorder %s17, 1
    %p75 = por %p73, %p74
    %p77 = scmp.ne.s32.totalorder %s62, %s76
    %p78 = scmp.eq.s32.totalorder %s17, 0
    %p79 = por %p77, %p78
    %s81 = sadd.s32 %s80, 1
    %p84 = scmp.eq.s32.totalorder %s11, 1
    %p85 = scmp.ne.s32.totalorder %s80, %s82
    %p86 = scmp.eq.s32.totalorder %s11, 0
    %p87 = por %p85, %p86
    %p88 = scmp.ne.s32.totalorder %s80, %s82
    %p89 = scmp.eq.s32.totalorder %s16, 1
    %p90 = por %p88, %p89
    %p91 = scmp.ne.s32.totalorder %s82, %s83
    %p92 = scmp.eq.s32.totalorder %s16, 0
    %p93 = por %p91, %p92
    %p94 = scmp.ne.s32.totalorder %s82, %s83
    %p95 = scmp.eq.s32.totalorder %s17, 1
    %p96 = por %p94, %p95
    %p98 = scmp.ne.s32.totalorder %s83, %s97
    %p99 = scmp.eq.s32.totalorder %s17, 0
    %p100 = por %p98, %p99
    %s101 = ssub.s32 %s18, %s30
    %s102 = ssub.s32 %s19, %s26
    %s103 = sor.u32 %s101, %s102
    %p104 = scmp.eq.s32.totalorder %s103, 0
    %s106 = sadd.s32 %s105, 1
    %s107 = scalar_select %p104, %s105, %s106
    %p110 = pneg %p104
    %p111 = scmp.eq.s32.totalorder %s11, 1
    %p112 = por %p110, %p111
    %p113 = scmp.ne.s32.totalorder %s105, %s108
    %p114 = scmp.eq.s32.totalorder %s11, 0
    %p115 = por %p113, %p114
    %p116 = scmp.ne.s32.totalorder %s105, %s108
    %p117 = scmp.eq.s32.totalorder %s16, 1
    %p118 = por %p116, %p117
    %p119 = scmp.ne.s32.totalorder %s108, %s109
    %p120 = scmp.eq.s32.totalorder %s16, 0
    %p121 = por %p119, %p120
    %p122 = scmp.ne.s32.totalorder %s108, %s109
    %p123 = scmp.eq.s32.totalorder %s17, 1
    %p124 = por %p122, %p123
    %p126 = scmp.ne.s32.totalorder %s109, %s125
    %p127 = scmp.eq.s32.totalorder %s17, 0
    %p128 = por %p126, %p127
    %s129 = ssub.s32 %s18, %s30
    %s130 = ssub.s32 %s19, %s26
    %s131 = sor.u32 %s129, %s130
    %p132 = scmp.eq.s32.totalorder %s131, 0
    %s134 = sadd.s32 %s133, 1
    %s135 = scalar_select %p132, %s133, %s134
    %p138 = pneg %p132
    %p139 = scmp.eq.s32.totalorder %s11, 1
    %p140 = por %p138, %p139
    %p141 = scmp.ne.s32.totalorder %s133, %s136
    %p142 = scmp.eq.s32.totalorder %s11, 0
    %p143 = por %p141, %p142
    %p144 = scmp.ne.s32.totalorder %s133, %s136
    %p145 = scmp.eq.s32.totalorder %s16, 1
    %p146 = por %p144, %p145
    %p147 = scmp.ne.s32.totalorder %s136, %s137
    %p148 = scmp.eq.s32.totalorder %s16, 0
    %p149 = por %p147, %p148
    %p150 = scmp.ne.s32.totalorder %s136, %s137
    %p151 = scmp.eq.s32.totalorder %s17, 1
    %p152 = por %p150, %p151
    %p154 = scmp.ne.s32.totalorder %s137, %s153
    %p155 = scmp.eq.s32.totalorder %s17, 0
    %p156 = por %p154, %p155
    %p157 = scmp.le.s32.totalorder 1, %s11
    %p158 = scmp.lt.s32.totalorder %s11, 3
    %p159 = pnand %p157, %p158
    %p160 = pneg %p159
    // Predicated region
    $region9: #{_lambda_.13} parent=5 // pred_check
      _
    $region10: #{_lambda_.13} parent=5 // pred_check_branch
      %162 = sbr.rel (%p159) target = $region12
    $region11: #{_lambda_.13} parent=5 // pred_region
      %s163 = ssub.s32 %s11, 1
      // Predicated region
      $region13: #{_lambda_.13} parent=11 // pred_check
        %p164 = pneg %p72
      $region14: #{_lambda_.13} parent=11 // pred_check_branch
        %166 = sbr.rel (%p164) target = $region16
      $region15: #{_lambda_.13} parent=11 // pred_region
        _
      $region16: #{_lambda_.13} parent=11 // pred_fallthru
        _
      // Predicated region
      $region17: #{_lambda_.13} parent=11 // pred_check
        %p167 = pneg %p93
      $region18: #{_lambda_.13} parent=11 // pred_check_branch
        %169 = sbr.rel (%p167) target = $region20
      $region19: #{_lambda_.13} parent=11 // pred_region
        _
      $region20: #{_lambda_.13} parent=11 // pred_fallthru
        _
    $region12: #{_lambda_.13} parent=5 // pred_fallthru
      _
    %p170 = scmp.lt.s32.totalorder %s11, 2
    // Predicated region
    $region21: #{_lambda_.13} parent=5 // pred_check
      %p171 = pneg %p170
    $region22: #{_lambda_.13} parent=5 // pred_check_branch
      %173 = sbr.rel (%p171) target = $region24
    $region23: #{_lambda_.13} parent=5 // pred_region
      // Predicated region
      $region25: #{_lambda_.13} parent=23 // pred_check
        %p174 = pneg %p45
      $region26: #{_lambda_.13} parent=23 // pred_check_branch
        %176 = sbr.rel (%p174) target = $region28
      $region27: #{_lambda_.13} parent=23 // pred_region
        %s177 = smul.u32 8, %s19
        %p178 = scmp.lt.s32.totalorder %s18, 1
        %s179 = scalar_select %p178, %s18, 1
        %p180 = scmp.lt.s32.totalorder %s177, 7
        %s181 = scalar_select %p180, %s177, 7
        %s182 = smul.addr %s179, 8
        %s183 = sadd.s32 %s181, %s182
        %s184 = smul.addr %s183, 4
        %s185 = scalar_lea.vmem %s0, %s184
        %s186 = smul.u32 8, %s19
      $region28: #{_lambda_.13} parent=23 // pred_fallthru
        _
    $region24: #{_lambda_.13} parent=5 // pred_fallthru
      _
    %p187 = scmp.le.s32.totalorder 1, %s11
    %p188 = scmp.lt.s32.totalorder %s11, 3
    %p189 = pnand %p187, %p188
    %p190 = pneg %p189
    // Predicated region
    $region29: #{_lambda_.13} parent=5 // pred_check
      _
    $region30: #{_lambda_.13} parent=5 // pred_check_branch
      %192 = sbr.rel (%p189) target = $region32
    $region31: #{_lambda_.13} parent=5 // pred_region
      %s193 = ssub.s32 %s11, 1
      %s194 = smul.u32 8, %s21
      %p195 = scmp.lt.s32.totalorder %s20, 1
      %s196 = scalar_select %p195, %s20, 1
      %p197 = scmp.lt.s32.totalorder %s194, 7
      %s198 = scalar_select %p197, %s194, 7
      %s199 = smul.addr %s196, 8
      %s200 = sadd.s32 %s198, %s199
      %s201 = smul.addr %s200, 4
      %s202 = scalar_lea.vmem %s0, %s201
      %p203 = pneg %p51
      %p204 = pneg %p48
      %p205 = pneg %p72
      %p206 = pneg %p69
      %p207 = pneg %p93
      %p208 = pneg %p90
      %p209 = pneg %p121
      %p210 = pneg %p118
      %s211 = smul.u32 8, %s21
      %p212 = scmp.lt.s32.totalorder %s20, 1
      %s213 = scalar_select %p212, %s20, 1
      %p214 = scmp.lt.s32.totalorder %s211, 7
      %s215 = scalar_select %p214, %s211, 7
      %s216 = smul.addr %s213, 8
      %s217 = sadd.s32 %s215, %s216
      %s218 = smul.addr %s217, 4
      %s219 = scalar_lea.vmem %s3, %s218
      %p220 = pneg %p149
      %p221 = pneg %p146
      %p222 = scmp.lt.s32.totalorder %s20, 1
      %s223 = scalar_select %p222, %s20, 1
      %p224 = scmp.lt.s32.totalorder %s21, 0
      %s225 = scalar_select %p224, %s21, 0
      %s226 = sadd.s32 %s225, %s223
      %s227 = smul.addr %s226, 8
      %s228 = scalar_lea.vmem %s4, %s227
      %s229 = smul.u32 8, %s21
      %p230 = scmp.lt.s32.totalorder %s20, 1
      %s231 = scalar_select %p230, %s20, 1
      %p232 = scmp.lt.s32.totalorder %s229, 7
      %s233 = scalar_select %p232, %s229, 7
      %s234 = smul.addr %s231, 8
      %s235 = sadd.s32 %s233, %s234
      %s236 = smul.addr %s235, 4
      %s237 = scalar_lea.vmem %s0, %s236
      %s238 = smul.u32 8, %s21
      %s239 = smul.u32 8, %s21
      %p240 = scmp.lt.s32.totalorder %s20, 1
      %s241 = scalar_select %p240, %s20, 1
      %p242 = scmp.lt.s32.totalorder %s239, 7
      %s243 = scalar_select %p242, %s239, 7
      %s244 = smul.addr %s241, 8
      %s245 = sadd.s32 %s243, %s244
      %s246 = smul.addr %s245, 4
      %s247 = scalar_lea.vmem %s3, %s246
      %s248 = smul.u32 8, %s21
      %p249 = scmp.lt.s32.totalorder %s20, 1
      %s250 = scalar_select %p249, %s20, 1
      %p251 = scmp.lt.s32.totalorder %s21, 0
      %s252 = scalar_select %p251, %s21, 0
      %s253 = sadd.s32 %s252, %s250
      %s254 = smul.addr %s253, 8
      %s255 = scalar_lea.vmem %s4, %s254
      %v257 = vld [vmem:[%s237] sm:$0xf]
      %v258 = vld [vmem:[%s237 + $0x4] sm:$0xf]
      %v259 = vld [vmem:[%s237 + $0x8] sm:$0xf]
      %v260 = vld [vmem:[%s237 + $0xc] sm:$0xf]
      %v261 = vld [vmem:[%s237 + $0x10] sm:$0xf]
      %v262 = vld [vmem:[%s237 + $0x14] sm:$0xf]
      %v263 = vld [vmem:[%s237 + $0x18] sm:$0xf]
      %v264 = vld [vmem:[%s237 + $0x1c] sm:$0xf]
      %v265 = vld [vmem:[%s1] sm:$0xf]
      %v266 = vld [vmem:[%s1 + $0x4] sm:$0xf]
      %v267 = vld [vmem:[%s1 + $0x8] sm:$0xf]
      %v268 = vld [vmem:[%s1 + $0xc] sm:$0xf]
      %v269 = vld [vmem:[%s1 + $0x10] sm:$0xf]
      %v270 = vld [vmem:[%s1 + $0x14] sm:$0xf]
      %v271 = vld [vmem:[%s1 + $0x18] sm:$0xf]
      %v272 = vld [vmem:[%s1 + $0x1c] sm:$0xf]
      %v273 = vld [vmem:[%s1 + $0x20] sm:$0xf]
      %v274 = vld [vmem:[%s1 + $0x24] sm:$0xf]
      %v275 = vld [vmem:[%s1 + $0x28] sm:$0xf]
      %v276 = vld [vmem:[%s1 + $0x2c] sm:$0xf]
      %v277 = vld [vmem:[%s1 + $0x30] sm:$0xf]
      %v278 = vld [vmem:[%s1 + $0x34] sm:$0xf]
      %v279 = vld [vmem:[%s1 + $0x38] sm:$0xf]
      %v280 = vld [vmem:[%s1 + $0x3c] sm:$0xf]
      %v289 = vunpack.c.l.b16 %v257
      %v290 = vunpack.c.l.b16 %v258
      %v291 = vunpack.c.l.b16 %v259
      %v292 = vunpack.c.l.b16 %v260
      %v293 = vunpack.c.l.b16 %v261
      %v294 = vunpack.c.l.b16 %v262
      %v295 = vunpack.c.l.b16 %v263
      %v296 = vunpack.c.l.b16 %v264
      %v297 = vpack.c.b16 %v290, %v289
      %v298 = vpack.c.b16 %v292, %v291
      %v299 = vpack.c.b16 %v294, %v293
      %v300 = vpack.c.b16 %v296, %v295
      %v321 = vunpack.c.l.b16 %v265
      %v322 = vunpack.c.l.b16 %v266
      %v323 = vunpack.c.l.b16 %v267
      %v324 = vunpack.c.l.b16 %v268
      %v325 = vunpack.c.l.b16 %v269
      %v326 = vunpack.c.l.b16 %v270
      %v327 = vunpack.c.l.b16 %v271
      %v328 = vunpack.c.l.b16 %v272
      %v329 = vunpack.c.l.b16 %v273
      %v330 = vunpack.c.l.b16 %v274
      %v331 = vunpack.c.l.b16 %v275
      %v332 = vunpack.c.l.b16 %v276
      %v333 = vunpack.c.l.b16 %v277
      %v334 = vunpack.c.l.b16 %v278
      %v335 = vunpack.c.l.b16 %v279
      %v336 = vunpack.c.l.b16 %v280
      %v337 = vpack.c.b16 %v322, %v321
      %v338 = vpack.c.b16 %v324, %v323
      %v339 = vpack.c.b16 %v326, %v325
      %v340 = vpack.c.b16 %v328, %v327
      %v341 = vpack.c.b16 %v330, %v329
      %v342 = vpack.c.b16 %v332, %v331
      %v343 = vpack.c.b16 %v334, %v333
      %v344 = vpack.c.b16 %v336, %v335
      %353 = vmatprep.subr.bf16.mxu0 0
      %354 = vmatpush1.bf16.msra.mxu0 %v337
      %355 = vmatprep.subr.bf16.mxu0 0
      %356 = vmatpush1.bf16.msra.mxu0 %v338
      %357 = vmatprep.subr.bf16.mxu0 0
      %358 = vmatpush1.bf16.msra.mxu0 %v339
      %359 = vmatprep.subr.bf16.mxu0 0
      %360 = vmatpush1.bf16.msra.mxu0 %v340
      %361 = vmatprep.subr.bf16.mxu0 0
      %362 = vmatpush1.bf16.msra.mxu0 %v341
      %363 = vmatprep.subr.bf16.mxu0 0
      %364 = vmatpush1.bf16.msra.mxu0 %v342
      %365 = vmatprep.subr.bf16.mxu0 0
      %366 = vmatpush1.bf16.msra.mxu0 %v343
      %367 = vmatprep.subr.bf16.mxu0 0
      %368 = vmatpush1.bf16.msra.mxu0 %v344
      %369 = vmatprep.subr.bf16.mxu0 0
      %370 = vmatpush1.bf16.msra.mxu0 0
      %371 = vmatprep.subr.bf16.mxu0 0
      %372 = vmatpush1.bf16.msra.mxu0 0
      %373 = vmatprep.subr.bf16.mxu0 0
      %374 = vmatpush1.bf16.msra.mxu0 0
      %375 = vmatprep.subr.bf16.mxu0 0
      %376 = vmatpush1.bf16.msra.mxu0 0
      %377 = vmatprep.subr.bf16.mxu0 0
      %378 = vmatpush1.bf16.msra.mxu0 0
      %379 = vmatprep.subr.bf16.mxu0 0
      %380 = vmatpush1.bf16.msra.mxu0 0
      %381 = vmatprep.subr.bf16.mxu0 0
      %382 = vmatpush1.bf16.msra.mxu0 0
      %383 = vmatprep.subr.bf16.mxu0 0
      %384 = vmatpush1.bf16.msra.mxu0 0
      %385 = vmatprep.mubr.bf16.mxu0 0
      %386 = vmatmul.mubr.bf16.gmra.mrb[0].mxu0 %v297
      %v387 = vpop.f32.mrb[0].mxu0
      %v388 = vadd.f32 0.0, %v387
      %v389 = vpop.f32.mrb[0].mxu0
      %v390 = vpop.f32.mrb[0].mxu0
      %v391 = vadd.f32 0.0, %v390
      %v392 = vpop.f32.mrb[0].mxu0
      %393 = vmatprep.mubr.bf16.mxu0 0
      %394 = vmatmul.mubr.bf16.gmra.mrb[0].mxu0 %v298
      %v395 = vpop.f32.mrb[0].mxu0
      %v396 = vadd.f32 0.0, %v395
      %v397 = vpop.f32.mrb[0].mxu0
      %v398 = vpop.f32.mrb[0].mxu0
      %v399 = vadd.f32 0.0, %v398
      %v400 = vpop.f32.mrb[0].mxu0
      %401 = vmatprep.mubr.bf16.mxu0 0
      %402 = vmatmul.mubr.bf16.gmra.mrb[0].mxu0 %v299
      %v403 = vpop.f32.mrb[0].mxu0
      %v404 = vadd.f32 0.0, %v403
      %v405 = vpop.f32.mrb[0].mxu0
      %v406 = vpop.f32.mrb[0].mxu0
      %v407 = vadd.f32 0.0, %v406
      %v408 = vpop.f32.mrb[0].mxu0
      %409 = vmatprep.mubr.bf16.mxu0 0
      %410 = vmatmul.mubr.bf16.gmra.mrb[0].mxu0 %v300
      %v411 = vpop.f32.mrb[0].mxu0
      %v412 = vadd.f32 0.0, %v411
      %v413 = vpop.f32.mrb[0].mxu0
      %v414 = vpop.f32.mrb[0].mxu0
      %v415 = vadd.f32 0.0, %v414
      %v416 = vpop.f32.mrb[0].mxu0
      %417 = vdwg.mxu0
      %v418 = vpack.c.bf16 %v391, %v388
      %v419 = vpack.c.bf16 %v399, %v396
      %v420 = vpack.c.bf16 %v407, %v404
      %v421 = vpack.c.bf16 %v415, %v412
      %v426 = vunpack.c.l.b16 %v418
      %v427 = vunpack.c.h.b16 %v418
      %v428 = vunpack.c.l.b16 %v419
      %v429 = vunpack.c.h.b16 %v419
      %v430 = vunpack.c.l.b16 %v420
      %v431 = vunpack.c.h.b16 %v420
      %v432 = vunpack.c.l.b16 %v421
      %v433 = vunpack.c.h.b16 %v421
      %v434 = vpack.c.b16 %v426, %v426
      %v435 = vpack.c.b16 %v427, %v427
      %v436 = vpack.c.b16 %v428, %v428
      %v437 = vpack.c.b16 %v429, %v429
      %v438 = vpack.c.b16 %v430, %v430
      %v439 = vpack.c.b16 %v431, %v431
      %v440 = vpack.c.b16 %v432, %v432
      %v441 = vpack.c.b16 %v433, %v433
      %vm450 = vcmask 125952
      %451 = vst.msk [vmem:[%s247] sm:$0xf] %vm450, %v434
      %452 = vst.msk [vmem:[%s247 + $0x4] sm:$0xf] %vm450, %v435
      %453 = vst.msk [vmem:[%s247 + $0x8] sm:$0xf] %vm450, %v436
      %454 = vst.msk [vmem:[%s247 + $0xc] sm:$0xf] %vm450, %v437
      %455 = vst.msk [vmem:[%s247 + $0x10] sm:$0xf] %vm450, %v438
      %456 = vst.msk [vmem:[%s247 + $0x14] sm:$0xf] %vm450, %v439
      %457 = vst.msk [vmem:[%s247 + $0x18] sm:$0xf] %vm450, %v440
      %458 = vst.msk [vmem:[%s247 + $0x1c] sm:$0xf] %vm450, %v441
      %vm459 = vcmask 130048
      %v460 = vsel %vm459, %v388, 0.0
      %v461 = vsel %vm459, %v391, 0.0
      %v462 = vadd.f32 %v460, %v461
      %v463 = vsel %vm459, %v396, 0.0
      %v464 = vadd.f32 %v462, %v463
      %v465 = vsel %vm459, %v399, 0.0
      %v466 = vadd.f32 %v464, %v465
      %v467 = vsel %vm459, %v404, 0.0
      %v468 = vadd.f32 %v466, %v467
      %v469 = vsel %vm459, %v407, 0.0
      %v470 = vadd.f32 %v468, %v469
      %v471 = vsel %vm459, %v412, 0.0
      %v472 = vadd.f32 %v470, %v471
      %v473 = vsel %vm459, %v415, 0.0
      %v474 = vadd.f32 %v472, %v473
      %v475 = vrot.slane %v474, 4
      %v476 = vadd.f32 %v474, %v475
      %v477 = vrot.slane %v476, 2
      %v478 = vadd.f32 %v476, %v477
      %v479 = vrot.slane %v478, 1
      %v480 = vadd.f32 %v478, %v479
      %v481 = vmul.f32 %v388, %v388
      %v482 = vmul.f32 %v391, %v391
      %v483 = vmul.f32 %v396, %v396
      %v484 = vmul.f32 %v399, %v399
      %v485 = vmul.f32 %v404, %v404
      %v486 = vmul.f32 %v407, %v407
      %v487 = vmul.f32 %v412, %v412
      %v488 = vmul.f32 %v415, %v415
      %v489 = vsel %vm459, %v481, 0.0
      %v490 = vsel %vm459, %v482, 0.0
      %v491 = vadd.f32 %v489, %v490
      %v492 = vsel %vm459, %v483, 0.0
      %v493 = vadd.f32 %v491, %v492
      %v494 = vsel %vm459, %v484, 0.0
      %v495 = vadd.f32 %v493, %v494
      %v496 = vsel %vm459, %v485, 0.0
      %v497 = vadd.f32 %v495, %v496
      %v498 = vsel %vm459, %v486, 0.0
      %v499 = vadd.f32 %v497, %v498
      %v500 = vsel %vm459, %v487, 0.0
      %v501 = vadd.f32 %v499, %v500
      %v502 = vsel %vm459, %v488, 0.0
      %v503 = vadd.f32 %v501, %v502
      %v504 = vrot.slane %v503, 4
      %v505 = vadd.f32 %v503, %v504
      %v506 = vrot.slane %v505, 2
      %v507 = vadd.f32 %v505, %v506
      %v508 = vrot.slane %v507, 1
      %v509 = vadd.f32 %v507, %v508
      %v510 = vlaneseq
      %v511 = vshrl.u32 %v510, 7
      %vm512 = vcmp.eq.s32.totalorder %v511, 0
      %vm513 = vcmp.eq.s32.totalorder %v511, 1
      %v514 = vsel %vm513, %v509, 0.0
      %v515 = vsel %vm512, %v480, %v514
      %516 = vst.msk [vmem:[%s255] sm:$0xff] %vm459, %v515
      %s517 = smul.u32 8, %s21
      %p518 = scmp.lt.s32.totalorder %s20, 1
      %s519 = scalar_select %p518, %s20, 1
      %p520 = scmp.lt.s32.totalorder %s517, 7
      %s521 = scalar_select %p520, %s517, 7
      %s522 = smul.addr %s519, 8
      %s523 = sadd.s32 %s521, %s522
      %s524 = smul.addr %s523, 4
      %s525 = scalar_lea.vmem %s3, %s524
      %p526 = scmp.lt.s32.totalorder %s20, 1
      %s527 = scalar_select %p526, %s20, 1
      %p528 = scmp.lt.s32.totalorder %s21, 0
      %s529 = scalar_select %p528, %s21, 0
      %s530 = sadd.s32 %s529, %s527
      %s531 = smul.addr %s530, 8
      %s532 = scalar_lea.vmem %s4, %s531
      // Predicated region
      $region33: #{_lambda_.13} parent=31 // pred_check
        %p533 = pneg %p118
      $region34: #{_lambda_.13} parent=31 // pred_check_branch
        %535 = sbr.rel (%p533) target = $region36
      $region35: #{_lambda_.13} parent=31 // pred_region
        %s536 = smul.u32 8, %s21
      $region36: #{_lambda_.13} parent=31 // pred_fallthru
        _
      // Predicated region
      $region37: #{_lambda_.13} parent=31 // pred_check
        %p537 = pneg %p146
      $region38: #{_lambda_.13} parent=31 // pred_check_branch
        %539 = sbr.rel (%p537) target = $region40
      $region39: #{_lambda_.13} parent=31 // pred_region
        _
      $region40: #{_lambda_.13} parent=31 // pred_fallthru
        _
    $region32: #{_lambda_.13} parent=5 // pred_fallthru
      _
    %p540 = scmp.le.s32.totalorder 2, %s11
    // Predicated region
    $region41: #{_lambda_.13} parent=5 // pred_check
      %p541 = pneg %p540
    $region42: #{_lambda_.13} parent=5 // pred_check_branch
      %543 = sbr.rel (%p541) target = $region44
    $region43: #{_lambda_.13} parent=5 // pred_region
      %s544 = ssub.s32 %s11, 2
      // Predicated region
      $region45: #{_lambda_.13} parent=43 // pred_check
        %p545 = pneg %p124
      $region46: #{_lambda_.13} parent=43 // pred_check_branch
        %547 = sbr.rel (%p545) target = $region48
      $region47: #{_lambda_.13} parent=43 // pred_region
        %s548 = smul.u32 8, %s23
        %p549 = scmp.lt.s32.totalorder %s22, 1
        %s550 = scalar_select %p549, %s22, 1
        %p551 = scmp.lt.s32.totalorder %s548, 7
        %s552 = scalar_select %p551, %s548, 7
        %s553 = smul.addr %s550, 8
        %s554 = sadd.s32 %s552, %s553
        %s555 = smul.addr %s554, 4
        %s556 = scalar_lea.vmem %s3, %s555
      $region48: #{_lambda_.13} parent=43 // pred_fallthru
        _
      // Predicated region
      $region49: #{_lambda_.13} parent=43 // pred_check
        %p557 = pneg %p152
      $region50: #{_lambda_.13} parent=43 // pred_check_branch
        %559 = sbr.rel (%p557) target = $region52
      $region51: #{_lambda_.13} parent=43 // pred_region
        %p560 = scmp.lt.s32.totalorder %s22, 1
        %s561 = scalar_select %p560, %s22, 1
        %p562 = scmp.lt.s32.totalorder %s23, 0
        %s563 = scalar_select %p562, %s23, 0
        %s564 = sadd.s32 %s563, %s561
        %s565 = smul.addr %s564, 8
        %s566 = scalar_lea.vmem %s4, %s565
      $region52: #{_lambda_.13} parent=43 // pred_fallthru
        _
    $region44: #{_lambda_.13} parent=5 // pred_fallthru
      _
  $region6: #{_lambda_.13} parent=0 // loop_footer
    %s15 = sadd.s32 1, %s11
  $region7: #{_lambda_.13} parent=0 // loop_footer_branch
    %10 = sbr.rel target = $region3
  $region8: #{_lambda_.13} parent=0 // loop_exit
    _

// kernel: _lambda_.14
$region0: #{_lambda_.14}
  #allocation0 [shape = 'u32[]', space=smem, size = 0x4, offset = 0x4, fixed_abs, tag = 'smem constant byte address 0x4 - core index']
  #allocation1 [shape = 'u32[144,128]{1,0:T(1,128)}', space=vmem, size = 0x12000, scoped, tag = 'internal scratch']
  %s0 = inlined_call_operand.vmem [shape: bf16[2,16,256], index: 0, kind: input, shape index: {}]
  %s1 = inlined_call_operand.vmem [shape: bf16[256,32], index: 1, kind: input, shape index: {}]
  %s2 = inlined_call_operand.vmem [shape: f32[1,32], index: 2, kind: input, shape index: {}]
  %s3 = inlined_call_operand.vmem [shape: bf16[2,16,32], index: 3, kind: output, shape index: {0}]
  %s4 = inlined_call_operand.vmem [shape: f32[2,8,32], index: 4, kind: output, shape index: {1}]
  %5 = xla_tuple %s3, %s4
  %s6 = sld [smem:[#allocation0]]
  $region53: #{_lambda_.14} parent=0
    _
  %s8 = ssub.s32 1, %s6
  %s9 = scalar_select 0, %s8, %s6
  loop: start=0, step=1, limit=4
  $region2: #{_lambda_.14} parent=0 // loop_pre_header
    _
  $region3: #{_lambda_.14} parent=0 // loop_header
    %s11 = sphi 0, %s15
    %p12 = scmp.ge.s32.totalorder %s11, 4
    %s18 = sphi 0, %s30
    %s19 = sphi 0, %s26
    %s20 = sphi 0, %s18
    %s21 = sphi 0, %s19
    %s22 = sphi 0, %s20
    %s23 = sphi 0, %s21
    %s35 = sphi 0, %s37
    %s38 = sphi 0, %s35
    %s39 = sphi 0, %s38
    %s55 = sphi 0, %s39
    %s59 = sphi 0, %s59
    %s61 = sphi 0, %s59
    %s62 = sphi 0, %s61
    %s76 = sphi 0, %s62
    %s80 = sphi 0, %s80
    %s82 = sphi 0, %s80
    %s83 = sphi 0, %s82
    %s97 = sphi 0, %s83
    %s105 = sphi 0, %s107
    %s108 = sphi 0, %s105
    %s109 = sphi 0, %s108
    %s125 = sphi 0, %s109
    %s133 = sphi 0, %s135
    %s136 = sphi 0, %s133
    %s137 = sphi 0, %s136
    %s153 = sphi 0, %s137
  $region4: #{_lambda_.14} parent=0 // loop_header_branch
    %14 = sbr.rel (%p12) target = $region8
  $region5: #{_lambda_.14} parent=0 // loop_body
    %s16 = ssub.s32 %s11, 1
    %s17 = ssub.s32 %s11, 2
    %s24 = sadd.s32 1, %s19
    %p25 = scmp.ge.s32.totalorder %s24, 1
    %s26 = scalar_select %p25, 0, %s24
    %s27 = sadd.s32 1, %s18
    %s28 = scalar_select %p25, %s27, %s18
    %p29 = scmp.ge.s32.totalorder %s28, 2
    %s30 = scalar_select %p29, 0, %s28
    %s31 = ssub.s32 %s18, %s30
    %s32 = ssub.s32 %s19, %s26
    %s33 = sor.u32 %s31, %s32
    %p34 = scmp.eq.s32.totalorder %s33, 0
    %s36 = sadd.s32 %s35, 1
    %s37 = scalar_select %p34, %s35, %s36
    %p40 = pneg %p34
    %p41 = scmp.eq.s32.totalorder %s11, 1
    %p42 = por %p40, %p41
    %p43 = scmp.ne.s32.totalorder %s35, %s38
    %p44 = scmp.eq.s32.totalorder %s11, 0
    %p45 = por %p43, %p44
    %p46 = scmp.ne.s32.totalorder %s35, %s38
    %p47 = scmp.eq.s32.totalorder %s16, 1
    %p48 = por %p46, %p47
    %p49 = scmp.ne.s32.totalorder %s38, %s39
    %p50 = scmp.eq.s32.totalorder %s16, 0
    %p51 = por %p49, %p50
    %p52 = scmp.ne.s32.totalorder %s38, %s39
    %p53 = scmp.eq.s32.totalorder %s17, 1
    %p54 = por %p52, %p53
    %p56 = scmp.ne.s32.totalorder %s39, %s55
    %p57 = scmp.eq.s32.totalorder %s17, 0
    %p58 = por %p56, %p57
    %s60 = sadd.s32 %s59, 1
    %p63 = scmp.eq.s32.totalorder %s11, 1
    %p64 = scmp.ne.s32.totalorder %s59, %s61
    %p65 = scmp.eq.s32.totalorder %s11, 0
    %p66 = por %p64, %p65
    %p67 = scmp.ne.s32.totalorder %s59, %s61
    %p68 = scmp.eq.s32.totalorder %s16, 1
    %p69 = por %p67, %p68
    %p70 = scmp.ne.s32.totalorder %s61, %s62
    %p71 = scmp.eq.s32.totalorder %s16, 0
    %p72 = por %p70, %p71
    %p73 = scmp.ne.s32.totalorder %s61, %s62
    %p74 = scmp.eq.s32.totalorder %s17, 1
    %p75 = por %p73, %p74
    %p77 = scmp.ne.s32.totalorder %s62, %s76
    %p78 = scmp.eq.s32.totalorder %s17, 0
    %p79 = por %p77, %p78
    %s81 = sadd.s32 %s80, 1
    %p84 = scmp.eq.s32.totalorder %s11, 1
    %p85 = scmp.ne.s32.totalorder %s80, %s82
    %p86 = scmp.eq.s32.totalorder %s11, 0
    %p87 = por %p85, %p86
    %p88 = scmp.ne.s32.totalorder %s80, %s82
    %p89 = scmp.eq.s32.totalorder %s16, 1
    %p90 = por %p88, %p89
    %p91 = scmp.ne.s32.totalorder %s82, %s83
    %p92 = scmp.eq.s32.totalorder %s16, 0
    %p93 = por %p91, %p92
    %p94 = scmp.ne.s32.totalorder %s82, %s83
    %p95 = scmp.eq.s32.totalorder %s17, 1
    %p96 = por %p94, %p95
    %p98 = scmp.ne.s32.totalorder %s83, %s97
    %p99 = scmp.eq.s32.totalorder %s17, 0
    %p100 = por %p98, %p99
    %s101 = ssub.s32 %s18, %s30
    %s102 = ssub.s32 %s19, %s26
    %s103 = sor.u32 %s101, %s102
    %p104 = scmp.eq.s32.totalorder %s103, 0
    %s106 = sadd.s32 %s105, 1
    %s107 = scalar_select %p104, %s105, %s106
    %p110 = pneg %p104
    %p111 = scmp.eq.s32.totalorder %s11, 1
    %p112 = por %p110, %p111
    %p113 = scmp.ne.s32.totalorder %s105, %s108
    %p114 = scmp.eq.s32.totalorder %s11, 0
    %p115 = por %p113, %p114
    %p116 = scmp.ne.s32.totalorder %s105, %s108
    %p117 = scmp.eq.s32.totalorder %s16, 1
    %p118 = por %p116, %p117
    %p119 = scmp.ne.s32.totalorder %s108, %s109
    %p120 = scmp.eq.s32.totalorder %s16, 0
    %p121 = por %p119, %p120
    %p122 = scmp.ne.s32.totalorder %s108, %s109
    %p123 = scmp.eq.s32.totalorder %s17, 1
    %p124 = por %p122, %p123
    %p126 = scmp.ne.s32.totalorder %s109, %s125
    %p127 = scmp.eq.s32.totalorder %s17, 0
    %p128 = por %p126, %p127
    %s129 = ssub.s32 %s18, %s30
    %s130 = ssub.s32 %s19, %s26
    %s131 = sor.u32 %s129, %s130
    %p132 = scmp.eq.s32.totalorder %s131, 0
    %s134 = sadd.s32 %s133, 1
    %s135 = scalar_select %p132, %s133, %s134
    %p138 = pneg %p132
    %p139 = scmp.eq.s32.totalorder %s11, 1
    %p140 = por %p138, %p139
    %p141 = scmp.ne.s32.totalorder %s133, %s136
    %p142 = scmp.eq.s32.totalorder %s11, 0
    %p143 = por %p141, %p142
    %p144 = scmp.ne.s32.totalorder %s133, %s136
    %p145 = scmp.eq.s32.totalorder %s16, 1
    %p146 = por %p144, %p145
    %p147 = scmp.ne.s32.totalorder %s136, %s137
    %p148 = scmp.eq.s32.totalorder %s16, 0
    %p149 = por %p147, %p148
    %p150 = scmp.ne.s32.totalorder %s136, %s137
    %p151 = scmp.eq.s32.totalorder %s17, 1
    %p152 = por %p150, %p151
    %p154 = scmp.ne.s32.totalorder %s137, %s153
    %p155 = scmp.eq.s32.totalorder %s17, 0
    %p156 = por %p154, %p155
    %p157 = scmp.le.s32.totalorder 1, %s11
    %p158 = scmp.lt.s32.totalorder %s11, 3
    %p159 = pnand %p157, %p158
    %p160 = pneg %p159
    // Predicated region
    $region9: #{_lambda_.14} parent=5 // pred_check
      _
    $region10: #{_lambda_.14} parent=5 // pred_check_branch
      %162 = sbr.rel (%p159) target = $region12
    $region11: #{_lambda_.14} parent=5 // pred_region
      %s163 = ssub.s32 %s11, 1
      // Predicated region
      $region13: #{_lambda_.14} parent=11 // pred_check
        %p164 = pneg %p72
      $region14: #{_lambda_.14} parent=11 // pred_check_branch
        %166 = sbr.rel (%p164) target = $region16
      $region15: #{_lambda_.14} parent=11 // pred_region
        _
      $region16: #{_lambda_.14} parent=11 // pred_fallthru
        _
      // Predicated region
      $region17: #{_lambda_.14} parent=11 // pred_check
        %p167 = pneg %p93
      $region18: #{_lambda_.14} parent=11 // pred_check_branch
        %169 = sbr.rel (%p167) target = $region20
      $region19: #{_lambda_.14} parent=11 // pred_region
        _
      $region20: #{_lambda_.14} parent=11 // pred_fallthru
        _
    $region12: #{_lambda_.14} parent=5 // pred_fallthru
      _
    %p170 = scmp.lt.s32.totalorder %s11, 2
    // Predicated region
    $region21: #{_lambda_.14} parent=5 // pred_check
      %p171 = pneg %p170
    $region22: #{_lambda_.14} parent=5 // pred_check_branch
      %173 = sbr.rel (%p171) target = $region24
    $region23: #{_lambda_.14} parent=5 // pred_region
      // Predicated region
      $region25: #{_lambda_.14} parent=23 // pred_check
        %p174 = pneg %p45
      $region26: #{_lambda_.14} parent=23 // pred_check_branch
        %176 = sbr.rel (%p174) target = $region28
      $region27: #{_lambda_.14} parent=23 // pred_region
        %s177 = smul.u32 2, %s19
        %p178 = scmp.lt.s32.totalorder %s18, 1
        %s179 = scalar_select %p178, %s18, 1
        %p180 = scmp.lt.s32.totalorder %s177, 1
        %s181 = scalar_select %p180, %s177, 1
        %s182 = smul.addr %s181, 2
        %s183 = smul.addr %s179, 4
        %s184 = sadd.s32 %s182, %s183
        %s185 = smul.addr %s184, 4
        %s186 = scalar_lea.vmem %s0, %s185
        %s187 = smul.u32 2, %s19
      $region28: #{_lambda_.14} parent=23 // pred_fallthru
        _
    $region24: #{_lambda_.14} parent=5 // pred_fallthru
      _
    %p188 = scmp.le.s32.totalorder 1, %s11
    %p189 = scmp.lt.s32.totalorder %s11, 3
    %p190 = pnand %p188, %p189
    %p191 = pneg %p190
    // Predicated region
    $region29: #{_lambda_.14} parent=5 // pred_check
      _
    $region30: #{_lambda_.14} parent=5 // pred_check_branch
      %193 = sbr.rel (%p190) target = $region32
    $region31: #{_lambda_.14} parent=5 // pred_region
      %s194 = ssub.s32 %s11, 1
      %s195 = smul.u32 2, %s21
      %p196 = scmp.lt.s32.totalorder %s20, 1
      %s197 = scalar_select %p196, %s20, 1
      %p198 = scmp.lt.s32.totalorder %s195, 1
      %s199 = scalar_select %p198, %s195, 1
      %s200 = smul.addr %s199, 2
      %s201 = smul.addr %s197, 4
      %s202 = sadd.s32 %s200, %s201
      %s203 = smul.addr %s202, 4
      %s204 = scalar_lea.vmem %s0, %s203
      %p205 = pneg %p51
      %p206 = pneg %p48
      %p207 = pneg %p72
      %p208 = pneg %p69
      %p209 = pneg %p93
      %p210 = pneg %p90
      %p211 = pneg %p121
      %p212 = pneg %p118
      %s213 = smul.u32 2, %s21
      %p214 = scmp.lt.s32.totalorder %s20, 1
      %s215 = scalar_select %p214, %s20, 1
      %p216 = scmp.lt.s32.totalorder %s213, 1
      %s217 = scalar_select %p216, %s213, 1
      %s218 = smul.addr %s215, 2
      %s219 = sadd.s32 %s217, %s218
      %s220 = smul.addr %s219, 4
      %s221 = scalar_lea.vmem %s3, %s220
      %p222 = pneg %p149
      %p223 = pneg %p146
      %p224 = scmp.lt.s32.totalorder %s20, 1
      %s225 = scalar_select %p224, %s20, 1
      %p226 = scmp.lt.s32.totalorder %s21, 0
      %s227 = scalar_select %p226, %s21, 0
      %s228 = sadd.s32 %s227, %s225
      %s229 = smul.addr %s228, 8
      %s230 = scalar_lea.vmem %s4, %s229
      %s231 = smul.u32 2, %s21
      %p232 = scmp.lt.s32.totalorder %s20, 1
      %s233 = scalar_select %p232, %s20, 1
      %p234 = scmp.lt.s32.totalorder %s231, 1
      %s235 = scalar_select %p234, %s231, 1
      %s236 = smul.addr %s235, 2
      %s237 = smul.addr %s233, 4
      %s238 = sadd.s32 %s236, %s237
      %s239 = smul.addr %s238, 4
      %s240 = scalar_lea.vmem %s0, %s239
      %s241 = smul.u32 2, %s21
      %s242 = smul.u32 2, %s21
      %p243 = scmp.lt.s32.totalorder %s20, 1
      %s244 = scalar_select %p243, %s20, 1
      %p245 = scmp.lt.s32.totalorder %s242, 1
      %s246 = scalar_select %p245, %s242, 1
      %s247 = smul.addr %s244, 2
      %s248 = sadd.s32 %s246, %s247
      %s249 = smul.addr %s248, 4
      %s250 = scalar_lea.vmem %s3, %s249
      %s251 = smul.u32 2, %s21
      %p252 = scmp.lt.s32.totalorder %s20, 1
      %s253 = scalar_select %p252, %s20, 1
      %p254 = scmp.lt.s32.totalorder %s21, 0
      %s255 = scalar_select %p254, %s21, 0
      %s256 = sadd.s32 %s255, %s253
      %s257 = smul.addr %s256, 8
      %s258 = scalar_lea.vmem %s4, %s257
      %v260 = vld [vmem:[%s240] sm:$0xff]
      %v261 = vld [vmem:[%s240 + $0x8] sm:$0xff]
      %v262 = vld [vmem:[%s1] sm:$0xf]
      %v263 = vld [vmem:[%s1 + $0x4] sm:$0xf]
      %v264 = vld [vmem:[%s1 + $0x8] sm:$0xf]
      %v265 = vld [vmem:[%s1 + $0xc] sm:$0xf]
      %v266 = vld [vmem:[%s1 + $0x10] sm:$0xf]
      %v267 = vld [vmem:[%s1 + $0x14] sm:$0xf]
      %v268 = vld [vmem:[%s1 + $0x18] sm:$0xf]
      %v269 = vld [vmem:[%s1 + $0x1c] sm:$0xf]
      %v270 = vld [vmem:[%s1 + $0x20] sm:$0xf]
      %v271 = vld [vmem:[%s1 + $0x24] sm:$0xf]
      %v272 = vld [vmem:[%s1 + $0x28] sm:$0xf]
      %v273 = vld [vmem:[%s1 + $0x2c] sm:$0xf]
      %v274 = vld [vmem:[%s1 + $0x30] sm:$0xf]
      %v275 = vld [vmem:[%s1 + $0x34] sm:$0xf]
      %v276 = vld [vmem:[%s1 + $0x38] sm:$0xf]
      %v277 = vld [vmem:[%s1 + $0x3c] sm:$0xf]
      %v278 = vld [vmem:[%s1 + $0x40] sm:$0xf]
      %v279 = vld [vmem:[%s1 + $0x44] sm:$0xf]
      %v280 = vld [vmem:[%s1 + $0x48] sm:$0xf]
      %v281 = vld [vmem:[%s1 + $0x4c] sm:$0xf]
      %v282 = vld [vmem:[%s1 + $0x50] sm:$0xf]
      %v283 = vld [vmem:[%s1 + $0x54] sm:$0xf]
      %v284 = vld [vmem:[%s1 + $0x58] sm:$0xf]
      %v285 = vld [vmem:[%s1 + $0x5c] sm:$0xf]
      %v286 = vld [vmem:[%s1 + $0x60] sm:$0xf]
      %v287 = vld [vmem:[%s1 + $0x64] sm:$0xf]
      %v288 = vld [vmem:[%s1 + $0x68] sm:$0xf]
      %v289 = vld [vmem:[%s1 + $0x6c] sm:$0xf]
      %v290 = vld [vmem:[%s1 + $0x70] sm:$0xf]
      %v291 = vld [vmem:[%s1 + $0x74] sm:$0xf]
      %v292 = vld [vmem:[%s1 + $0x78] sm:$0xf]
      %v293 = vld [vmem:[%s1 + $0x7c] sm:$0xf]
      %v296 = vunpack.c.l.b16 %v260
      %v297 = vunpack.c.h.b16 %v260
      %v298 = vunpack.c.l.b16 %v261
      %v299 = vunpack.c.h.b16 %v261
      %v300 = vpack.c.b16 %v298, %v296
      %v301 = vpack.c.b16 %v299, %v297
      %v336 = vunpack.c.l.b16 %v262
      %v337 = vunpack.c.l.b16 %v263
      %v338 = vunpack.c.l.b16 %v264
      %v339 = vunpack.c.l.b16 %v265
      %v340 = vunpack.c.l.b16 %v266
      %v341 = vunpack.c.l.b16 %v267
      %v342 = vunpack.c.l.b16 %v268
      %v343 = vunpack.c.l.b16 %v269
      %v344 = vunpack.c.l.b16 %v270
      %v345 = vunpack.c.l.b16 %v271
      %v346 = vunpack.c.l.b16 %v272
      %v347 = vunpack.c.l.b16 %v273
      %v348 = vunpack.c.l.b16 %v274
      %v349 = vunpack.c.l.b16 %v275
      %v350 = vunpack.c.l.b16 %v276
      %v351 = vunpack.c.l.b16 %v277
      %v352 = vunpack.c.l.b16 %v278
      %v353 = vunpack.c.l.b16 %v279
      %v354 = vunpack.c.l.b16 %v280
      %v355 = vunpack.c.l.b16 %v281
      %v356 = vunpack.c.l.b16 %v282
      %v357 = vunpack.c.l.b16 %v283
      %v358 = vunpack.c.l.b16 %v284
      %v359 = vunpack.c.l.b16 %v285
      %v360 = vunpack.c.l.b16 %v286
      %v361 = vunpack.c.l.b16 %v287
      %v362 = vunpack.c.l.b16 %v288
      %v363 = vunpack.c.l.b16 %v289
      %v364 = vunpack.c.l.b16 %v290
      %v365 = vunpack.c.l.b16 %v291
      %v366 = vunpack.c.l.b16 %v292
      %v367 = vunpack.c.l.b16 %v293
      %v368 = vpack.c.b16 %v337, %v336
      %v369 = vpack.c.b16 %v339, %v338
      %v370 = vpack.c.b16 %v341, %v340
      %v371 = vpack.c.b16 %v343, %v342
      %v372 = vpack.c.b16 %v345, %v344
      %v373 = vpack.c.b16 %v347, %v346
      %v374 = vpack.c.b16 %v349, %v348
      %v375 = vpack.c.b16 %v351, %v350
      %v376 = vpack.c.b16 %v353, %v352
      %v377 = vpack.c.b16 %v355, %v354
      %v378 = vpack.c.b16 %v357, %v356
      %v379 = vpack.c.b16 %v359, %v358
      %v380 = vpack.c.b16 %v361, %v360
      %v381 = vpack.c.b16 %v363, %v362
      %v382 = vpack.c.b16 %v365, %v364
      %v383 = vpack.c.b16 %v367, %v366
      %400 = vmatprep.subr.bf16.mxu0 0
      %401 = vmatpush1.bf16.msra.mxu0 %v368
      %402 = vmatprep.subr.bf16.mxu0 0
      %403 = vmatpush1.bf16.msra.mxu0 %v369
      %404 = vmatprep.subr.bf16.mxu0 0
      %405 = vmatpush1.bf16.msra.mxu0 %v370
      %406 = vmatprep.subr.bf16.mxu0 0
      %407 = vmatpush1.bf16.msra.mxu0 %v371
      %408 = vmatprep.subr.bf16.mxu0 0
      %409 = vmatpush1.bf16.msra.mxu0 %v372
      %410 = vmatprep.subr.bf16.mxu0 0
      %411 = vmatpush1.bf16.msra.mxu0 %v373
      %412 = vmatprep.subr.bf16.mxu0 0
      %413 = vmatpush1.bf16.msra.mxu0 %v374
      %414 = vmatprep.subr.bf16.mxu0 0
      %415 = vmatpush1.bf16.msra.mxu0 %v375
      %416 = vmatprep.subr.bf16.mxu0 0
      %417 = vmatpush1.bf16.msra.mxu0 %v376
      %418 = vmatprep.subr.bf16.mxu0 0
      %419 = vmatpush1.bf16.msra.mxu0 %v377
      %420 = vmatprep.subr.bf16.mxu0 0
      %421 = vmatpush1.bf16.msra.mxu0 %v378
      %422 = vmatprep.subr.bf16.mxu0 0
      %423 = vmatpush1.bf16.msra.mxu0 %v379
      %424 = vmatprep.subr.bf16.mxu0 0
      %425 = vmatpush1.bf16.msra.mxu0 %v380
      %426 = vmatprep.subr.bf16.mxu0 0
      %427 = vmatpush1.bf16.msra.mxu0 %v381
      %428 = vmatprep.subr.bf16.mxu0 0
      %429 = vmatpush1.bf16.msra.mxu0 %v382
      %430 = vmatprep.subr.bf16.mxu0 0
      %431 = vmatpush1.bf16.msra.mxu0 %v383
      %432 = vmatprep.mubr.bf16.mxu0 %v301
      %433 = vmatmul.mubr.bf16.gmra.mrb[0].mxu0 %v300
      %v434 = vpop.f32.mrb[0].mxu0
      %v435 = vadd.f32 0.0, %v434
      %v436 = vpop.f32.mrb[0].mxu0
      %v437 = vpop.f32.mrb[0].mxu0
      %v438 = vadd.f32 0.0, %v437
      %v439 = vpop.f32.mrb[0].mxu0
      %440 = vdwg.mxu0
      %v441 = vpack.c.bf16 %v438, %v435
      %v443 = vunpack.c.l.b16 %v441
      %v444 = vunpack.c.h.b16 %v441
      %v445 = vpack.c.b16 %v443, %v443
      %v446 = vpack.c.b16 %v444, %v444
      %vm449 = vcmask 257024
      %450 = vst.msk [vmem:[%s250] sm:$0xf] %vm449, %v445
      %451 = vst.msk [vmem:[%s250 + $0x4] sm:$0xf] %vm449, %v446
      %vm452 = vcmask 261120
      %v453 = vsel %vm452, %v435, 0.0
      %v454 = vsel %vm452, %v438, 0.0
      %v455 = vadd.f32 %v453, %v454
      %v456 = vrot.slane %v455, 4
      %v457 = vadd.f32 %v455, %v456
      %v458 = vrot.slane %v457, 2
      %v459 = vadd.f32 %v457, %v458
      %v460 = vrot.slane %v459, 1
      %v461 = vadd.f32 %v459, %v460
      %v462 = vmul.f32 %v435, %v435
      %v463 = vmul.f32 %v438, %v438
      %v464 = vsel %vm452, %v462, 0.0
      %v465 = vsel %vm452, %v463, 0.0
      %v466 = vadd.f32 %v464, %v465
      %v467 = vrot.slane %v466, 4
      %v468 = vadd.f32 %v466, %v467
      %v469 = vrot.slane %v468, 2
      %v470 = vadd.f32 %v468, %v469
      %v471 = vrot.slane %v470, 1
      %v472 = vadd.f32 %v470, %v471
      %v473 = vlaneseq
      %v474 = vshrl.u32 %v473, 7
      %vm475 = vcmp.eq.s32.totalorder %v474, 0
      %vm476 = vcmp.eq.s32.totalorder %v474, 1
      %v477 = vsel %vm476, %v472, 0.0
      %v478 = vsel %vm475, %v461, %v477
      %479 = vst.msk [vmem:[%s258] sm:$0xff] %vm452, %v478
      %s480 = smul.u32 2, %s21
      %p481 = scmp.lt.s32.totalorder %s20, 1
      %s482 = scalar_select %p481, %s20, 1
      %p483 = scmp.lt.s32.totalorder %s480, 1
      %s484 = scalar_select %p483, %s480, 1
      %s485 = smul.addr %s482, 2
      %s486 = sadd.s32 %s484, %s485
      %s487 = smul.addr %s486, 4
      %s488 = scalar_lea.vmem %s3, %s487
      %p489 = scmp.lt.s32.totalorder %s20, 1
      %s490 = scalar_select %p489, %s20, 1
      %p491 = scmp.lt.s32.totalorder %s21, 0
      %s492 = scalar_select %p491, %s21, 0
      %s493 = sadd.s32 %s492, %s490
      %s494 = smul.addr %s493, 8
      %s495 = scalar_lea.vmem %s4, %s494
      // Predicated region
      $region33: #{_lambda_.14} parent=31 // pred_check
        %p496 = pneg %p118
      $region34: #{_lambda_.14} parent=31 // pred_check_branch
        %498 = sbr.rel (%p496) target = $region36
      $region35: #{_lambda_.14} parent=31 // pred_region
        %s499 = smul.u32 2, %s21
      $region36: #{_lambda_.14} parent=31 // pred_fallthru
        _
      // Predicated region
      $region37: #{_lambda_.14} parent=31 // pred_check
        %p500 = pneg %p146
      $region38: #{_lambda_.14} parent=31 // pred_check_branch
        %502 = sbr.rel (%p500) target = $region40
      $region39: #{_lambda_.14} parent=31 // pred_region
        _
      $region40: #{_lambda_.14} parent=31 // pred_fallthru
        _
    $region32: #{_lambda_.14} parent=5 // pred_fallthru
      _
    %p503 = scmp.le.s32.totalorder 2, %s11
    // Predicated region
    $region41: #{_lambda_.14} parent=5 // pred_check
      %p504 = pneg %p503
    $region42: #{_lambda_.14} parent=5 // pred_check_branch
      %506 = sbr.rel (%p504) target = $region44
    $region43: #{_lambda_.14} parent=5 // pred_region
      %s507 = ssub.s32 %s11, 2
      // Predicated region
      $region45: #{_lambda_.14} parent=43 // pred_check
        %p508 = pneg %p124
      $region46: #{_lambda_.14} parent=43 // pred_check_branch
        %510 = sbr.rel (%p508) target = $region48
      $region47: #{_lambda_.14} parent=43 // pred_region
        %s511 = smul.u32 2, %s23
        %p512 = scmp.lt.s32.totalorder %s22, 1
        %s513 = scalar_select %p512, %s22, 1
        %p514 = scmp.lt.s32.totalorder %s511, 1
        %s515 = scalar_select %p514, %s511, 1
        %s516 = smul.addr %s513, 2
        %s517 = sadd.s32 %s515, %s516
        %s518 = smul.addr %s517, 4
        %s519 = scalar_lea.vmem %s3, %s518
      $region48: #{_lambda_.14} parent=43 // pred_fallthru
        _
      // Predicated region
      $region49: #{_lambda_.14} parent=43 // pred_check
        %p520 = pneg %p152
      $region50: #{_lambda_.14} parent=43 // pred_check_branch
        %522 = sbr.rel (%p520) target = $region52
      $region51: #{_lambda_.14} parent=43 // pred_region
        %p523 = scmp.lt.s32.totalorder %s22, 1
        %s524 = scalar_select %p523, %s22, 1
        %p525 = scmp.lt.s32.totalorder %s23, 0
        %s526 = scalar_select %p525, %s23, 0
        %s527 = sadd.s32 %s526, %s524
        %s528 = smul.addr %s527, 8
        %s529 = scalar_lea.vmem %s4, %s528
      $region52: #{_lambda_.14} parent=43 // pred_fallthru
        _
    $region44: #{_lambda_.14} parent=5 // pred_fallthru
      _
  $region6: #{_lambda_.14} parent=0 // loop_footer
    %s15 = sadd.s32 1, %s11
  $region7: #{_lambda_.14} parent=0 // loop_footer_branch
    %10 = sbr.rel target = $region3
  $region8: #{_lambda_.14} parent=0 // loop_exit
    _

// kernel: _lambda_.15
$region0: #{_lambda_.15}
  #allocation0 [shape = 'u32[]', space=smem, size = 0x4, offset = 0x4, fixed_abs, tag = 'smem constant byte address 0x4 - core index']
  #allocation1 [shape = 'u32[144,128]{1,0:T(1,128)}', space=vmem, size = 0x12000, scoped, tag = 'internal scratch']
  %s0 = inlined_call_operand.vmem [shape: bf16[2,16,512], index: 0, kind: input, shape index: {}]
  %s1 = inlined_call_operand.vmem [shape: bf16[512,64], index: 1, kind: input, shape index: {}]
  %s2 = inlined_call_operand.vmem [shape: f32[1,64], index: 2, kind: input, shape index: {}]
  %s3 = inlined_call_operand.vmem [shape: bf16[2,16,64], index: 3, kind: output, shape index: {0}]
  %s4 = inlined_call_operand.vmem [shape: f32[2,8,64], index: 4, kind: output, shape index: {1}]
  %5 = xla_tuple %s3, %s4
  %s6 = sld [smem:[#allocation0]]
  $region53: #{_lambda_.15} parent=0
    _
  %s8 = ssub.s32 1, %s6
  %s9 = scalar_select 0, %s8, %s6
  loop: start=0, step=1, limit=4
  $region2: #{_lambda_.15} parent=0 // loop_pre_header
    _
  $region3: #{_lambda_.15} parent=0 // loop_header
    %s11 = sphi 0, %s15
    %p12 = scmp.ge.s32.totalorder %s11, 4
    %s18 = sphi 0, %s30
    %s19 = sphi 0, %s26
    %s20 = sphi 0, %s18
    %s21 = sphi 0, %s19
    %s22 = sphi 0, %s20
    %s23 = sphi 0, %s21
    %s35 = sphi 0, %s37
    %s38 = sphi 0, %s35
    %s39 = sphi 0, %s38
    %s55 = sphi 0, %s39
    %s59 = sphi 0, %s59
    %s61 = sphi 0, %s59
    %s62 = sphi 0, %s61
    %s76 = sphi 0, %s62
    %s80 = sphi 0, %s80
    %s82 = sphi 0, %s80
    %s83 = sphi 0, %s82
    %s97 = sphi 0, %s83
    %s105 = sphi 0, %s107
    %s108 = sphi 0, %s105
    %s109 = sphi 0, %s108
    %s125 = sphi 0, %s109
    %s133 = sphi 0, %s135
    %s136 = sphi 0, %s133
    %s137 = sphi 0, %s136
    %s153 = sphi 0, %s137
  $region4: #{_lambda_.15} parent=0 // loop_header_branch
    %14 = sbr.rel (%p12) target = $region8
  $region5: #{_lambda_.15} parent=0 // loop_body
    %s16 = ssub.s32 %s11, 1
    %s17 = ssub.s32 %s11, 2
    %s24 = sadd.s32 1, %s19
    %p25 = scmp.ge.s32.totalorder %s24, 1
    %s26 = scalar_select %p25, 0, %s24
    %s27 = sadd.s32 1, %s18
    %s28 = scalar_select %p25, %s27, %s18
    %p29 = scmp.ge.s32.totalorder %s28, 2
    %s30 = scalar_select %p29, 0, %s28
    %s31 = ssub.s32 %s18, %s30
    %s32 = ssub.s32 %s19, %s26
    %s33 = sor.u32 %s31, %s32
    %p34 = scmp.eq.s32.totalorder %s33, 0
    %s36 = sadd.s32 %s35, 1
    %s37 = scalar_select %p34, %s35, %s36
    %p40 = pneg %p34
    %p41 = scmp.eq.s32.totalorder %s11, 1
    %p42 = por %p40, %p41
    %p43 = scmp.ne.s32.totalorder %s35, %s38
    %p44 = scmp.eq.s32.totalorder %s11, 0
    %p45 = por %p43, %p44
    %p46 = scmp.ne.s32.totalorder %s35, %s38
    %p47 = scmp.eq.s32.totalorder %s16, 1
    %p48 = por %p46, %p47
    %p49 = scmp.ne.s32.totalorder %s38, %s39
    %p50 = scmp.eq.s32.totalorder %s16, 0
    %p51 = por %p49, %p50
    %p52 = scmp.ne.s32.totalorder %s38, %s39
    %p53 = scmp.eq.s32.totalorder %s17, 1
    %p54 = por %p52, %p53
    %p56 = scmp.ne.s32.totalorder %s39, %s55
    %p57 = scmp.eq.s32.totalorder %s17, 0
    %p58 = por %p56, %p57
    %s60 = sadd.s32 %s59, 1
    %p63 = scmp.eq.s32.totalorder %s11, 1
    %p64 = scmp.ne.s32.totalorder %s59, %s61
    %p65 = scmp.eq.s32.totalorder %s11, 0
    %p66 = por %p64, %p65
    %p67 = scmp.ne.s32.totalorder %s59, %s61
    %p68 = scmp.eq.s32.totalorder %s16, 1
    %p69 = por %p67, %p68
    %p70 = scmp.ne.s32.totalorder %s61, %s62
    %p71 = scmp.eq.s32.totalorder %s16, 0
    %p72 = por %p70, %p71
    %p73 = scmp.ne.s32.totalorder %s61, %s62
    %p74 = scmp.eq.s32.totalorder %s17, 1
    %p75 = por %p73, %p74
    %p77 = scmp.ne.s32.totalorder %s62, %s76
    %p78 = scmp.eq.s32.totalorder %s17, 0
    %p79 = por %p77, %p78
    %s81 = sadd.s32 %s80, 1
    %p84 = scmp.eq.s32.totalorder %s11, 1
    %p85 = scmp.ne.s32.totalorder %s80, %s82
    %p86 = scmp.eq.s32.totalorder %s11, 0
    %p87 = por %p85, %p86
    %p88 = scmp.ne.s32.totalorder %s80, %s82
    %p89 = scmp.eq.s32.totalorder %s16, 1
    %p90 = por %p88, %p89
    %p91 = scmp.ne.s32.totalorder %s82, %s83
    %p92 = scmp.eq.s32.totalorder %s16, 0
    %p93 = por %p91, %p92
    %p94 = scmp.ne.s32.totalorder %s82, %s83
    %p95 = scmp.eq.s32.totalorder %s17, 1
    %p96 = por %p94, %p95
    %p98 = scmp.ne.s32.totalorder %s83, %s97
    %p99 = scmp.eq.s32.totalorder %s17, 0
    %p100 = por %p98, %p99
    %s101 = ssub.s32 %s18, %s30
    %s102 = ssub.s32 %s19, %s26
    %s103 = sor.u32 %s101, %s102
    %p104 = scmp.eq.s32.totalorder %s103, 0
    %s106 = sadd.s32 %s105, 1
    %s107 = scalar_select %p104, %s105, %s106
    %p110 = pneg %p104
    %p111 = scmp.eq.s32.totalorder %s11, 1
    %p112 = por %p110, %p111
    %p113 = scmp.ne.s32.totalorder %s105, %s108
    %p114 = scmp.eq.s32.totalorder %s11, 0
    %p115 = por %p113, %p114
    %p116 = scmp.ne.s32.totalorder %s105, %s108
    %p117 = scmp.eq.s32.totalorder %s16, 1
    %p118 = por %p116, %p117
    %p119 = scmp.ne.s32.totalorder %s108, %s109
    %p120 = scmp.eq.s32.totalorder %s16, 0
    %p121 = por %p119, %p120
    %p122 = scmp.ne.s32.totalorder %s108, %s109
    %p123 = scmp.eq.s32.totalorder %s17, 1
    %p124 = por %p122, %p123
    %p126 = scmp.ne.s32.totalorder %s109, %s125
    %p127 = scmp.eq.s32.totalorder %s17, 0
    %p128 = por %p126, %p127
    %s129 = ssub.s32 %s18, %s30
    %s130 = ssub.s32 %s19, %s26
    %s131 = sor.u32 %s129, %s130
    %p132 = scmp.eq.s32.totalorder %s131, 0
    %s134 = sadd.s32 %s133, 1
    %s135 = scalar_select %p132, %s133, %s134
    %p138 = pneg %p132
    %p139 = scmp.eq.s32.totalorder %s11, 1
    %p140 = por %p138, %p139
    %p141 = scmp.ne.s32.totalorder %s133, %s136
    %p142 = scmp.eq.s32.totalorder %s11, 0
    %p143 = por %p141, %p142
    %p144 = scmp.ne.s32.totalorder %s133, %s136
    %p145 = scmp.eq.s32.totalorder %s16, 1
    %p146 = por %p144, %p145
    %p147 = scmp.ne.s32.totalorder %s136, %s137
    %p148 = scmp.eq.s32.totalorder %s16, 0
    %p149 = por %p147, %p148
    %p150 = scmp.ne.s32.totalorder %s136, %s137
    %p151 = scmp.eq.s32.totalorder %s17, 1
    %p152 = por %p150, %p151
    %p154 = scmp.ne.s32.totalorder %s137, %s153
    %p155 = scmp.eq.s32.totalorder %s17, 0
    %p156 = por %p154, %p155
    %p157 = scmp.le.s32.totalorder 1, %s11
    %p158 = scmp.lt.s32.totalorder %s11, 3
    %p159 = pnand %p157, %p158
    %p160 = pneg %p159
    // Predicated region
    $region9: #{_lambda_.15} parent=5 // pred_check
      _
    $region10: #{_lambda_.15} parent=5 // pred_check_branch
      %162 = sbr.rel (%p159) target = $region12
    $region11: #{_lambda_.15} parent=5 // pred_region
      %s163 = ssub.s32 %s11, 1
      // Predicated region
      $region13: #{_lambda_.15} parent=11 // pred_check
        %p164 = pneg %p72
      $region14: #{_lambda_.15} parent=11 // pred_check_branch
        %166 = sbr.rel (%p164) target = $region16
      $region15: #{_lambda_.15} parent=11 // pred_region
        _
      $region16: #{_lambda_.15} parent=11 // pred_fallthru
        _
      // Predicated region
      $region17: #{_lambda_.15} parent=11 // pred_check
        %p167 = pneg %p93
      $region18: #{_lambda_.15} parent=11 // pred_check_branch
        %169 = sbr.rel (%p167) target = $region20
      $region19: #{_lambda_.15} parent=11 // pred_region
        _
      $region20: #{_lambda_.15} parent=11 // pred_fallthru
        _
    $region12: #{_lambda_.15} parent=5 // pred_fallthru
      _
    %p170 = scmp.lt.s32.totalorder %s11, 2
    // Predicated region
    $region21: #{_lambda_.15} parent=5 // pred_check
      %p171 = pneg %p170
    $region22: #{_lambda_.15} parent=5 // pred_check_branch
      %173 = sbr.rel (%p171) target = $region24
    $region23: #{_lambda_.15} parent=5 // pred_region
      // Predicated region
      $region25: #{_lambda_.15} parent=23 // pred_check
        %p174 = pneg %p45
      $region26: #{_lambda_.15} parent=23 // pred_check_branch
        %176 = sbr.rel (%p174) target = $region28
      $region27: #{_lambda_.15} parent=23 // pred_region
        %s177 = smul.u32 2, %s19
        %p178 = scmp.lt.s32.totalorder %s18, 1
        %s179 = scalar_select %p178, %s18, 1
        %p180 = scmp.lt.s32.totalorder %s177, 1
        %s181 = scalar_select %p180, %s177, 1
        %s182 = smul.addr %s181, 4
        %s183 = smul.addr %s179, 8
        %s184 = sadd.s32 %s182, %s183
        %s185 = smul.addr %s184, 4
        %s186 = scalar_lea.vmem %s0, %s185
        %s187 = smul.u32 2, %s19
      $region28: #{_lambda_.15} parent=23 // pred_fallthru
        _
    $region24: #{_lambda_.15} parent=5 // pred_fallthru
      _
    %p188 = scmp.le.s32.totalorder 1, %s11
    %p189 = scmp.lt.s32.totalorder %s11, 3
    %p190 = pnand %p188, %p189
    %p191 = pneg %p190
    // Predicated region
    $region29: #{_lambda_.15} parent=5 // pred_check
      _
    $region30: #{_lambda_.15} parent=5 // pred_check_branch
      %193 = sbr.rel (%p190) target = $region32
    $region31: #{_lambda_.15} parent=5 // pred_region
      %s194 = ssub.s32 %s11, 1
      %s195 = smul.u32 2, %s21
      %p196 = scmp.lt.s32.totalorder %s20, 1
      %s197 = scalar_select %p196, %s20, 1
      %p198 = scmp.lt.s32.totalorder %s195, 1
      %s199 = scalar_select %p198, %s195, 1
      %s200 = smul.addr %s199, 4
      %s201 = smul.addr %s197, 8
      %s202 = sadd.s32 %s200, %s201
      %s203 = smul.addr %s202, 4
      %s204 = scalar_lea.vmem %s0, %s203
      %p205 = pneg %p51
      %p206 = pneg %p48
      %p207 = pneg %p72
      %p208 = pneg %p69
      %p209 = pneg %p93
      %p210 = pneg %p90
      %p211 = pneg %p121
      %p212 = pneg %p118
      %s213 = smul.u32 2, %s21
      %p214 = scmp.lt.s32.totalorder %s20, 1
      %s215 = scalar_select %p214, %s20, 1
      %p216 = scmp.lt.s32.totalorder %s213, 1
      %s217 = scalar_select %p216, %s213, 1
      %s218 = smul.addr %s215, 2
      %s219 = sadd.s32 %s217, %s218
      %s220 = smul.addr %s219, 4
      %s221 = scalar_lea.vmem %s3, %s220
      %p222 = pneg %p149
      %p223 = pneg %p146
      %p224 = scmp.lt.s32.totalorder %s20, 1
      %s225 = scalar_select %p224, %s20, 1
      %p226 = scmp.lt.s32.totalorder %s21, 0
      %s227 = scalar_select %p226, %s21, 0
      %s228 = sadd.s32 %s227, %s225
      %s229 = smul.addr %s228, 8
      %s230 = scalar_lea.vmem %s4, %s229
      %s231 = smul.u32 2, %s21
      %p232 = scmp.lt.s32.totalorder %s20, 1
      %s233 = scalar_select %p232, %s20, 1
      %p234 = scmp.lt.s32.totalorder %s231, 1
      %s235 = scalar_select %p234, %s231, 1
      %s236 = smul.addr %s235, 4
      %s237 = smul.addr %s233, 8
      %s238 = sadd.s32 %s236, %s237
      %s239 = smul.addr %s238, 4
      %s240 = scalar_lea.vmem %s0, %s239
      %s241 = smul.u32 2, %s21
      %s242 = smul.u32 2, %s21
      %p243 = scmp.lt.s32.totalorder %s20, 1
      %s244 = scalar_select %p243, %s20, 1
      %p245 = scmp.lt.s32.totalorder %s242, 1
      %s246 = scalar_select %p245, %s242, 1
      %s247 = smul.addr %s244, 2
      %s248 = sadd.s32 %s246, %s247
      %s249 = smul.addr %s248, 4
      %s250 = scalar_lea.vmem %s3, %s249
      %s251 = smul.u32 2, %s21
      %p252 = scmp.lt.s32.totalorder %s20, 1
      %s253 = scalar_select %p252, %s20, 1
      %p254 = scmp.lt.s32.totalorder %s21, 0
      %s255 = scalar_select %p254, %s21, 0
      %s256 = sadd.s32 %s255, %s253
      %s257 = smul.addr %s256, 8
      %s258 = scalar_lea.vmem %s4, %s257
      %v260 = vld [vmem:[%s240] sm:$0xff]
      %v261 = vld [vmem:[%s240 + $0x8] sm:$0xff]
      %v262 = vld [vmem:[%s240 + $0x10] sm:$0xff]
      %v263 = vld [vmem:[%s240 + $0x18] sm:$0xff]
      %v264 = vld [vmem:[%s1] sm:$0xf]
      %v265 = vld [vmem:[%s1 + $0x4] sm:$0xf]
      %v266 = vld [vmem:[%s1 + $0x8] sm:$0xf]
      %v267 = vld [vmem:[%s1 + $0xc] sm:$0xf]
      %v268 = vld [vmem:[%s1 + $0x10] sm:$0xf]
      %v269 = vld [vmem:[%s1 + $0x14] sm:$0xf]
      %v270 = vld [vmem:[%s1 + $0x18] sm:$0xf]
      %v271 = vld [vmem:[%s1 + $0x1c] sm:$0xf]
      %v272 = vld [vmem:[%s1 + $0x20] sm:$0xf]
      %v273 = vld [vmem:[%s1 + $0x24] sm:$0xf]
      %v274 = vld [vmem:[%s1 + $0x28] sm:$0xf]
      %v275 = vld [vmem:[%s1 + $0x2c] sm:$0xf]
      %v276 = vld [vmem:[%s1 + $0x30] sm:$0xf]
      %v277 = vld [vmem:[%s1 + $0x34] sm:$0xf]
      %v278 = vld [vmem:[%s1 + $0x38] sm:$0xf]
      %v279 = vld [vmem:[%s1 + $0x3c] sm:$0xf]
      %v280 = vld [vmem:[%s1 + $0x40] sm:$0xf]
      %v281 = vld [vmem:[%s1 + $0x44] sm:$0xf]
      %v282 = vld [vmem:[%s1 + $0x48] sm:$0xf]
      %v283 = vld [vmem:[%s1 + $0x4c] sm:$0xf]
      %v284 = vld [vmem:[%s1 + $0x50] sm:$0xf]
      %v285 = vld [vmem:[%s1 + $0x54] sm:$0xf]
      %v286 = vld [vmem:[%s1 + $0x58] sm:$0xf]
      %v287 = vld [vmem:[%s1 + $0x5c] sm:$0xf]
      %v288 = vld [vmem:[%s1 + $0x60] sm:$0xf]
      %v289 = vld [vmem:[%s1 + $0x64] sm:$0xf]
      %v290 = vld [vmem:[%s1 + $0x68] sm:$0xf]
      %v291 = vld [vmem:[%s1 + $0x6c] sm:$0xf]
      %v292 = vld [vmem:[%s1 + $0x70] sm:$0xf]
      %v293 = vld [vmem:[%s1 + $0x74] sm:$0xf]
      %v294 = vld [vmem:[%s1 + $0x78] sm:$0xf]
      %v295 = vld [vmem:[%s1 + $0x7c] sm:$0xf]
      %v296 = vld [vmem:[%s1 + $0x80] sm:$0xf]
      %v297 = vld [vmem:[%s1 + $0x84] sm:$0xf]
      %v298 = vld [vmem:[%s1 + $0x88] sm:$0xf]
      %v299 = vld [vmem:[%s1 + $0x8c] sm:$0xf]
      %v300 = vld [vmem:[%s1 + $0x90] sm:$0xf]
      %v301 = vld [vmem:[%s1 + $0x94] sm:$0xf]
      %v302 = vld [vmem:[%s1 + $0x98] sm:$0xf]
      %v303 = vld [vmem:[%s1 + $0x9c] sm:$0xf]
      %v304 = vld [vmem:[%s1 + $0xa0] sm:$0xf]
      %v305 = vld [vmem:[%s1 + $0xa4] sm:$0xf]
      %v306 = vld [vmem:[%s1 + $0xa8] sm:$0xf]
      %v307 = vld [vmem:[%s1 + $0xac] sm:$0xf]
      %v308 = vld [vmem:[%s1 + $0xb0] sm:$0xf]
      %v309 = vld [vmem:[%s1 + $0xb4] sm:$0xf]
      %v310 = vld [vmem:[%s1 + $0xb8] sm:$0xf]
      %v311 = vld [vmem:[%s1 + $0xbc] sm:$0xf]
      %v312 = vld [vmem:[%s1 + $0xc0] sm:$0xf]
      %v313 = vld [vmem:[%s1 + $0xc4] sm:$0xf]
      %v314 = vld [vmem:[%s1 + $0xc8] sm:$0xf]
      %v315 = vld [vmem:[%s1 + $0xcc] sm:$0xf]
      %v316 = vld [vmem:[%s1 + $0xd0] sm:$0xf]
      %v317 = vld [vmem:[%s1 + $0xd4] sm:$0xf]
      %v318 = vld [vmem:[%s1 + $0xd8] sm:$0xf]
      %v319 = vld [vmem:[%s1 + $0xdc] sm:$0xf]
      %v320 = vld [vmem:[%s1 + $0xe0] sm:$0xf]
      %v321 = vld [vmem:[%s1 + $0xe4] sm:$0xf]
      %v322 = vld [vmem:[%s1 + $0xe8] sm:$0xf]
      %v323 = vld [vmem:[%s1 + $0xec] sm:$0xf]
      %v324 = vld [vmem:[%s1 + $0xf0] sm:$0xf]
      %v325 = vld [vmem:[%s1 + $0xf4] sm:$0xf]
      %v326 = vld [vmem:[%s1 + $0xf8] sm:$0xf]
      %v327 = vld [vmem:[%s1 + $0xfc] sm:$0xf]
      %v332 = vunpack.c.l.b16 %v260
      %v333 = vunpack.c.h.b16 %v260
      %v334 = vunpack.c.l.b16 %v261
      %v335 = vunpack.c.h.b16 %v261
      %v336 = vunpack.c.l.b16 %v262
      %v337 = vunpack.c.h.b16 %v262
      %v338 = vunpack.c.l.b16 %v263
      %v339 = vunpack.c.h.b16 %v263
      %v340 = vpack.c.b16 %v336, %v332
      %v341 = vpack.c.b16 %v337, %v333
      %v342 = vpack.c.b16 %v338, %v334
      %v343 = vpack.c.b16 %v339, %v335
      %v412 = vunpack.c.l.b16 %v264
      %v413 = vunpack.c.l.b16 %v265
      %v414 = vunpack.c.l.b16 %v266
      %v415 = vunpack.c.l.b16 %v267
      %v416 = vunpack.c.l.b16 %v268
      %v417 = vunpack.c.l.b16 %v269
      %v418 = vunpack.c.l.b16 %v270
      %v419 = vunpack.c.l.b16 %v271
      %v420 = vunpack.c.l.b16 %v272
      %v421 = vunpack.c.l.b16 %v273
      %v422 = vunpack.c.l.b16 %v274
      %v423 = vunpack.c.l.b16 %v275
      %v424 = vunpack.c.l.b16 %v276
      %v425 = vunpack.c.l.b16 %v277
      %v426 = vunpack.c.l.b16 %v278
      %v427 = vunpack.c.l.b16 %v279
      %v428 = vunpack.c.l.b16 %v280
      %v429 = vunpack.c.l.b16 %v281
      %v430 = vunpack.c.l.b16 %v282
      %v431 = vunpack.c.l.b16 %v283
      %v432 = vunpack.c.l.b16 %v284
      %v433 = vunpack.c.l.b16 %v285
      %v434 = vunpack.c.l.b16 %v286
      %v435 = vunpack.c.l.b16 %v287
      %v436 = vunpack.c.l.b16 %v288
      %v437 = vunpack.c.l.b16 %v289
      %v438 = vunpack.c.l.b16 %v290
      %v439 = vunpack.c.l.b16 %v291
      %v440 = vunpack.c.l.b16 %v292
      %v441 = vunpack.c.l.b16 %v293
      %v442 = vunpack.c.l.b16 %v294
      %v443 = vunpack.c.l.b16 %v295
      %v444 = vunpack.c.l.b16 %v296
      %v445 = vunpack.c.l.b16 %v297
      %v446 = vunpack.c.l.b16 %v298
      %v447 = vunpack.c.l.b16 %v299
      %v448 = vunpack.c.l.b16 %v300
      %v449 = vunpack.c.l.b16 %v301
      %v450 = vunpack.c.l.b16 %v302
      %v451 = vunpack.c.l.b16 %v303
      %v452 = vunpack.c.l.b16 %v304
      %v453 = vunpack.c.l.b16 %v305
      %v454 = vunpack.c.l.b16 %v306
      %v455 = vunpack.c.l.b16 %v307
      %v456 = vunpack.c.l.b16 %v308
      %v457 = vunpack.c.l.b16 %v309
      %v458 = vunpack.c.l.b16 %v310
      %v459 = vunpack.c.l.b16 %v311
      %v460 = vunpack.c.l.b16 %v312
      %v461 = vunpack.c.l.b16 %v313
      %v462 = vunpack.c.l.b16 %v314
      %v463 = vunpack.c.l.b16 %v315
      %v464 = vunpack.c.l.b16 %v316
      %v465 = vunpack.c.l.b16 %v317
      %v466 = vunpack.c.l.b16 %v318
      %v467 = vunpack.c.l.b16 %v319
      %v468 = vunpack.c.l.b16 %v320
      %v469 = vunpack.c.l.b16 %v321
      %v470 = vunpack.c.l.b16 %v322
      %v471 = vunpack.c.l.b16 %v323
      %v472 = vunpack.c.l.b16 %v324
      %v473 = vunpack.c.l.b16 %v325
      %v474 = vunpack.c.l.b16 %v326
      %v475 = vunpack.c.l.b16 %v327
      %v476 = vpack.c.b16 %v413, %v412
      %v477 = vpack.c.b16 %v415, %v414
      %v478 = vpack.c.b16 %v417, %v416
      %v479 = vpack.c.b16 %v419, %v418
      %v480 = vpack.c.b16 %v421, %v420
      %v481 = vpack.c.b16 %v423, %v422
      %v482 = vpack.c.b16 %v425, %v424
      %v483 = vpack.c.b16 %v427, %v426
      %v484 = vpack.c.b16 %v429, %v428
      %v485 = vpack.c.b16 %v431, %v430
      %v486 = vpack.c.b16 %v433, %v432
      %v487 = vpack.c.b16 %v435, %v434
      %v488 = vpack.c.b16 %v437, %v436
      %v489 = vpack.c.b16 %v439, %v438
      %v490 = vpack.c.b16 %v441, %v440
      %v491 = vpack.c.b16 %v443, %v442
      %v492 = vpack.c.b16 %v445, %v444
      %v493 = vpack.c.b16 %v447, %v446
      %v494 = vpack.c.b16 %v449, %v448
      %v495 = vpack.c.b16 %v451, %v450
      %v496 = vpack.c.b16 %v453, %v452
      %v497 = vpack.c.b16 %v455, %v454
      %v498 = vpack.c.b16 %v457, %v456
      %v499 = vpack.c.b16 %v459, %v458
      %v500 = vpack.c.b16 %v461, %v460
      %v501 = vpack.c.b16 %v463, %v462
      %v502 = vpack.c.b16 %v465, %v464
      %v503 = vpack.c.b16 %v467, %v466
      %v504 = vpack.c.b16 %v469, %v468
      %v505 = vpack.c.b16 %v471, %v470
      %v506 = vpack.c.b16 %v473, %v472
      %v507 = vpack.c.b16 %v475, %v474
      %540 = vmatprep.subr.bf16.mxu0 0
      %541 = vmatpush1.bf16.msra.mxu0 %v476
      %542 = vmatprep.subr.bf16.mxu0 0
      %543 = vmatpush1.bf16.msra.mxu0 %v477
      %544 = vmatprep.subr.bf16.mxu0 0
      %545 = vmatpush1.bf16.msra.mxu0 %v478
      %546 = vmatprep.subr.bf16.mxu0 0
      %547 = vmatpush1.bf16.msra.mxu0 %v479
      %548 = vmatprep.subr.bf16.mxu0 0
      %549 = vmatpush1.bf16.msra.mxu0 %v480
      %550 = vmatprep.subr.bf16.mxu0 0
      %551 = vmatpush1.bf16.msra.mxu0 %v481
      %552 = vmatprep.subr.bf16.mxu0 0
      %553 = vmatpush1.bf16.msra.mxu0 %v482
      %554 = vmatprep.subr.bf16.mxu0 0
      %555 = vmatpush1.bf16.msra.mxu0 %v483
      %556 = vmatprep.subr.bf16.mxu0 0
      %557 = vmatpush1.bf16.msra.mxu0 %v484
      %558 = vmatprep.subr.bf16.mxu0 0
      %559 = vmatpush1.bf16.msra.mxu0 %v485
      %560 = vmatprep.subr.bf16.mxu0 0
      %561 = vmatpush1.bf16.msra.mxu0 %v486
      %562 = vmatprep.subr.bf16.mxu0 0
      %563 = vmatpush1.bf16.msra.mxu0 %v487
      %564 = vmatprep.subr.bf16.mxu0 0
      %565 = vmatpush1.bf16.msra.mxu0 %v488
      %566 = vmatprep.subr.bf16.mxu0 0
      %567 = vmatpush1.bf16.msra.mxu0 %v489
      %568 = vmatprep.subr.bf16.mxu0 0
      %569 = vmatpush1.bf16.msra.mxu0 %v490
      %570 = vmatprep.subr.bf16.mxu0 0
      %571 = vmatpush1.bf16.msra.mxu0 %v491
      %572 = vmatprep.mubr.bf16.mxu0 %v341
      %573 = vmatmul.mubr.bf16.gmra.mrb[0].mxu0 %v340
      %v574 = vpop.f32.mrb[0].mxu0
      %v575 = vadd.f32 0.0, %v574
      %v576 = vpop.f32.mrb[0].mxu0
      %v577 = vpop.f32.mrb[0].mxu0
      %v578 = vadd.f32 0.0, %v577
      %v579 = vpop.f32.mrb[0].mxu0
      %580 = vdwg.mxu0
      %581 = vmatprep.subr.bf16.mxu0 0
      %582 = vmatpush1.bf16.msra.mxu0 %v492
      %583 = vmatprep.subr.bf16.mxu0 0
      %584 = vmatpush1.bf16.msra.mxu0 %v493
      %585 = vmatprep.subr.bf16.mxu0 0
      %586 = vmatpush1.bf16.msra.mxu0 %v494
      %587 = vmatprep.subr.bf16.mxu0 0
      %588 = vmatpush1.bf16.msra.mxu0 %v495
      %589 = vmatprep.subr.bf16.mxu0 0
      %590 = vmatpush1.bf16.msra.mxu0 %v496
      %591 = vmatprep.subr.bf16.mxu0 0
      %592 = vmatpush1.bf16.msra.mxu0 %v497
      %593 = vmatprep.subr.bf16.mxu0 0
      %594 = vmatpush1.bf16.msra.mxu0 %v498
      %595 = vmatprep.subr.bf16.mxu0 0
      %596 = vmatpush1.bf16.msra.mxu0 %v499
      %597 = vmatprep.subr.bf16.mxu0 0
      %598 = vmatpush1.bf16.msra.mxu0 %v500
      %599 = vmatprep.subr.bf16.mxu0 0
      %600 = vmatpush1.bf16.msra.mxu0 %v501
      %601 = vmatprep.subr.bf16.mxu0 0
      %602 = vmatpush1.bf16.msra.mxu0 %v502
      %603 = vmatprep.subr.bf16.mxu0 0
      %604 = vmatpush1.bf16.msra.mxu0 %v503
      %605 = vmatprep.subr.bf16.mxu0 0
      %606 = vmatpush1.bf16.msra.mxu0 %v504
      %607 = vmatprep.subr.bf16.mxu0 0
      %608 = vmatpush1.bf16.msra.mxu0 %v505
      %609 = vmatprep.subr.bf16.mxu0 0
      %610 = vmatpush1.bf16.msra.mxu0 %v506
      %611 = vmatprep.subr.bf16.mxu0 0
      %612 = vmatpush1.bf16.msra.mxu0 %v507
      %613 = vmatprep.mubr.bf16.mxu0 %v343
      %614 = vmatmul.mubr.bf16.gmra.mrb[0].mxu0 %v342
      %v615 = vpop.f32.mrb[0].mxu0
      %v616 = vadd.f32 %v575, %v615
      %v617 = vpop.f32.mrb[0].mxu0
      %v618 = vpop.f32.mrb[0].mxu0
      %v619 = vadd.f32 %v578, %v618
      %v620 = vpop.f32.mrb[0].mxu0
      %621 = vdwg.mxu0
      %v622 = vpack.c.bf16 %v619, %v616
      %v624 = vunpack.c.l.b16 %v622
      %v625 = vunpack.c.h.b16 %v622
      %v626 = vpack.c.b16 %v624, %v624
      %v627 = vpack.c.b16 %v625, %v625
      %vm630 = vcmask 519168
      %631 = vst.msk [vmem:[%s250] sm:$0xf] %vm630, %v626
      %632 = vst.msk [vmem:[%s250 + $0x4] sm:$0xf] %vm630, %v627
      %vm633 = vcmask 523264
      %v634 = vsel %vm633, %v616, 0.0
      %v635 = vsel %vm633, %v619, 0.0
      %v636 = vadd.f32 %v634, %v635
      %v637 = vrot.slane %v636, 4
      %v638 = vadd.f32 %v636, %v637
      %v639 = vrot.slane %v638, 2
      %v640 = vadd.f32 %v638, %v639
      %v641 = vrot.slane %v640, 1
      %v642 = vadd.f32 %v640, %v641
      %v643 = vmul.f32 %v616, %v616
      %v644 = vmul.f32 %v619, %v619
      %v645 = vsel %vm633, %v643, 0.0
      %v646 = vsel %vm633, %v644, 0.0
      %v647 = vadd.f32 %v645, %v646
      %v648 = vrot.slane %v647, 4
      %v649 = vadd.f32 %v647, %v648
      %v650 = vrot.slane %v649, 2
      %v651 = vadd.f32 %v649, %v650
      %v652 = vrot.slane %v651, 1
      %v653 = vadd.f32 %v651, %v652
      %v654 = vlaneseq
      %v655 = vshrl.u32 %v654, 7
      %vm656 = vcmp.eq.s32.totalorder %v655, 0
      %vm657 = vcmp.eq.s32.totalorder %v655, 1
      %v658 = vsel %vm657, %v653, 0.0
      %v659 = vsel %vm656, %v642, %v658
      %660 = vst.msk [vmem:[%s258] sm:$0xff] %vm633, %v659
      %s661 = smul.u32 2, %s21
      %p662 = scmp.lt.s32.totalorder %s20, 1
      %s663 = scalar_select %p662, %s20, 1
      %p664 = scmp.lt.s32.totalorder %s661, 1
      %s665 = scalar_select %p664, %s661, 1
      %s666 = smul.addr %s663, 2
      %s667 = sadd.s32 %s665, %s666
      %s668 = smul.addr %s667, 4
      %s669 = scalar_lea.vmem %s3, %s668
      %p670 = scmp.lt.s32.totalorder %s20, 1
      %s671 = scalar_select %p670, %s20, 1
      %p672 = scmp.lt.s32.totalorder %s21, 0
      %s673 = scalar_select %p672, %s21, 0
      %s674 = sadd.s32 %s673, %s671
      %s675 = smul.addr %s674, 8
      %s676 = scalar_lea.vmem %s4, %s675
      // Predicated region
      $region33: #{_lambda_.15} parent=31 // pred_check
        %p677 = pneg %p118
      $region34: #{_lambda_.15} parent=31 // pred_check_branch
        %679 = sbr.rel (%p677) target = $region36
      $region35: #{_lambda_.15} parent=31 // pred_region
        %s680 = smul.u32 2, %s21
      $region36: #{_lambda_.15} parent=31 // pred_fallthru
        _
      // Predicated region
      $region37: #{_lambda_.15} parent=31 // pred_check
        %p681 = pneg %p146
      $region38: #{_lambda_.15} parent=31 // pred_check_branch
        %683 = sbr.rel (%p681) target = $region40
      $region39: #{_lambda_.15} parent=31 // pred_region
        _
      $region40: #{_lambda_.15} parent=31 // pred_fallthru
        _
    $region32: #{_lambda_.15} parent=5 // pred_fallthru
      _
    %p684 = scmp.le.s32.totalorder 2, %s11
    // Predicated region
    $region41: #{_lambda_.15} parent=5 // pred_check
      %p685 = pneg %p684
    $region42: #{_lambda_.15} parent=5 // pred_check_branch
      %687 = sbr.rel (%p685) target = $region44
    $region43: #{_lambda_.15} parent=5 // pred_region
      %s688 = ssub.s32 %s11, 2
      // Predicated region
      $region45: #{_lambda_.15} parent=43 // pred_check
        %p689 = pneg %p124
      $region46: #{_lambda_.15} parent=43 // pred_check_branch
        %691 = sbr.rel (%p689) target = $region48
      $region47: #{_lambda_.15} parent=43 // pred_region
        %s692 = smul.u32 2, %s23
        %p693 = scmp.lt.s32.totalorder %s22, 1
        %s694 = scalar_select %p693, %s22, 1
        %p695 = scmp.lt.s32.totalorder %s692, 1
        %s696 = scalar_select %p695, %s692, 1
        %s697 = smul.addr %s694, 2
        %s698 = sadd.s32 %s696, %s697
        %s699 = smul.addr %s698, 4
        %s700 = scalar_lea.vmem %s3, %s699
      $region48: #{_lambda_.15} parent=43 // pred_fallthru
        _
      // Predicated region
      $region49: #{_lambda_.15} parent=43 // pred_check
        %p701 = pneg %p152
      $region50: #{_lambda_.15} parent=43 // pred_check_branch
        %703 = sbr.rel (%p701) target = $region52
      $region51: #{_lambda_.15} parent=43 // pred_region
        %p704 = scmp.lt.s32.totalorder %s22, 1
        %s705 = scalar_select %p704, %s22, 1
        %p706 = scmp.lt.s32.totalorder %s23, 0
        %s707 = scalar_select %p706, %s23, 0
        %s708 = sadd.s32 %s707, %s705
        %s709 = smul.addr %s708, 8
        %s710 = scalar_lea.vmem %s4, %s709
      $region52: #{_lambda_.15} parent=43 // pred_fallthru
        _
    $region44: #{_lambda_.15} parent=5 // pred_fallthru
      _
  $region6: #{_lambda_.15} parent=0 // loop_footer
    %s15 = sadd.s32 1, %s11
  $region7: #{_lambda_.15} parent=0 // loop_footer_branch
    %10 = sbr.rel target = $region3
  $region8: #{_lambda_.15} parent=0 // loop_exit
    _

// kernel: _lambda_.16
$region0: #{_lambda_.16}
  #allocation0 [shape = 'u32[]', space=smem, size = 0x4, offset = 0x4, fixed_abs, tag = 'smem constant byte address 0x4 - core index']
  #allocation1 [shape = 'u32[144,128]{1,0:T(1,128)}', space=vmem, size = 0x12000, scoped, tag = 'internal scratch']
  #allocation2 [shape = 'f32[1,1]{1,0:T(1,128)S(1)}', space=vmem, size = 0x200, scoped, tag = 'scoped memory for _lambda_.16']
  %s0 = inlined_call_operand.vmem [shape: bf16[2,16,1024], index: 0, kind: input, shape index: {}]
  %s1 = inlined_call_operand.vmem [shape: bf16[1024,1], index: 1, kind: input, shape index: {}]
  %s2 = inlined_call_operand.<no memory space> [shape: f32[1,1], index: 2, kind: input, shape index: {}]
  %s3 = inlined_call_operand.vmem [shape: f32[2,16,1], index: 3, kind: output, shape index: {}]
  %s4 = sld [smem:[#allocation0]]
  $region45: #{_lambda_.16} parent=0
    _
  %s6 = ssub.s32 1, %s4
  %s7 = scalar_select 0, %s6, %s4
  %v8 = vstv %s2
  %9 = vst [vmem:[#allocation2] sm:$0x1] %v8
  loop: start=0, step=1, limit=4
  $region2: #{_lambda_.16} parent=0 // loop_pre_header
    _
  $region3: #{_lambda_.16} parent=0 // loop_header
    %s11 = sphi 0, %s15
    %p12 = scmp.ge.s32.totalorder %s11, 4
    %s18 = sphi 0, %s30
    %s19 = sphi 0, %s26
    %s20 = sphi 0, %s18
    %s21 = sphi 0, %s19
    %s22 = sphi 0, %s20
    %s23 = sphi 0, %s21
    %s35 = sphi 0, %s37
    %s38 = sphi 0, %s35
    %s39 = sphi 0, %s38
    %s55 = sphi 0, %s39
    %s59 = sphi 0, %s59
    %s61 = sphi 0, %s59
    %s62 = sphi 0, %s61
    %s76 = sphi 0, %s62
    %s80 = sphi 0, %s80
    %s82 = sphi 0, %s80
    %s83 = sphi 0, %s82
    %s97 = sphi 0, %s83
    %s105 = sphi 0, %s107
    %s108 = sphi 0, %s105
    %s109 = sphi 0, %s108
    %s125 = sphi 0, %s109
  $region4: #{_lambda_.16} parent=0 // loop_header_branch
    %14 = sbr.rel (%p12) target = $region8
  $region5: #{_lambda_.16} parent=0 // loop_body
    %s16 = ssub.s32 %s11, 1
    %s17 = ssub.s32 %s11, 2
    %s24 = sadd.s32 1, %s19
    %p25 = scmp.ge.s32.totalorder %s24, 1
    %s26 = scalar_select %p25, 0, %s24
    %s27 = sadd.s32 1, %s18
    %s28 = scalar_select %p25, %s27, %s18
    %p29 = scmp.ge.s32.totalorder %s28, 2
    %s30 = scalar_select %p29, 0, %s28
    %s31 = ssub.s32 %s18, %s30
    %s32 = ssub.s32 %s19, %s26
    %s33 = sor.u32 %s31, %s32
    %p34 = scmp.eq.s32.totalorder %s33, 0
    %s36 = sadd.s32 %s35, 1
    %s37 = scalar_select %p34, %s35, %s36
    %p40 = pneg %p34
    %p41 = scmp.eq.s32.totalorder %s11, 1
    %p42 = por %p40, %p41
    %p43 = scmp.ne.s32.totalorder %s35, %s38
    %p44 = scmp.eq.s32.totalorder %s11, 0
    %p45 = por %p43, %p44
    %p46 = scmp.ne.s32.totalorder %s35, %s38
    %p47 = scmp.eq.s32.totalorder %s16, 1
    %p48 = por %p46, %p47
    %p49 = scmp.ne.s32.totalorder %s38, %s39
    %p50 = scmp.eq.s32.totalorder %s16, 0
    %p51 = por %p49, %p50
    %p52 = scmp.ne.s32.totalorder %s38, %s39
    %p53 = scmp.eq.s32.totalorder %s17, 1
    %p54 = por %p52, %p53
    %p56 = scmp.ne.s32.totalorder %s39, %s55
    %p57 = scmp.eq.s32.totalorder %s17, 0
    %p58 = por %p56, %p57
    %s60 = sadd.s32 %s59, 1
    %p63 = scmp.eq.s32.totalorder %s11, 1
    %p64 = scmp.ne.s32.totalorder %s59, %s61
    %p65 = scmp.eq.s32.totalorder %s11, 0
    %p66 = por %p64, %p65
    %p67 = scmp.ne.s32.totalorder %s59, %s61
    %p68 = scmp.eq.s32.totalorder %s16, 1
    %p69 = por %p67, %p68
    %p70 = scmp.ne.s32.totalorder %s61, %s62
    %p71 = scmp.eq.s32.totalorder %s16, 0
    %p72 = por %p70, %p71
    %p73 = scmp.ne.s32.totalorder %s61, %s62
    %p74 = scmp.eq.s32.totalorder %s17, 1
    %p75 = por %p73, %p74
    %p77 = scmp.ne.s32.totalorder %s62, %s76
    %p78 = scmp.eq.s32.totalorder %s17, 0
    %p79 = por %p77, %p78
    %s81 = sadd.s32 %s80, 1
    %p84 = scmp.eq.s32.totalorder %s11, 1
    %p85 = scmp.ne.s32.totalorder %s80, %s82
    %p86 = scmp.eq.s32.totalorder %s11, 0
    %p87 = por %p85, %p86
    %p88 = scmp.ne.s32.totalorder %s80, %s82
    %p89 = scmp.eq.s32.totalorder %s16, 1
    %p90 = por %p88, %p89
    %p91 = scmp.ne.s32.totalorder %s82, %s83
    %p92 = scmp.eq.s32.totalorder %s16, 0
    %p93 = por %p91, %p92
    %p94 = scmp.ne.s32.totalorder %s82, %s83
    %p95 = scmp.eq.s32.totalorder %s17, 1
    %p96 = por %p94, %p95
    %p98 = scmp.ne.s32.totalorder %s83, %s97
    %p99 = scmp.eq.s32.totalorder %s17, 0
    %p100 = por %p98, %p99
    %s101 = ssub.s32 %s18, %s30
    %s102 = ssub.s32 %s19, %s26
    %s103 = sor.u32 %s101, %s102
    %p104 = scmp.eq.s32.totalorder %s103, 0
    %s106 = sadd.s32 %s105, 1
    %s107 = scalar_select %p104, %s105, %s106
    %p110 = pneg %p104
    %p111 = scmp.eq.s32.totalorder %s11, 1
    %p112 = por %p110, %p111
    %p113 = scmp.ne.s32.totalorder %s105, %s108
    %p114 = scmp.eq.s32.totalorder %s11, 0
    %p115 = por %p113, %p114
    %p116 = scmp.ne.s32.totalorder %s105, %s108
    %p117 = scmp.eq.s32.totalorder %s16, 1
    %p118 = por %p116, %p117
    %p119 = scmp.ne.s32.totalorder %s108, %s109
    %p120 = scmp.eq.s32.totalorder %s16, 0
    %p121 = por %p119, %p120
    %p122 = scmp.ne.s32.totalorder %s108, %s109
    %p123 = scmp.eq.s32.totalorder %s17, 1
    %p124 = por %p122, %p123
    %p126 = scmp.ne.s32.totalorder %s109, %s125
    %p127 = scmp.eq.s32.totalorder %s17, 0
    %p128 = por %p126, %p127
    %p129 = scmp.le.s32.totalorder 1, %s11
    %p130 = scmp.lt.s32.totalorder %s11, 3
    %p131 = pnand %p129, %p130
    %p132 = pneg %p131
    // Predicated region
    $region9: #{_lambda_.16} parent=5 // pred_check
      _
    $region10: #{_lambda_.16} parent=5 // pred_check_branch
      %134 = sbr.rel (%p131) target = $region12
    $region11: #{_lambda_.16} parent=5 // pred_region
      %s135 = ssub.s32 %s11, 1
      // Predicated region
      $region13: #{_lambda_.16} parent=11 // pred_check
        %p136 = pneg %p72
      $region14: #{_lambda_.16} parent=11 // pred_check_branch
        %138 = sbr.rel (%p136) target = $region16
      $region15: #{_lambda_.16} parent=11 // pred_region
        _
      $region16: #{_lambda_.16} parent=11 // pred_fallthru
        _
      // Predicated region
      $region17: #{_lambda_.16} parent=11 // pred_check
        %p139 = pneg %p93
      $region18: #{_lambda_.16} parent=11 // pred_check_branch
        %141 = sbr.rel (%p139) target = $region20
      $region19: #{_lambda_.16} parent=11 // pred_region
        _
      $region20: #{_lambda_.16} parent=11 // pred_fallthru
        _
    $region12: #{_lambda_.16} parent=5 // pred_fallthru
      _
    %p142 = scmp.lt.s32.totalorder %s11, 2
    // Predicated region
    $region21: #{_lambda_.16} parent=5 // pred_check
      %p143 = pneg %p142
    $region22: #{_lambda_.16} parent=5 // pred_check_branch
      %145 = sbr.rel (%p143) target = $region24
    $region23: #{_lambda_.16} parent=5 // pred_region
      // Predicated region
      $region25: #{_lambda_.16} parent=23 // pred_check
        %p146 = pneg %p45
      $region26: #{_lambda_.16} parent=23 // pred_check_branch
        %148 = sbr.rel (%p146) target = $region28
      $region27: #{_lambda_.16} parent=23 // pred_region
        %s149 = smul.u32 2, %s19
        %p150 = scmp.lt.s32.totalorder %s18, 1
        %s151 = scalar_select %p150, %s18, 1
        %p152 = scmp.lt.s32.totalorder %s149, 1
        %s153 = scalar_select %p152, %s149, 1
        %s154 = smul.addr %s153, 8
        %s155 = smul.addr %s151, 16
        %s156 = sadd.s32 %s154, %s155
        %s157 = smul.addr %s156, 4
        %s158 = scalar_lea.vmem %s0, %s157
        %s159 = smul.u32 2, %s19
      $region28: #{_lambda_.16} parent=23 // pred_fallthru
        _
    $region24: #{_lambda_.16} parent=5 // pred_fallthru
      _
    %p160 = scmp.le.s32.totalorder 1, %s11
    %p161 = scmp.lt.s32.totalorder %s11, 3
    %p162 = pnand %p160, %p161
    %p163 = pneg %p162
    // Predicated region
    $region29: #{_lambda_.16} parent=5 // pred_check
      _
    $region30: #{_lambda_.16} parent=5 // pred_check_branch
      %165 = sbr.rel (%p162) target = $region32
    $region31: #{_lambda_.16} parent=5 // pred_region
      %s166 = ssub.s32 %s11, 1
      %s167 = smul.u32 2, %s21
      %p168 = scmp.lt.s32.totalorder %s20, 1
      %s169 = scalar_select %p168, %s20, 1
      %p170 = scmp.lt.s32.totalorder %s167, 1
      %s171 = scalar_select %p170, %s167, 1
      %s172 = smul.addr %s171, 8
      %s173 = smul.addr %s169, 16
      %s174 = sadd.s32 %s172, %s173
      %s175 = smul.addr %s174, 4
      %s176 = scalar_lea.vmem %s0, %s175
      %p177 = pneg %p51
      %p178 = pneg %p48
      %p179 = pneg %p72
      %p180 = pneg %p69
      %p181 = pneg %p93
      %p182 = pneg %p90
      %p183 = pneg %p121
      %p184 = pneg %p118
      %s185 = smul.u32 2, %s21
      %p186 = scmp.lt.s32.totalorder %s20, 1
      %s187 = scalar_select %p186, %s20, 1
      %p188 = scmp.lt.s32.totalorder %s185, 1
      %s189 = scalar_select %p188, %s185, 1
      %s190 = smul.addr %s187, 2
      %s191 = sadd.s32 %s189, %s190
      %s192 = smul.addr %s191, 8
      %s193 = scalar_lea.vmem %s3, %s192
      %s194 = smul.u32 2, %s21
      %p195 = scmp.lt.s32.totalorder %s20, 1
      %s196 = scalar_select %p195, %s20, 1
      %p197 = scmp.lt.s32.totalorder %s194, 1
      %s198 = scalar_select %p197, %s194, 1
      %s199 = smul.addr %s198, 8
      %s200 = smul.addr %s196, 16
      %s201 = sadd.s32 %s199, %s200
      %s202 = smul.addr %s201, 4
      %s203 = scalar_lea.vmem %s0, %s202
      %s204 = smul.u32 2, %s21
      %s205 = smul.u32 2, %s21
      %p206 = scmp.lt.s32.totalorder %s20, 1
      %s207 = scalar_select %p206, %s20, 1
      %p208 = scmp.lt.s32.totalorder %s205, 1
      %s209 = scalar_select %p208, %s205, 1
      %s210 = smul.addr %s207, 2
      %s211 = sadd.s32 %s209, %s210
      %s212 = smul.addr %s211, 8
      %s213 = scalar_lea.vmem %s3, %s212
      %s214 = smul.u32 2, %s21
      %v216 = vld [vmem:[%s203] sm:$0xff]
      %v217 = vld [vmem:[%s203 + $0x8] sm:$0xff]
      %v218 = vld [vmem:[%s203 + $0x10] sm:$0xff]
      %v219 = vld [vmem:[%s203 + $0x18] sm:$0xff]
      %v220 = vld [vmem:[%s203 + $0x20] sm:$0xff]
      %v221 = vld [vmem:[%s203 + $0x28] sm:$0xff]
      %v222 = vld [vmem:[%s203 + $0x30] sm:$0xff]
      %v223 = vld [vmem:[%s203 + $0x38] sm:$0xff]
      %v224 = vld [vmem:[%s1] sm:$0xf]
      %v225 = vld [vmem:[%s1 + $0x4] sm:$0xf]
      %v226 = vld [vmem:[%s1 + $0x8] sm:$0xf]
      %v227 = vld [vmem:[%s1 + $0xc] sm:$0xf]
      %v228 = vld [vmem:[%s1 + $0x10] sm:$0xf]
      %v229 = vld [vmem:[%s1 + $0x14] sm:$0xf]
      %v230 = vld [vmem:[%s1 + $0x18] sm:$0xf]
      %v231 = vld [vmem:[%s1 + $0x1c] sm:$0xf]
      %v232 = vld [vmem:[%s1 + $0x20] sm:$0xf]
      %v233 = vld [vmem:[%s1 + $0x24] sm:$0xf]
      %v234 = vld [vmem:[%s1 + $0x28] sm:$0xf]
      %v235 = vld [vmem:[%s1 + $0x2c] sm:$0xf]
      %v236 = vld [vmem:[%s1 + $0x30] sm:$0xf]
      %v237 = vld [vmem:[%s1 + $0x34] sm:$0xf]
      %v238 = vld [vmem:[%s1 + $0x38] sm:$0xf]
      %v239 = vld [vmem:[%s1 + $0x3c] sm:$0xf]
      %v240 = vld [vmem:[%s1 + $0x40] sm:$0xf]
      %v241 = vld [vmem:[%s1 + $0x44] sm:$0xf]
      %v242 = vld [vmem:[%s1 + $0x48] sm:$0xf]
      %v243 = vld [vmem:[%s1 + $0x4c] sm:$0xf]
      %v244 = vld [vmem:[%s1 + $0x50] sm:$0xf]
      %v245 = vld [vmem:[%s1 + $0x54] sm:$0xf]
      %v246 = vld [vmem:[%s1 + $0x58] sm:$0xf]
      %v247 = vld [vmem:[%s1 + $0x5c] sm:$0xf]
      %v248 = vld [vmem:[%s1 + $0x60] sm:$0xf]
      %v249 = vld [vmem:[%s1 + $0x64] sm:$0xf]
      %v250 = vld [vmem:[%s1 + $0x68] sm:$0xf]
      %v251 = vld [vmem:[%s1 + $0x6c] sm:$0xf]
      %v252 = vld [vmem:[%s1 + $0x70] sm:$0xf]
      %v253 = vld [vmem:[%s1 + $0x74] sm:$0xf]
      %v254 = vld [vmem:[%s1 + $0x78] sm:$0xf]
      %v255 = vld [vmem:[%s1 + $0x7c] sm:$0xf]
      %v256 = vld [vmem:[%s1 + $0x80] sm:$0xf]
      %v257 = vld [vmem:[%s1 + $0x84] sm:$0xf]
      %v258 = vld [vmem:[%s1 + $0x88] sm:$0xf]
      %v259 = vld [vmem:[%s1 + $0x8c] sm:$0xf]
      %v260 = vld [vmem:[%s1 + $0x90] sm:$0xf]
      %v261 = vld [vmem:[%s1 + $0x94] sm:$0xf]
      %v262 = vld [vmem:[%s1 + $0x98] sm:$0xf]
      %v263 = vld [vmem:[%s1 + $0x9c] sm:$0xf]
      %v264 = vld [vmem:[%s1 + $0xa0] sm:$0xf]
      %v265 = vld [vmem:[%s1 + $0xa4] sm:$0xf]
      %v266 = vld [vmem:[%s1 + $0xa8] sm:$0xf]
      %v267 = vld [vmem:[%s1 + $0xac] sm:$0xf]
      %v268 = vld [vmem:[%s1 + $0xb0] sm:$0xf]
      %v269 = vld [vmem:[%s1 + $0xb4] sm:$0xf]
      %v270 = vld [vmem:[%s1 + $0xb8] sm:$0xf]
      %v271 = vld [vmem:[%s1 + $0xbc] sm:$0xf]
      %v272 = vld [vmem:[%s1 + $0xc0] sm:$0xf]
      %v273 = vld [vmem:[%s1 + $0xc4] sm:$0xf]
      %v274 = vld [vmem:[%s1 + $0xc8] sm:$0xf]
      %v275 = vld [vmem:[%s1 + $0xcc] sm:$0xf]
      %v276 = vld [vmem:[%s1 + $0xd0] sm:$0xf]
      %v277 = vld [vmem:[%s1 + $0xd4] sm:$0xf]
      %v278 = vld [vmem:[%s1 + $0xd8] sm:$0xf]
      %v279 = vld [vmem:[%s1 + $0xdc] sm:$0xf]
      %v280 = vld [vmem:[%s1 + $0xe0] sm:$0xf]
      %v281 = vld [vmem:[%s1 + $0xe4] sm:$0xf]
      %v282 = vld [vmem:[%s1 + $0xe8] sm:$0xf]
      %v283 = vld [vmem:[%s1 + $0xec] sm:$0xf]
      %v284 = vld [vmem:[%s1 + $0xf0] sm:$0xf]
      %v285 = vld [vmem:[%s1 + $0xf4] sm:$0xf]
      %v286 = vld [vmem:[%s1 + $0xf8] sm:$0xf]
      %v287 = vld [vmem:[%s1 + $0xfc] sm:$0xf]
      %v288 = vld [vmem:[%s1 + $0x100] sm:$0xf]
      %v289 = vld [vmem:[%s1 + $0x104] sm:$0xf]
      %v290 = vld [vmem:[%s1 + $0x108] sm:$0xf]
      %v291 = vld [vmem:[%s1 + $0x10c] sm:$0xf]
      %v292 = vld [vmem:[%s1 + $0x110] sm:$0xf]
      %v293 = vld [vmem:[%s1 + $0x114] sm:$0xf]
      %v294 = vld [vmem:[%s1 + $0x118] sm:$0xf]
      %v295 = vld [vmem:[%s1 + $0x11c] sm:$0xf]
      %v296 = vld [vmem:[%s1 + $0x120] sm:$0xf]
      %v297 = vld [vmem:[%s1 + $0x124] sm:$0xf]
      %v298 = vld [vmem:[%s1 + $0x128] sm:$0xf]
      %v299 = vld [vmem:[%s1 + $0x12c] sm:$0xf]
      %v300 = vld [vmem:[%s1 + $0x130] sm:$0xf]
      %v301 = vld [vmem:[%s1 + $0x134] sm:$0xf]
      %v302 = vld [vmem:[%s1 + $0x138] sm:$0xf]
      %v303 = vld [vmem:[%s1 + $0x13c] sm:$0xf]
      %v304 = vld [vmem:[%s1 + $0x140] sm:$0xf]
      %v305 = vld [vmem:[%s1 + $0x144] sm:$0xf]
      %v306 = vld [vmem:[%s1 + $0x148] sm:$0xf]
      %v307 = vld [vmem:[%s1 + $0x14c] sm:$0xf]
      %v308 = vld [vmem:[%s1 + $0x150] sm:$0xf]
      %v309 = vld [vmem:[%s1 + $0x154] sm:$0xf]
      %v310 = vld [vmem:[%s1 + $0x158] sm:$0xf]
      %v311 = vld [vmem:[%s1 + $0x15c] sm:$0xf]
      %v312 = vld [vmem:[%s1 + $0x160] sm:$0xf]
      %v313 = vld [vmem:[%s1 + $0x164] sm:$0xf]
      %v314 = vld [vmem:[%s1 + $0x168] sm:$0xf]
      %v315 = vld [vmem:[%s1 + $0x16c] sm:$0xf]
      %v316 = vld [vmem:[%s1 + $0x170] sm:$0xf]
      %v317 = vld [vmem:[%s1 + $0x174] sm:$0xf]
      %v318 = vld [vmem:[%s1 + $0x178] sm:$0xf]
      %v319 = vld [vmem:[%s1 + $0x17c] sm:$0xf]
      %v320 = vld [vmem:[%s1 + $0x180] sm:$0xf]
      %v321 = vld [vmem:[%s1 + $0x184] sm:$0xf]
      %v322 = vld [vmem:[%s1 + $0x188] sm:$0xf]
      %v323 = vld [vmem:[%s1 + $0x18c] sm:$0xf]
      %v324 = vld [vmem:[%s1 + $0x190] sm:$0xf]
      %v325 = vld [vmem:[%s1 + $0x194] sm:$0xf]
      %v326 = vld [vmem:[%s1 + $0x198] sm:$0xf]
      %v327 = vld [vmem:[%s1 + $0x19c] sm:$0xf]
      %v328 = vld [vmem:[%s1 + $0x1a0] sm:$0xf]
      %v329 = vld [vmem:[%s1 + $0x1a4] sm:$0xf]
      %v330 = vld [vmem:[%s1 + $0x1a8] sm:$0xf]
      %v331 = vld [vmem:[%s1 + $0x1ac] sm:$0xf]
      %v332 = vld [vmem:[%s1 + $0x1b0] sm:$0xf]
      %v333 = vld [vmem:[%s1 + $0x1b4] sm:$0xf]
      %v334 = vld [vmem:[%s1 + $0x1b8] sm:$0xf]
      %v335 = vld [vmem:[%s1 + $0x1bc] sm:$0xf]
      %v336 = vld [vmem:[%s1 + $0x1c0] sm:$0xf]
      %v337 = vld [vmem:[%s1 + $0x1c4] sm:$0xf]
      %v338 = vld [vmem:[%s1 + $0x1c8] sm:$0xf]
      %v339 = vld [vmem:[%s1 + $0x1cc] sm:$0xf]
      %v340 = vld [vmem:[%s1 + $0x1d0] sm:$0xf]
      %v341 = vld [vmem:[%s1 + $0x1d4] sm:$0xf]
      %v342 = vld [vmem:[%s1 + $0x1d8] sm:$0xf]
      %v343 = vld [vmem:[%s1 + $0x1dc] sm:$0xf]
      %v344 = vld [vmem:[%s1 + $0x1e0] sm:$0xf]
      %v345 = vld [vmem:[%s1 + $0x1e4] sm:$0xf]
      %v346 = vld [vmem:[%s1 + $0x1e8] sm:$0xf]
      %v347 = vld [vmem:[%s1 + $0x1ec] sm:$0xf]
      %v348 = vld [vmem:[%s1 + $0x1f0] sm:$0xf]
      %v349 = vld [vmem:[%s1 + $0x1f4] sm:$0xf]
      %v350 = vld [vmem:[%s1 + $0x1f8] sm:$0xf]
      %v351 = vld [vmem:[%s1 + $0x1fc] sm:$0xf]
      %v352 = vld [vmem:[#allocation2] sm:$0x1]
      %v354 = vlaneseq
      %v355 = vshrl.u32 %v354, 7
      %v356 = vsub.s32 0, %v355
      %v357 = vrot.slane %v352, %v356
      %v367 = vunpack.c.l.b16 %v216
      %v368 = vunpack.c.h.b16 %v216
      %v369 = vunpack.c.l.b16 %v217
      %v370 = vunpack.c.h.b16 %v217
      %v371 = vunpack.c.l.b16 %v218
      %v372 = vunpack.c.h.b16 %v218
      %v373 = vunpack.c.l.b16 %v219
      %v374 = vunpack.c.h.b16 %v219
      %v375 = vunpack.c.l.b16 %v220
      %v376 = vunpack.c.h.b16 %v220
      %v377 = vunpack.c.l.b16 %v221
      %v378 = vunpack.c.h.b16 %v221
      %v379 = vunpack.c.l.b16 %v222
      %v380 = vunpack.c.h.b16 %v222
      %v381 = vunpack.c.l.b16 %v223
      %v382 = vunpack.c.h.b16 %v223
      %v383 = vpack.c.b16 %v375, %v367
      %v384 = vpack.c.b16 %v376, %v368
      %v385 = vpack.c.b16 %v377, %v369
      %v386 = vpack.c.b16 %v378, %v370
      %v387 = vpack.c.b16 %v379, %v371
      %v388 = vpack.c.b16 %v380, %v372
      %v389 = vpack.c.b16 %v381, %v373
      %v390 = vpack.c.b16 %v382, %v374
      %v527 = vunpack.c.l.b16 %v224
      %v528 = vunpack.c.l.b16 %v225
      %v529 = vunpack.c.l.b16 %v226
      %v530 = vunpack.c.l.b16 %v227
      %v531 = vunpack.c.l.b16 %v228
      %v532 = vunpack.c.l.b16 %v229
      %v533 = vunpack.c.l.b16 %v230
      %v534 = vunpack.c.l.b16 %v231
      %v535 = vunpack.c.l.b16 %v232
      %v536 = vunpack.c.l.b16 %v233
      %v537 = vunpack.c.l.b16 %v234
      %v538 = vunpack.c.l.b16 %v235
      %v539 = vunpack.c.l.b16 %v236
      %v540 = vunpack.c.l.b16 %v237
      %v541 = vunpack.c.l.b16 %v238
      %v542 = vunpack.c.l.b16 %v239
      %v543 = vunpack.c.l.b16 %v240
      %v544 = vunpack.c.l.b16 %v241
      %v545 = vunpack.c.l.b16 %v242
      %v546 = vunpack.c.l.b16 %v243
      %v547 = vunpack.c.l.b16 %v244
      %v548 = vunpack.c.l.b16 %v245
      %v549 = vunpack.c.l.b16 %v246
      %v550 = vunpack.c.l.b16 %v247
      %v551 = vunpack.c.l.b16 %v248
      %v552 = vunpack.c.l.b16 %v249
      %v553 = vunpack.c.l.b16 %v250
      %v554 = vunpack.c.l.b16 %v251
      %v555 = vunpack.c.l.b16 %v252
      %v556 = vunpack.c.l.b16 %v253
      %v557 = vunpack.c.l.b16 %v254
      %v558 = vunpack.c.l.b16 %v255
      %v559 = vunpack.c.l.b16 %v256
      %v560 = vunpack.c.l.b16 %v257
      %v561 = vunpack.c.l.b16 %v258
      %v562 = vunpack.c.l.b16 %v259
      %v563 = vunpack.c.l.b16 %v260
      %v564 = vunpack.c.l.b16 %v261
      %v565 = vunpack.c.l.b16 %v262
      %v566 = vunpack.c.l.b16 %v263
      %v567 = vunpack.c.l.b16 %v264
      %v568 = vunpack.c.l.b16 %v265
      %v569 = vunpack.c.l.b16 %v266
      %v570 = vunpack.c.l.b16 %v267
      %v571 = vunpack.c.l.b16 %v268
      %v572 = vunpack.c.l.b16 %v269
      %v573 = vunpack.c.l.b16 %v270
      %v574 = vunpack.c.l.b16 %v271
      %v575 = vunpack.c.l.b16 %v272
      %v576 = vunpack.c.l.b16 %v273
      %v577 = vunpack.c.l.b16 %v274
      %v578 = vunpack.c.l.b16 %v275
      %v579 = vunpack.c.l.b16 %v276
      %v580 = vunpack.c.l.b16 %v277
      %v581 = vunpack.c.l.b16 %v278
      %v582 = vunpack.c.l.b16 %v279
      %v583 = vunpack.c.l.b16 %v280
      %v584 = vunpack.c.l.b16 %v281
      %v585 = vunpack.c.l.b16 %v282
      %v586 = vunpack.c.l.b16 %v283
      %v587 = vunpack.c.l.b16 %v284
      %v588 = vunpack.c.l.b16 %v285
      %v589 = vunpack.c.l.b16 %v286
      %v590 = vunpack.c.l.b16 %v287
      %v591 = vunpack.c.l.b16 %v288
      %v592 = vunpack.c.l.b16 %v289
      %v593 = vunpack.c.l.b16 %v290
      %v594 = vunpack.c.l.b16 %v291
      %v595 = vunpack.c.l.b16 %v292
      %v596 = vunpack.c.l.b16 %v293
      %v597 = vunpack.c.l.b16 %v294
      %v598 = vunpack.c.l.b16 %v295
      %v599 = vunpack.c.l.b16 %v296
      %v600 = vunpack.c.l.b16 %v297
      %v601 = vunpack.c.l.b16 %v298
      %v602 = vunpack.c.l.b16 %v299
      %v603 = vunpack.c.l.b16 %v300
      %v604 = vunpack.c.l.b16 %v301
      %v605 = vunpack.c.l.b16 %v302
      %v606 = vunpack.c.l.b16 %v303
      %v607 = vunpack.c.l.b16 %v304
      %v608 = vunpack.c.l.b16 %v305
      %v609 = vunpack.c.l.b16 %v306
      %v610 = vunpack.c.l.b16 %v307
      %v611 = vunpack.c.l.b16 %v308
      %v612 = vunpack.c.l.b16 %v309
      %v613 = vunpack.c.l.b16 %v310
      %v614 = vunpack.c.l.b16 %v311
      %v615 = vunpack.c.l.b16 %v312
      %v616 = vunpack.c.l.b16 %v313
      %v617 = vunpack.c.l.b16 %v314
      %v618 = vunpack.c.l.b16 %v315
      %v619 = vunpack.c.l.b16 %v316
      %v620 = vunpack.c.l.b16 %v317
      %v621 = vunpack.c.l.b16 %v318
      %v622 = vunpack.c.l.b16 %v319
      %v623 = vunpack.c.l.b16 %v320
      %v624 = vunpack.c.l.b16 %v321
      %v625 = vunpack.c.l.b16 %v322
      %v626 = vunpack.c.l.b16 %v323
      %v627 = vunpack.c.l.b16 %v324
      %v628 = vunpack.c.l.b16 %v325
      %v629 = vunpack.c.l.b16 %v326
      %v630 = vunpack.c.l.b16 %v327
      %v631 = vunpack.c.l.b16 %v328
      %v632 = vunpack.c.l.b16 %v329
      %v633 = vunpack.c.l.b16 %v330
      %v634 = vunpack.c.l.b16 %v331
      %v635 = vunpack.c.l.b16 %v332
      %v636 = vunpack.c.l.b16 %v333
      %v637 = vunpack.c.l.b16 %v334
      %v638 = vunpack.c.l.b16 %v335
      %v639 = vunpack.c.l.b16 %v336
      %v640 = vunpack.c.l.b16 %v337
      %v641 = vunpack.c.l.b16 %v338
      %v642 = vunpack.c.l.b16 %v339
      %v643 = vunpack.c.l.b16 %v340
      %v644 = vunpack.c.l.b16 %v341
      %v645 = vunpack.c.l.b16 %v342
      %v646 = vunpack.c.l.b16 %v343
      %v647 = vunpack.c.l.b16 %v344
      %v648 = vunpack.c.l.b16 %v345
      %v649 = vunpack.c.l.b16 %v346
      %v650 = vunpack.c.l.b16 %v347
      %v651 = vunpack.c.l.b16 %v348
      %v652 = vunpack.c.l.b16 %v349
      %v653 = vunpack.c.l.b16 %v350
      %v654 = vunpack.c.l.b16 %v351
      %v655 = vpack.c.b16 %v528, %v527
      %v656 = vpack.c.b16 %v530, %v529
      %v657 = vpack.c.b16 %v532, %v531
      %v658 = vpack.c.b16 %v534, %v533
      %v659 = vpack.c.b16 %v536, %v535
      %v660 = vpack.c.b16 %v538, %v537
      %v661 = vpack.c.b16 %v540, %v539
      %v662 = vpack.c.b16 %v542, %v541
      %v663 = vpack.c.b16 %v544, %v543
      %v664 = vpack.c.b16 %v546, %v545
      %v665 = vpack.c.b16 %v548, %v547
      %v666 = vpack.c.b16 %v550, %v549
      %v667 = vpack.c.b16 %v552, %v551
      %v668 = vpack.c.b16 %v554, %v553
      %v669 = vpack.c.b16 %v556, %v555
      %v670 = vpack.c.b16 %v558, %v557
      %v671 = vpack.c.b16 %v560, %v559
      %v672 = vpack.c.b16 %v562, %v561
      %v673 = vpack.c.b16 %v564, %v563
      %v674 = vpack.c.b16 %v566, %v565
      %v675 = vpack.c.b16 %v568, %v567
      %v676 = vpack.c.b16 %v570, %v569
      %v677 = vpack.c.b16 %v572, %v571
      %v678 = vpack.c.b16 %v574, %v573
      %v679 = vpack.c.b16 %v576, %v575
      %v680 = vpack.c.b16 %v578, %v577
      %v681 = vpack.c.b16 %v580, %v579
      %v682 = vpack.c.b16 %v582, %v581
      %v683 = vpack.c.b16 %v584, %v583
      %v684 = vpack.c.b16 %v586, %v585
      %v685 = vpack.c.b16 %v588, %v587
      %v686 = vpack.c.b16 %v590, %v589
      %v687 = vpack.c.b16 %v592, %v591
      %v688 = vpack.c.b16 %v594, %v593
      %v689 = vpack.c.b16 %v596, %v595
      %v690 = vpack.c.b16 %v598, %v597
      %v691 = vpack.c.b16 %v600, %v599
      %v692 = vpack.c.b16 %v602, %v601
      %v693 = vpack.c.b16 %v604, %v603
      %v694 = vpack.c.b16 %v606, %v605
      %v695 = vpack.c.b16 %v608, %v607
      %v696 = vpack.c.b16 %v610, %v609
      %v697 = vpack.c.b16 %v612, %v611
      %v698 = vpack.c.b16 %v614, %v613
      %v699 = vpack.c.b16 %v616, %v615
      %v700 = vpack.c.b16 %v618, %v617
      %v701 = vpack.c.b16 %v620, %v619
      %v702 = vpack.c.b16 %v622, %v621
      %v703 = vpack.c.b16 %v624, %v623
      %v704 = vpack.c.b16 %v626, %v625
      %v705 = vpack.c.b16 %v628, %v627
      %v706 = vpack.c.b16 %v630, %v629
      %v707 = vpack.c.b16 %v632, %v631
      %v708 = vpack.c.b16 %v634, %v633
      %v709 = vpack.c.b16 %v636, %v635
      %v710 = vpack.c.b16 %v638, %v637
      %v711 = vpack.c.b16 %v640, %v639
      %v712 = vpack.c.b16 %v642, %v641
      %v713 = vpack.c.b16 %v644, %v643
      %v714 = vpack.c.b16 %v646, %v645
      %v715 = vpack.c.b16 %v648, %v647
      %v716 = vpack.c.b16 %v650, %v649
      %v717 = vpack.c.b16 %v652, %v651
      %v718 = vpack.c.b16 %v654, %v653
      %783 = vmatprep.subr.bf16.mxu0 0
      %784 = vmatpush1.bf16.msra.mxu0 %v655
      %785 = vmatprep.subr.bf16.mxu0 0
      %786 = vmatpush1.bf16.msra.mxu0 %v656
      %787 = vmatprep.subr.bf16.mxu0 0
      %788 = vmatpush1.bf16.msra.mxu0 %v657
      %789 = vmatprep.subr.bf16.mxu0 0
      %790 = vmatpush1.bf16.msra.mxu0 %v658
      %791 = vmatprep.subr.bf16.mxu0 0
      %792 = vmatpush1.bf16.msra.mxu0 %v659
      %793 = vmatprep.subr.bf16.mxu0 0
      %794 = vmatpush1.bf16.msra.mxu0 %v660
      %795 = vmatprep.subr.bf16.mxu0 0
      %796 = vmatpush1.bf16.msra.mxu0 %v661
      %797 = vmatprep.subr.bf16.mxu0 0
      %798 = vmatpush1.bf16.msra.mxu0 %v662
      %799 = vmatprep.subr.bf16.mxu0 0
      %800 = vmatpush1.bf16.msra.mxu0 %v663
      %801 = vmatprep.subr.bf16.mxu0 0
      %802 = vmatpush1.bf16.msra.mxu0 %v664
      %803 = vmatprep.subr.bf16.mxu0 0
      %804 = vmatpush1.bf16.msra.mxu0 %v665
      %805 = vmatprep.subr.bf16.mxu0 0
      %806 = vmatpush1.bf16.msra.mxu0 %v666
      %807 = vmatprep.subr.bf16.mxu0 0
      %808 = vmatpush1.bf16.msra.mxu0 %v667
      %809 = vmatprep.subr.bf16.mxu0 0
      %810 = vmatpush1.bf16.msra.mxu0 %v668
      %811 = vmatprep.subr.bf16.mxu0 0
      %812 = vmatpush1.bf16.msra.mxu0 %v669
      %813 = vmatprep.subr.bf16.mxu0 0
      %814 = vmatpush1.bf16.msra.mxu0 %v670
      %815 = vmatprep.mubr.bf16.mxu0 %v384
      %816 = vmatmul.mubr.bf16.gmra.mrb[0].mxu0 %v383
      %v817 = vpop.f32.mrb[0].mxu0
      %v818 = vadd.f32 %v357, %v817
      %v819 = vpop.f32.mrb[0].mxu0
      %v820 = vpop.f32.mrb[0].mxu0
      %v821 = vadd.f32 %v357, %v820
      %v822 = vpop.f32.mrb[0].mxu0
      %823 = vdwg.mxu0
      %824 = vmatprep.subr.bf16.mxu0 0
      %825 = vmatpush1.bf16.msra.mxu0 %v671
      %826 = vmatprep.subr.bf16.mxu0 0
      %827 = vmatpush1.bf16.msra.mxu0 %v672
      %828 = vmatprep.subr.bf16.mxu0 0
      %829 = vmatpush1.bf16.msra.mxu0 %v673
      %830 = vmatprep.subr.bf16.mxu0 0
      %831 = vmatpush1.bf16.msra.mxu0 %v674
      %832 = vmatprep.subr.bf16.mxu0 0
      %833 = vmatpush1.bf16.msra.mxu0 %v675
      %834 = vmatprep.subr.bf16.mxu0 0
      %835 = vmatpush1.bf16.msra.mxu0 %v676
      %836 = vmatprep.subr.bf16.mxu0 0
      %837 = vmatpush1.bf16.msra.mxu0 %v677
      %838 = vmatprep.subr.bf16.mxu0 0
      %839 = vmatpush1.bf16.msra.mxu0 %v678
      %840 = vmatprep.subr.bf16.mxu0 0
      %841 = vmatpush1.bf16.msra.mxu0 %v679
      %842 = vmatprep.subr.bf16.mxu0 0
      %843 = vmatpush1.bf16.msra.mxu0 %v680
      %844 = vmatprep.subr.bf16.mxu0 0
      %845 = vmatpush1.bf16.msra.mxu0 %v681
      %846 = vmatprep.subr.bf16.mxu0 0
      %847 = vmatpush1.bf16.msra.mxu0 %v682
      %848 = vmatprep.subr.bf16.mxu0 0
      %849 = vmatpush1.bf16.msra.mxu0 %v683
      %850 = vmatprep.subr.bf16.mxu0 0
      %851 = vmatpush1.bf16.msra.mxu0 %v684
      %852 = vmatprep.subr.bf16.mxu0 0
      %853 = vmatpush1.bf16.msra.mxu0 %v685
      %854 = vmatprep.subr.bf16.mxu0 0
      %855 = vmatpush1.bf16.msra.mxu0 %v686
      %856 = vmatprep.mubr.bf16.mxu0 %v386
      %857 = vmatmul.mubr.bf16.gmra.mrb[0].mxu0 %v385
      %v858 = vpop.f32.mrb[0].mxu0
      %v859 = vadd.f32 %v818, %v858
      %v860 = vpop.f32.mrb[0].mxu0
      %v861 = vpop.f32.mrb[0].mxu0
      %v862 = vadd.f32 %v821, %v861
      %v863 = vpop.f32.mrb[0].mxu0
      %864 = vdwg.mxu0
      %865 = vmatprep.subr.bf16.mxu0 0
      %866 = vmatpush1.bf16.msra.mxu0 %v687
      %867 = vmatprep.subr.bf16.mxu0 0
      %868 = vmatpush1.bf16.msra.mxu0 %v688
      %869 = vmatprep.subr.bf16.mxu0 0
      %870 = vmatpush1.bf16.msra.mxu0 %v689
      %871 = vmatprep.subr.bf16.mxu0 0
      %872 = vmatpush1.bf16.msra.mxu0 %v690
      %873 = vmatprep.subr.bf16.mxu0 0
      %874 = vmatpush1.bf16.msra.mxu0 %v691
      %875 = vmatprep.subr.bf16.mxu0 0
      %876 = vmatpush1.bf16.msra.mxu0 %v692
      %877 = vmatprep.subr.bf16.mxu0 0
      %878 = vmatpush1.bf16.msra.mxu0 %v693
      %879 = vmatprep.subr.bf16.mxu0 0
      %880 = vmatpush1.bf16.msra.mxu0 %v694
      %881 = vmatprep.subr.bf16.mxu0 0
      %882 = vmatpush1.bf16.msra.mxu0 %v695
      %883 = vmatprep.subr.bf16.mxu0 0
      %884 = vmatpush1.bf16.msra.mxu0 %v696
      %885 = vmatprep.subr.bf16.mxu0 0
      %886 = vmatpush1.bf16.msra.mxu0 %v697
      %887 = vmatprep.subr.bf16.mxu0 0
      %888 = vmatpush1.bf16.msra.mxu0 %v698
      %889 = vmatprep.subr.bf16.mxu0 0
      %890 = vmatpush1.bf16.msra.mxu0 %v699
      %891 = vmatprep.subr.bf16.mxu0 0
      %892 = vmatpush1.bf16.msra.mxu0 %v700
      %893 = vmatprep.subr.bf16.mxu0 0
      %894 = vmatpush1.bf16.msra.mxu0 %v701
      %895 = vmatprep.subr.bf16.mxu0 0
      %896 = vmatpush1.bf16.msra.mxu0 %v702
      %897 = vmatprep.mubr.bf16.mxu0 %v388
      %898 = vmatmul.mubr.bf16.gmra.mrb[0].mxu0 %v387
      %v899 = vpop.f32.mrb[0].mxu0
      %v900 = vadd.f32 %v859, %v899
      %v901 = vpop.f32.mrb[0].mxu0
      %v902 = vpop.f32.mrb[0].mxu0
      %v903 = vadd.f32 %v862, %v902
      %v904 = vpop.f32.mrb[0].mxu0
      %905 = vdwg.mxu0
      %906 = vmatprep.subr.bf16.mxu0 0
      %907 = vmatpush1.bf16.msra.mxu0 %v703
      %908 = vmatprep.subr.bf16.mxu0 0
      %909 = vmatpush1.bf16.msra.mxu0 %v704
      %910 = vmatprep.subr.bf16.mxu0 0
      %911 = vmatpush1.bf16.msra.mxu0 %v705
      %912 = vmatprep.subr.bf16.mxu0 0
      %913 = vmatpush1.bf16.msra.mxu0 %v706
      %914 = vmatprep.subr.bf16.mxu0 0
      %915 = vmatpush1.bf16.msra.mxu0 %v707
      %916 = vmatprep.subr.bf16.mxu0 0
      %917 = vmatpush1.bf16.msra.mxu0 %v708
      %918 = vmatprep.subr.bf16.mxu0 0
      %919 = vmatpush1.bf16.msra.mxu0 %v709
      %920 = vmatprep.subr.bf16.mxu0 0
      %921 = vmatpush1.bf16.msra.mxu0 %v710
      %922 = vmatprep.subr.bf16.mxu0 0
      %923 = vmatpush1.bf16.msra.mxu0 %v711
      %924 = vmatprep.subr.bf16.mxu0 0
      %925 = vmatpush1.bf16.msra.mxu0 %v712
      %926 = vmatprep.subr.bf16.mxu0 0
      %927 = vmatpush1.bf16.msra.mxu0 %v713
      %928 = vmatprep.subr.bf16.mxu0 0
      %929 = vmatpush1.bf16.msra.mxu0 %v714
      %930 = vmatprep.subr.bf16.mxu0 0
      %931 = vmatpush1.bf16.msra.mxu0 %v715
      %932 = vmatprep.subr.bf16.mxu0 0
      %933 = vmatpush1.bf16.msra.mxu0 %v716
      %934 = vmatprep.subr.bf16.mxu0 0
      %935 = vmatpush1.bf16.msra.mxu0 %v717
      %936 = vmatprep.subr.bf16.mxu0 0
      %937 = vmatpush1.bf16.msra.mxu0 %v718
      %938 = vmatprep.mubr.bf16.mxu0 %v390
      %939 = vmatmul.mubr.bf16.gmra.mrb[0].mxu0 %v389
      %v940 = vpop.f32.mrb[0].mxu0
      %v941 = vadd.f32 %v900, %v940
      %v942 = vpop.f32.mrb[0].mxu0
      %v943 = vpop.f32.mrb[0].mxu0
      %v944 = vadd.f32 %v903, %v943
      %v945 = vpop.f32.mrb[0].mxu0
      %946 = vdwg.mxu0
      %vm947 = vcmask 7168
      %948 = vst.msk [vmem:[%s213] sm:$0xff] %vm947, %v941
      %949 = vst.msk [vmem:[%s213 + $0x8] sm:$0xff] %vm947, %v944
      %s950 = smul.u32 2, %s21
      %p951 = scmp.lt.s32.totalorder %s20, 1
      %s952 = scalar_select %p951, %s20, 1
      %p953 = scmp.lt.s32.totalorder %s950, 1
      %s954 = scalar_select %p953, %s950, 1
      %s955 = smul.addr %s952, 2
      %s956 = sadd.s32 %s954, %s955
      %s957 = smul.addr %s956, 8
      %s958 = scalar_lea.vmem %s3, %s957
      // Predicated region
      $region33: #{_lambda_.16} parent=31 // pred_check
        %p959 = pneg %p118
      $region34: #{_lambda_.16} parent=31 // pred_check_branch
        %961 = sbr.rel (%p959) target = $region36
      $region35: #{_lambda_.16} parent=31 // pred_region
        %s962 = smul.u32 2, %s21
      $region36: #{_lambda_.16} parent=31 // pred_fallthru
        _
    $region32: #{_lambda_.16} parent=5 // pred_fallthru
      _
    %p963 = scmp.le.s32.totalorder 2, %s11
    // Predicated region
    $region37: #{_lambda_.16} parent=5 // pred_check
      %p964 = pneg %p963
    $region38: #{_lambda_.16} parent=5 // pred_check_branch
      %966 = sbr.rel (%p964) target = $region40
    $region39: #{_lambda_.16} parent=5 // pred_region
      %s967 = ssub.s32 %s11, 2
      // Predicated region
      $region41: #{_lambda_.16} parent=39 // pred_check
        %p968 = pneg %p124
      $region42: #{_lambda_.16} parent=39 // pred_check_branch
        %970 = sbr.rel (%p968) target = $region44
      $region43: #{_lambda_.16} parent=39 // pred_region
        %s971 = smul.u32 2, %s23
        %p972 = scmp.lt.s32.totalorder %s22, 1
        %s973 = scalar_select %p972, %s22, 1
        %p974 = scmp.lt.s32.totalorder %s971, 1
        %s975 = scalar_select %p974, %s971, 1
        %s976 = smul.addr %s973, 2
        %s977 = sadd.s32 %s975, %s976
        %s978 = smul.addr %s977, 8
        %s979 = scalar_lea.vmem %s3, %s978
      $region44: #{_lambda_.16} parent=39 // pred_fallthru
        _
    $region40: #{_lambda_.16} parent=5 // pred_fallthru
      _
  $region6: #{_lambda_.16} parent=0 // loop_footer
    %s15 = sadd.s32 1, %s11
  $region7: #{_lambda_.16} parent=0 // loop_footer_branch
    %10 = sbr.rel target = $region3
  $region8: #{_lambda_.16} parent=0 // loop_exit
    _

// kernel: _lambda_.17
$region0: #{_lambda_.17}
  #allocation0 [shape = 'u32[]', space=smem, size = 0x4, offset = 0x4, fixed_abs, tag = 'smem constant byte address 0x4 - core index']
  #allocation1 [shape = 'u32[144,128]{1,0:T(1,128)}', space=vmem, size = 0x12000, scoped, tag = 'internal scratch']
  %s0 = inlined_call_operand.vmem [shape: bf16[2,64,128], index: 0, kind: input, shape index: {}]
  %s1 = inlined_call_operand.vmem [shape: bf16[128,8], index: 1, kind: input, shape index: {}]
  %s2 = inlined_call_operand.vmem [shape: f32[1,8], index: 2, kind: input, shape index: {}]
  %s3 = inlined_call_operand.vmem [shape: bf16[2,64,8], index: 3, kind: output, shape index: {}]
  %s4 = sld [smem:[#allocation0]]
  $region45: #{_lambda_.17} parent=0
    _
  %s6 = ssub.s32 1, %s4
  %s7 = scalar_select 0, %s6, %s4
  loop: start=0, step=1, limit=4
  $region2: #{_lambda_.17} parent=0 // loop_pre_header
    _
  $region3: #{_lambda_.17} parent=0 // loop_header
    %s9 = sphi 0, %s13
    %p10 = scmp.ge.s32.totalorder %s9, 4
    %s16 = sphi 0, %s28
    %s17 = sphi 0, %s24
    %s18 = sphi 0, %s16
    %s19 = sphi 0, %s17
    %s20 = sphi 0, %s18
    %s21 = sphi 0, %s19
    %s33 = sphi 0, %s35
    %s36 = sphi 0, %s33
    %s37 = sphi 0, %s36
    %s53 = sphi 0, %s37
    %s57 = sphi 0, %s57
    %s59 = sphi 0, %s57
    %s60 = sphi 0, %s59
    %s74 = sphi 0, %s60
    %s78 = sphi 0, %s78
    %s80 = sphi 0, %s78
    %s81 = sphi 0, %s80
    %s95 = sphi 0, %s81
    %s103 = sphi 0, %s105
    %s106 = sphi 0, %s103
    %s107 = sphi 0, %s106
    %s123 = sphi 0, %s107
  $region4: #{_lambda_.17} parent=0 // loop_header_branch
    %12 = sbr.rel (%p10) target = $region8
  $region5: #{_lambda_.17} parent=0 // loop_body
    %s14 = ssub.s32 %s9, 1
    %s15 = ssub.s32 %s9, 2
    %s22 = sadd.s32 1, %s17
    %p23 = scmp.ge.s32.totalorder %s22, 1
    %s24 = scalar_select %p23, 0, %s22
    %s25 = sadd.s32 1, %s16
    %s26 = scalar_select %p23, %s25, %s16
    %p27 = scmp.ge.s32.totalorder %s26, 2
    %s28 = scalar_select %p27, 0, %s26
    %s29 = ssub.s32 %s16, %s28
    %s30 = ssub.s32 %s17, %s24
    %s31 = sor.u32 %s29, %s30
    %p32 = scmp.eq.s32.totalorder %s31, 0
    %s34 = sadd.s32 %s33, 1
    %s35 = scalar_select %p32, %s33, %s34
    %p38 = pneg %p32
    %p39 = scmp.eq.s32.totalorder %s9, 1
    %p40 = por %p38, %p39
    %p41 = scmp.ne.s32.totalorder %s33, %s36
    %p42 = scmp.eq.s32.totalorder %s9, 0
    %p43 = por %p41, %p42
    %p44 = scmp.ne.s32.totalorder %s33, %s36
    %p45 = scmp.eq.s32.totalorder %s14, 1
    %p46 = por %p44, %p45
    %p47 = scmp.ne.s32.totalorder %s36, %s37
    %p48 = scmp.eq.s32.totalorder %s14, 0
    %p49 = por %p47, %p48
    %p50 = scmp.ne.s32.totalorder %s36, %s37
    %p51 = scmp.eq.s32.totalorder %s15, 1
    %p52 = por %p50, %p51
    %p54 = scmp.ne.s32.totalorder %s37, %s53
    %p55 = scmp.eq.s32.totalorder %s15, 0
    %p56 = por %p54, %p55
    %s58 = sadd.s32 %s57, 1
    %p61 = scmp.eq.s32.totalorder %s9, 1
    %p62 = scmp.ne.s32.totalorder %s57, %s59
    %p63 = scmp.eq.s32.totalorder %s9, 0
    %p64 = por %p62, %p63
    %p65 = scmp.ne.s32.totalorder %s57, %s59
    %p66 = scmp.eq.s32.totalorder %s14, 1
    %p67 = por %p65, %p66
    %p68 = scmp.ne.s32.totalorder %s59, %s60
    %p69 = scmp.eq.s32.totalorder %s14, 0
    %p70 = por %p68, %p69
    %p71 = scmp.ne.s32.totalorder %s59, %s60
    %p72 = scmp.eq.s32.totalorder %s15, 1
    %p73 = por %p71, %p72
    %p75 = scmp.ne.s32.totalorder %s60, %s74
    %p76 = scmp.eq.s32.totalorder %s15, 0
    %p77 = por %p75, %p76
    %s79 = sadd.s32 %s78, 1
    %p82 = scmp.eq.s32.totalorder %s9, 1
    %p83 = scmp.ne.s32.totalorder %s78, %s80
    %p84 = scmp.eq.s32.totalorder %s9, 0
    %p85 = por %p83, %p84
    %p86 = scmp.ne.s32.totalorder %s78, %s80
    %p87 = scmp.eq.s32.totalorder %s14, 1
    %p88 = por %p86, %p87
    %p89 = scmp.ne.s32.totalorder %s80, %s81
    %p90 = scmp.eq.s32.totalorder %s14, 0
    %p91 = por %p89, %p90
    %p92 = scmp.ne.s32.totalorder %s80, %s81
    %p93 = scmp.eq.s32.totalorder %s15, 1
    %p94 = por %p92, %p93
    %p96 = scmp.ne.s32.totalorder %s81, %s95
    %p97 = scmp.eq.s32.totalorder %s15, 0
    %p98 = por %p96, %p97
    %s99 = ssub.s32 %s16, %s28
    %s100 = ssub.s32 %s17, %s24
    %s101 = sor.u32 %s99, %s100
    %p102 = scmp.eq.s32.totalorder %s101, 0
    %s104 = sadd.s32 %s103, 1
    %s105 = scalar_select %p102, %s103, %s104
    %p108 = pneg %p102
    %p109 = scmp.eq.s32.totalorder %s9, 1
    %p110 = por %p108, %p109
    %p111 = scmp.ne.s32.totalorder %s103, %s106
    %p112 = scmp.eq.s32.totalorder %s9, 0
    %p113 = por %p111, %p112
    %p114 = scmp.ne.s32.totalorder %s103, %s106
    %p115 = scmp.eq.s32.totalorder %s14, 1
    %p116 = por %p114, %p115
    %p117 = scmp.ne.s32.totalorder %s106, %s107
    %p118 = scmp.eq.s32.totalorder %s14, 0
    %p119 = por %p117, %p118
    %p120 = scmp.ne.s32.totalorder %s106, %s107
    %p121 = scmp.eq.s32.totalorder %s15, 1
    %p122 = por %p120, %p121
    %p124 = scmp.ne.s32.totalorder %s107, %s123
    %p125 = scmp.eq.s32.totalorder %s15, 0
    %p126 = por %p124, %p125
    %p127 = scmp.le.s32.totalorder 1, %s9
    %p128 = scmp.lt.s32.totalorder %s9, 3
    %p129 = pnand %p127, %p128
    %p130 = pneg %p129
    // Predicated region
    $region9: #{_lambda_.17} parent=5 // pred_check
      _
    $region10: #{_lambda_.17} parent=5 // pred_check_branch
      %132 = sbr.rel (%p129) target = $region12
    $region11: #{_lambda_.17} parent=5 // pred_region
      %s133 = ssub.s32 %s9, 1
      // Predicated region
      $region13: #{_lambda_.17} parent=11 // pred_check
        %p134 = pneg %p70
      $region14: #{_lambda_.17} parent=11 // pred_check_branch
        %136 = sbr.rel (%p134) target = $region16
      $region15: #{_lambda_.17} parent=11 // pred_region
        _
      $region16: #{_lambda_.17} parent=11 // pred_fallthru
        _
      // Predicated region
      $region17: #{_lambda_.17} parent=11 // pred_check
        %p137 = pneg %p91
      $region18: #{_lambda_.17} parent=11 // pred_check_branch
        %139 = sbr.rel (%p137) target = $region20
      $region19: #{_lambda_.17} parent=11 // pred_region
        _
      $region20: #{_lambda_.17} parent=11 // pred_fallthru
        _
    $region12: #{_lambda_.17} parent=5 // pred_fallthru
      _
    %p140 = scmp.lt.s32.totalorder %s9, 2
    // Predicated region
    $region21: #{_lambda_.17} parent=5 // pred_check
      %p141 = pneg %p140
    $region22: #{_lambda_.17} parent=5 // pred_check_branch
      %143 = sbr.rel (%p141) target = $region24
    $region23: #{_lambda_.17} parent=5 // pred_region
      // Predicated region
      $region25: #{_lambda_.17} parent=23 // pred_check
        %p144 = pneg %p43
      $region26: #{_lambda_.17} parent=23 // pred_check_branch
        %146 = sbr.rel (%p144) target = $region28
      $region27: #{_lambda_.17} parent=23 // pred_region
        %s147 = smul.u32 8, %s17
        %p148 = scmp.lt.s32.totalorder %s16, 1
        %s149 = scalar_select %p148, %s16, 1
        %p150 = scmp.lt.s32.totalorder %s147, 7
        %s151 = scalar_select %p150, %s147, 7
        %s152 = smul.addr %s149, 8
        %s153 = sadd.s32 %s151, %s152
        %s154 = smul.addr %s153, 4
        %s155 = scalar_lea.vmem %s0, %s154
        %s156 = smul.u32 8, %s17
      $region28: #{_lambda_.17} parent=23 // pred_fallthru
        _
    $region24: #{_lambda_.17} parent=5 // pred_fallthru
      _
    %p157 = scmp.le.s32.totalorder 1, %s9
    %p158 = scmp.lt.s32.totalorder %s9, 3
    %p159 = pnand %p157, %p158
    %p160 = pneg %p159
    // Predicated region
    $region29: #{_lambda_.17} parent=5 // pred_check
      _
    $region30: #{_lambda_.17} parent=5 // pred_check_branch
      %162 = sbr.rel (%p159) target = $region32
    $region31: #{_lambda_.17} parent=5 // pred_region
      %s163 = ssub.s32 %s9, 1
      %s164 = smul.u32 8, %s19
      %p165 = scmp.lt.s32.totalorder %s18, 1
      %s166 = scalar_select %p165, %s18, 1
      %p167 = scmp.lt.s32.totalorder %s164, 7
      %s168 = scalar_select %p167, %s164, 7
      %s169 = smul.addr %s166, 8
      %s170 = sadd.s32 %s168, %s169
      %s171 = smul.addr %s170, 4
      %s172 = scalar_lea.vmem %s0, %s171
      %p173 = pneg %p49
      %p174 = pneg %p46
      %p175 = pneg %p70
      %p176 = pneg %p67
      %p177 = pneg %p91
      %p178 = pneg %p88
      %p179 = pneg %p119
      %p180 = pneg %p116
      %s181 = smul.u32 8, %s19
      %p182 = scmp.lt.s32.totalorder %s18, 1
      %s183 = scalar_select %p182, %s18, 1
      %p184 = scmp.lt.s32.totalorder %s181, 7
      %s185 = scalar_select %p184, %s181, 7
      %s186 = smul.addr %s183, 8
      %s187 = sadd.s32 %s185, %s186
      %s188 = smul.addr %s187, 4
      %s189 = scalar_lea.vmem %s3, %s188
      %s190 = smul.u32 8, %s19
      %p191 = scmp.lt.s32.totalorder %s18, 1
      %s192 = scalar_select %p191, %s18, 1
      %p193 = scmp.lt.s32.totalorder %s190, 7
      %s194 = scalar_select %p193, %s190, 7
      %s195 = smul.addr %s192, 8
      %s196 = sadd.s32 %s194, %s195
      %s197 = smul.addr %s196, 4
      %s198 = scalar_lea.vmem %s0, %s197
      %s199 = smul.u32 8, %s19
      %s200 = smul.u32 8, %s19
      %p201 = scmp.lt.s32.totalorder %s18, 1
      %s202 = scalar_select %p201, %s18, 1
      %p203 = scmp.lt.s32.totalorder %s200, 7
      %s204 = scalar_select %p203, %s200, 7
      %s205 = smul.addr %s202, 8
      %s206 = sadd.s32 %s204, %s205
      %s207 = smul.addr %s206, 4
      %s208 = scalar_lea.vmem %s3, %s207
      %s209 = smul.u32 8, %s19
      %v211 = vld [vmem:[%s198] sm:$0xf]
      %v212 = vld [vmem:[%s198 + $0x4] sm:$0xf]
      %v213 = vld [vmem:[%s198 + $0x8] sm:$0xf]
      %v214 = vld [vmem:[%s198 + $0xc] sm:$0xf]
      %v215 = vld [vmem:[%s198 + $0x10] sm:$0xf]
      %v216 = vld [vmem:[%s198 + $0x14] sm:$0xf]
      %v217 = vld [vmem:[%s198 + $0x18] sm:$0xf]
      %v218 = vld [vmem:[%s198 + $0x1c] sm:$0xf]
      %v219 = vld [vmem:[%s1] sm:$0xf]
      %v220 = vld [vmem:[%s1 + $0x4] sm:$0xf]
      %v221 = vld [vmem:[%s1 + $0x8] sm:$0xf]
      %v222 = vld [vmem:[%s1 + $0xc] sm:$0xf]
      %v223 = vld [vmem:[%s1 + $0x10] sm:$0xf]
      %v224 = vld [vmem:[%s1 + $0x14] sm:$0xf]
      %v225 = vld [vmem:[%s1 + $0x18] sm:$0xf]
      %v226 = vld [vmem:[%s1 + $0x1c] sm:$0xf]
      %v227 = vld [vmem:[%s1 + $0x20] sm:$0xf]
      %v228 = vld [vmem:[%s1 + $0x24] sm:$0xf]
      %v229 = vld [vmem:[%s1 + $0x28] sm:$0xf]
      %v230 = vld [vmem:[%s1 + $0x2c] sm:$0xf]
      %v231 = vld [vmem:[%s1 + $0x30] sm:$0xf]
      %v232 = vld [vmem:[%s1 + $0x34] sm:$0xf]
      %v233 = vld [vmem:[%s1 + $0x38] sm:$0xf]
      %v234 = vld [vmem:[%s1 + $0x3c] sm:$0xf]
      %v235 = vld [vmem:[%s2] sm:$0x1]
      %v237 = vlaneseq
      %v238 = vshrl.u32 %v237, 7
      %v239 = vsub.s32 0, %v238
      %v240 = vrot.slane %v235, %v239
      %v250 = vunpack.c.l.b16 %v211
      %v251 = vunpack.c.l.b16 %v212
      %v252 = vunpack.c.l.b16 %v213
      %v253 = vunpack.c.l.b16 %v214
      %v254 = vunpack.c.l.b16 %v215
      %v255 = vunpack.c.l.b16 %v216
      %v256 = vunpack.c.l.b16 %v217
      %v257 = vunpack.c.l.b16 %v218
      %v258 = vpack.c.b16 %v251, %v250
      %v259 = vpack.c.b16 %v253, %v252
      %v260 = vpack.c.b16 %v255, %v254
      %v261 = vpack.c.b16 %v257, %v256
      %v282 = vunpack.c.l.b16 %v219
      %v283 = vunpack.c.l.b16 %v220
      %v284 = vunpack.c.l.b16 %v221
      %v285 = vunpack.c.l.b16 %v222
      %v286 = vunpack.c.l.b16 %v223
      %v287 = vunpack.c.l.b16 %v224
      %v288 = vunpack.c.l.b16 %v225
      %v289 = vunpack.c.l.b16 %v226
      %v290 = vunpack.c.l.b16 %v227
      %v291 = vunpack.c.l.b16 %v228
      %v292 = vunpack.c.l.b16 %v229
      %v293 = vunpack.c.l.b16 %v230
      %v294 = vunpack.c.l.b16 %v231
      %v295 = vunpack.c.l.b16 %v232
      %v296 = vunpack.c.l.b16 %v233
      %v297 = vunpack.c.l.b16 %v234
      %v298 = vpack.c.b16 %v283, %v282
      %v299 = vpack.c.b16 %v285, %v284
      %v300 = vpack.c.b16 %v287, %v286
      %v301 = vpack.c.b16 %v289, %v288
      %v302 = vpack.c.b16 %v291, %v290
      %v303 = vpack.c.b16 %v293, %v292
      %v304 = vpack.c.b16 %v295, %v294
      %v305 = vpack.c.b16 %v297, %v296
      %314 = vmatprep.subr.bf16.mxu0 0
      %315 = vmatpush1.bf16.msra.mxu0 %v298
      %316 = vmatprep.subr.bf16.mxu0 0
      %317 = vmatpush1.bf16.msra.mxu0 %v299
      %318 = vmatprep.subr.bf16.mxu0 0
      %319 = vmatpush1.bf16.msra.mxu0 %v300
      %320 = vmatprep.subr.bf16.mxu0 0
      %321 = vmatpush1.bf16.msra.mxu0 %v301
      %322 = vmatprep.subr.bf16.mxu0 0
      %323 = vmatpush1.bf16.msra.mxu0 %v302
      %324 = vmatprep.subr.bf16.mxu0 0
      %325 = vmatpush1.bf16.msra.mxu0 %v303
      %326 = vmatprep.subr.bf16.mxu0 0
      %327 = vmatpush1.bf16.msra.mxu0 %v304
      %328 = vmatprep.subr.bf16.mxu0 0
      %329 = vmatpush1.bf16.msra.mxu0 %v305
      %330 = vmatprep.subr.bf16.mxu0 0
      %331 = vmatpush1.bf16.msra.mxu0 0
      %332 = vmatprep.subr.bf16.mxu0 0
      %333 = vmatpush1.bf16.msra.mxu0 0
      %334 = vmatprep.subr.bf16.mxu0 0
      %335 = vmatpush1.bf16.msra.mxu0 0
      %336 = vmatprep.subr.bf16.mxu0 0
      %337 = vmatpush1.bf16.msra.mxu0 0
      %338 = vmatprep.subr.bf16.mxu0 0
      %339 = vmatpush1.bf16.msra.mxu0 0
      %340 = vmatprep.subr.bf16.mxu0 0
      %341 = vmatpush1.bf16.msra.mxu0 0
      %342 = vmatprep.subr.bf16.mxu0 0
      %343 = vmatpush1.bf16.msra.mxu0 0
      %344 = vmatprep.subr.bf16.mxu0 0
      %345 = vmatpush1.bf16.msra.mxu0 0
      %346 = vmatprep.mubr.bf16.mxu0 0
      %347 = vmatmul.mubr.bf16.gmra.mrb[0].mxu0 %v258
      %v348 = vpop.f32.mrb[0].mxu0
      %v349 = vadd.f32 %v240, %v348
      %v350 = vpop.f32.mrb[0].mxu0
      %v351 = vpop.f32.mrb[0].mxu0
      %v352 = vadd.f32 %v240, %v351
      %v353 = vpop.f32.mrb[0].mxu0
      %354 = vmatprep.mubr.bf16.mxu0 0
      %355 = vmatmul.mubr.bf16.gmra.mrb[0].mxu0 %v259
      %v356 = vpop.f32.mrb[0].mxu0
      %v357 = vadd.f32 %v240, %v356
      %v358 = vpop.f32.mrb[0].mxu0
      %v359 = vpop.f32.mrb[0].mxu0
      %v360 = vadd.f32 %v240, %v359
      %v361 = vpop.f32.mrb[0].mxu0
      %362 = vmatprep.mubr.bf16.mxu0 0
      %363 = vmatmul.mubr.bf16.gmra.mrb[0].mxu0 %v260
      %v364 = vpop.f32.mrb[0].mxu0
      %v365 = vadd.f32 %v240, %v364
      %v366 = vpop.f32.mrb[0].mxu0
      %v367 = vpop.f32.mrb[0].mxu0
      %v368 = vadd.f32 %v240, %v367
      %v369 = vpop.f32.mrb[0].mxu0
      %370 = vmatprep.mubr.bf16.mxu0 0
      %371 = vmatmul.mubr.bf16.gmra.mrb[0].mxu0 %v261
      %v372 = vpop.f32.mrb[0].mxu0
      %v373 = vadd.f32 %v240, %v372
      %v374 = vpop.f32.mrb[0].mxu0
      %v375 = vpop.f32.mrb[0].mxu0
      %v376 = vadd.f32 %v240, %v375
      %v377 = vpop.f32.mrb[0].mxu0
      %378 = vdwg.mxu0
      %vm379 = vcmp.ge.f32.partialorder %v349, 0.0
      %vm380 = vcmp.ge.f32.partialorder %v352, 0.0
      %vm381 = vcmp.ge.f32.partialorder %v357, 0.0
      %vm382 = vcmp.ge.f32.partialorder %v360, 0.0
      %vm383 = vcmp.ge.f32.partialorder %v365, 0.0
      %vm384 = vcmp.ge.f32.partialorder %v368, 0.0
      %vm385 = vcmp.ge.f32.partialorder %v373, 0.0
      %vm386 = vcmp.ge.f32.partialorder %v376, 0.0
      %v387 = vmul.f32 %v349, 0.2
      %v388 = vmul.f32 %v352, 0.2
      %v389 = vmul.f32 %v357, 0.2
      %v390 = vmul.f32 %v360, 0.2
      %v391 = vmul.f32 %v365, 0.2
      %v392 = vmul.f32 %v368, 0.2
      %v393 = vmul.f32 %v373, 0.2
      %v394 = vmul.f32 %v376, 0.2
      %v395 = vsel %vm379, %v349, %v387
      %v396 = vsel %vm380, %v352, %v388
      %v397 = vsel %vm381, %v357, %v389
      %v398 = vsel %vm382, %v360, %v390
      %v399 = vsel %vm383, %v365, %v391
      %v400 = vsel %vm384, %v368, %v392
      %v401 = vsel %vm385, %v373, %v393
      %v402 = vsel %vm386, %v376, %v394
      %v403 = vpack.c.bf16 %v396, %v395
      %v404 = vpack.c.bf16 %v398, %v397
      %v405 = vpack.c.bf16 %v400, %v399
      %v406 = vpack.c.bf16 %v402, %v401
      %v411 = vunpack.c.l.b16 %v403
      %v412 = vunpack.c.h.b16 %v403
      %v413 = vunpack.c.l.b16 %v404
      %v414 = vunpack.c.h.b16 %v404
      %v415 = vunpack.c.l.b16 %v405
      %v416 = vunpack.c.h.b16 %v405
      %v417 = vunpack.c.l.b16 %v406
      %v418 = vunpack.c.h.b16 %v406
      %v419 = vpack.c.b16 %v411, %v411
      %v420 = vpack.c.b16 %v412, %v412
      %v421 = vpack.c.b16 %v413, %v413
      %v422 = vpack.c.b16 %v414, %v414
      %v423 = vpack.c.b16 %v415, %v415
      %v424 = vpack.c.b16 %v416, %v416
      %v425 = vpack.c.b16 %v417, %v417
      %v426 = vpack.c.b16 %v418, %v418
      %vm435 = vcmask 60416
      %436 = vst.msk [vmem:[%s208] sm:$0xf] %vm435, %v419
      %437 = vst.msk [vmem:[%s208 + $0x4] sm:$0xf] %vm435, %v420
      %438 = vst.msk [vmem:[%s208 + $0x8] sm:$0xf] %vm435, %v421
      %439 = vst.msk [vmem:[%s208 + $0xc] sm:$0xf] %vm435, %v422
      %440 = vst.msk [vmem:[%s208 + $0x10] sm:$0xf] %vm435, %v423
      %441 = vst.msk [vmem:[%s208 + $0x14] sm:$0xf] %vm435, %v424
      %442 = vst.msk [vmem:[%s208 + $0x18] sm:$0xf] %vm435, %v425
      %443 = vst.msk [vmem:[%s208 + $0x1c] sm:$0xf] %vm435, %v426
      %s444 = smul.u32 8, %s19
      %p445 = scmp.lt.s32.totalorder %s18, 1
      %s446 = scalar_select %p445, %s18, 1
      %p447 = scmp.lt.s32.totalorder %s444, 7
      %s448 = scalar_select %p447, %s444, 7
      %s449 = smul.addr %s446, 8
      %s450 = sadd.s32 %s448, %s449
      %s451 = smul.addr %s450, 4
      %s452 = scalar_lea.vmem %s3, %s451
      // Predicated region
      $region33: #{_lambda_.17} parent=31 // pred_check
        %p453 = pneg %p116
      $region34: #{_lambda_.17} parent=31 // pred_check_branch
        %455 = sbr.rel (%p453) target = $region36
      $region35: #{_lambda_.17} parent=31 // pred_region
        %s456 = smul.u32 8, %s19
      $region36: #{_lambda_.17} parent=31 // pred_fallthru
        _
    $region32: #{_lambda_.17} parent=5 // pred_fallthru
      _
    %p457 = scmp.le.s32.totalorder 2, %s9
    // Predicated region
    $region37: #{_lambda_.17} parent=5 // pred_check
      %p458 = pneg %p457
    $region38: #{_lambda_.17} parent=5 // pred_check_branch
      %460 = sbr.rel (%p458) target = $region40
    $region39: #{_lambda_.17} parent=5 // pred_region
      %s461 = ssub.s32 %s9, 2
      // Predicated region
      $region41: #{_lambda_.17} parent=39 // pred_check
        %p462 = pneg %p122
      $region42: #{_lambda_.17} parent=39 // pred_check_branch
        %464 = sbr.rel (%p462) target = $region44
      $region43: #{_lambda_.17} parent=39 // pred_region
        %s465 = smul.u32 8, %s21
        %p466 = scmp.lt.s32.totalorder %s20, 1
        %s467 = scalar_select %p466, %s20, 1
        %p468 = scmp.lt.s32.totalorder %s465, 7
        %s469 = scalar_select %p468, %s465, 7
        %s470 = smul.addr %s467, 8
        %s471 = sadd.s32 %s469, %s470
        %s472 = smul.addr %s471, 4
        %s473 = scalar_lea.vmem %s3, %s472
      $region44: #{_lambda_.17} parent=39 // pred_fallthru
        _
    $region40: #{_lambda_.17} parent=5 // pred_fallthru
      _
  $region6: #{_lambda_.17} parent=0 // loop_footer
    %s13 = sadd.s32 1, %s9
  $region7: #{_lambda_.17} parent=0 // loop_footer_branch
    %8 = sbr.rel target = $region3
  $region8: #{_lambda_.17} parent=0 // loop_exit
    _

// kernel: _lambda_.18
$region0: #{_lambda_.18}
  #allocation0 [shape = 'u32[]', space=smem, size = 0x4, offset = 0x4, fixed_abs, tag = 'smem constant byte address 0x4 - core index']
  #allocation1 [shape = 'u32[144,128]{1,0:T(1,128)}', space=vmem, size = 0x12000, scoped, tag = 'internal scratch']
  %s0 = inlined_call_operand.vmem [shape: bf16[2,16,128], index: 0, kind: input, shape index: {}]
  %s1 = inlined_call_operand.vmem [shape: bf16[128,16], index: 1, kind: input, shape index: {}]
  %s2 = inlined_call_operand.vmem [shape: f32[1,16], index: 2, kind: input, shape index: {}]
  %s3 = inlined_call_operand.vmem [shape: bf16[2,16,16], index: 3, kind: output, shape index: {0}]
  %s4 = inlined_call_operand.vmem [shape: f32[2,8,16], index: 4, kind: output, shape index: {1}]
  %5 = xla_tuple %s3, %s4
  %s6 = sld [smem:[#allocation0]]
  $region53: #{_lambda_.18} parent=0
    _
  %s8 = ssub.s32 1, %s6
  %s9 = scalar_select 0, %s8, %s6
  loop: start=0, step=1, limit=4
  $region2: #{_lambda_.18} parent=0 // loop_pre_header
    _
  $region3: #{_lambda_.18} parent=0 // loop_header
    %s11 = sphi 0, %s15
    %p12 = scmp.ge.s32.totalorder %s11, 4
    %s18 = sphi 0, %s30
    %s19 = sphi 0, %s26
    %s20 = sphi 0, %s18
    %s21 = sphi 0, %s19
    %s22 = sphi 0, %s20
    %s23 = sphi 0, %s21
    %s35 = sphi 0, %s37
    %s38 = sphi 0, %s35
    %s39 = sphi 0, %s38
    %s55 = sphi 0, %s39
    %s59 = sphi 0, %s59
    %s61 = sphi 0, %s59
    %s62 = sphi 0, %s61
    %s76 = sphi 0, %s62
    %s80 = sphi 0, %s80
    %s82 = sphi 0, %s80
    %s83 = sphi 0, %s82
    %s97 = sphi 0, %s83
    %s105 = sphi 0, %s107
    %s108 = sphi 0, %s105
    %s109 = sphi 0, %s108
    %s125 = sphi 0, %s109
    %s133 = sphi 0, %s135
    %s136 = sphi 0, %s133
    %s137 = sphi 0, %s136
    %s153 = sphi 0, %s137
  $region4: #{_lambda_.18} parent=0 // loop_header_branch
    %14 = sbr.rel (%p12) target = $region8
  $region5: #{_lambda_.18} parent=0 // loop_body
    %s16 = ssub.s32 %s11, 1
    %s17 = ssub.s32 %s11, 2
    %s24 = sadd.s32 1, %s19
    %p25 = scmp.ge.s32.totalorder %s24, 1
    %s26 = scalar_select %p25, 0, %s24
    %s27 = sadd.s32 1, %s18
    %s28 = scalar_select %p25, %s27, %s18
    %p29 = scmp.ge.s32.totalorder %s28, 2
    %s30 = scalar_select %p29, 0, %s28
    %s31 = ssub.s32 %s18, %s30
    %s32 = ssub.s32 %s19, %s26
    %s33 = sor.u32 %s31, %s32
    %p34 = scmp.eq.s32.totalorder %s33, 0
    %s36 = sadd.s32 %s35, 1
    %s37 = scalar_select %p34, %s35, %s36
    %p40 = pneg %p34
    %p41 = scmp.eq.s32.totalorder %s11, 1
    %p42 = por %p40, %p41
    %p43 = scmp.ne.s32.totalorder %s35, %s38
    %p44 = scmp.eq.s32.totalorder %s11, 0
    %p45 = por %p43, %p44
    %p46 = scmp.ne.s32.totalorder %s35, %s38
    %p47 = scmp.eq.s32.totalorder %s16, 1
    %p48 = por %p46, %p47
    %p49 = scmp.ne.s32.totalorder %s38, %s39
    %p50 = scmp.eq.s32.totalorder %s16, 0
    %p51 = por %p49, %p50
    %p52 = scmp.ne.s32.totalorder %s38, %s39
    %p53 = scmp.eq.s32.totalorder %s17, 1
    %p54 = por %p52, %p53
    %p56 = scmp.ne.s32.totalorder %s39, %s55
    %p57 = scmp.eq.s32.totalorder %s17, 0
    %p58 = por %p56, %p57
    %s60 = sadd.s32 %s59, 1
    %p63 = scmp.eq.s32.totalorder %s11, 1
    %p64 = scmp.ne.s32.totalorder %s59, %s61
    %p65 = scmp.eq.s32.totalorder %s11, 0
    %p66 = por %p64, %p65
    %p67 = scmp.ne.s32.totalorder %s59, %s61
    %p68 = scmp.eq.s32.totalorder %s16, 1
    %p69 = por %p67, %p68
    %p70 = scmp.ne.s32.totalorder %s61, %s62
    %p71 = scmp.eq.s32.totalorder %s16, 0
    %p72 = por %p70, %p71
    %p73 = scmp.ne.s32.totalorder %s61, %s62
    %p74 = scmp.eq.s32.totalorder %s17, 1
    %p75 = por %p73, %p74
    %p77 = scmp.ne.s32.totalorder %s62, %s76
    %p78 = scmp.eq.s32.totalorder %s17, 0
    %p79 = por %p77, %p78
    %s81 = sadd.s32 %s80, 1
    %p84 = scmp.eq.s32.totalorder %s11, 1
    %p85 = scmp.ne.s32.totalorder %s80, %s82
    %p86 = scmp.eq.s32.totalorder %s11, 0
    %p87 = por %p85, %p86
    %p88 = scmp.ne.s32.totalorder %s80, %s82
    %p89 = scmp.eq.s32.totalorder %s16, 1
    %p90 = por %p88, %p89
    %p91 = scmp.ne.s32.totalorder %s82, %s83
    %p92 = scmp.eq.s32.totalorder %s16, 0
    %p93 = por %p91, %p92
    %p94 = scmp.ne.s32.totalorder %s82, %s83
    %p95 = scmp.eq.s32.totalorder %s17, 1
    %p96 = por %p94, %p95
    %p98 = scmp.ne.s32.totalorder %s83, %s97
    %p99 = scmp.eq.s32.totalorder %s17, 0
    %p100 = por %p98, %p99
    %s101 = ssub.s32 %s18, %s30
    %s102 = ssub.s32 %s19, %s26
    %s103 = sor.u32 %s101, %s102
    %p104 = scmp.eq.s32.totalorder %s103, 0
    %s106 = sadd.s32 %s105, 1
    %s107 = scalar_select %p104, %s105, %s106
    %p110 = pneg %p104
    %p111 = scmp.eq.s32.totalorder %s11, 1
    %p112 = por %p110, %p111
    %p113 = scmp.ne.s32.totalorder %s105, %s108
    %p114 = scmp.eq.s32.totalorder %s11, 0
    %p115 = por %p113, %p114
    %p116 = scmp.ne.s32.totalorder %s105, %s108
    %p117 = scmp.eq.s32.totalorder %s16, 1
    %p118 = por %p116, %p117
    %p119 = scmp.ne.s32.totalorder %s108, %s109
    %p120 = scmp.eq.s32.totalorder %s16, 0
    %p121 = por %p119, %p120
    %p122 = scmp.ne.s32.totalorder %s108, %s109
    %p123 = scmp.eq.s32.totalorder %s17, 1
    %p124 = por %p122, %p123
    %p126 = scmp.ne.s32.totalorder %s109, %s125
    %p127 = scmp.eq.s32.totalorder %s17, 0
    %p128 = por %p126, %p127
    %s129 = ssub.s32 %s18, %s30
    %s130 = ssub.s32 %s19, %s26
    %s131 = sor.u32 %s129, %s130
    %p132 = scmp.eq.s32.totalorder %s131, 0
    %s134 = sadd.s32 %s133, 1
    %s135 = scalar_select %p132, %s133, %s134
    %p138 = pneg %p132
    %p139 = scmp.eq.s32.totalorder %s11, 1
    %p140 = por %p138, %p139
    %p141 = scmp.ne.s32.totalorder %s133, %s136
    %p142 = scmp.eq.s32.totalorder %s11, 0
    %p143 = por %p141, %p142
    %p144 = scmp.ne.s32.totalorder %s133, %s136
    %p145 = scmp.eq.s32.totalorder %s16, 1
    %p146 = por %p144, %p145
    %p147 = scmp.ne.s32.totalorder %s136, %s137
    %p148 = scmp.eq.s32.totalorder %s16, 0
    %p149 = por %p147, %p148
    %p150 = scmp.ne.s32.totalorder %s136, %s137
    %p151 = scmp.eq.s32.totalorder %s17, 1
    %p152 = por %p150, %p151
    %p154 = scmp.ne.s32.totalorder %s137, %s153
    %p155 = scmp.eq.s32.totalorder %s17, 0
    %p156 = por %p154, %p155
    %p157 = scmp.le.s32.totalorder 1, %s11
    %p158 = scmp.lt.s32.totalorder %s11, 3
    %p159 = pnand %p157, %p158
    %p160 = pneg %p159
    // Predicated region
    $region9: #{_lambda_.18} parent=5 // pred_check
      _
    $region10: #{_lambda_.18} parent=5 // pred_check_branch
      %162 = sbr.rel (%p159) target = $region12
    $region11: #{_lambda_.18} parent=5 // pred_region
      %s163 = ssub.s32 %s11, 1
      // Predicated region
      $region13: #{_lambda_.18} parent=11 // pred_check
        %p164 = pneg %p72
      $region14: #{_lambda_.18} parent=11 // pred_check_branch
        %166 = sbr.rel (%p164) target = $region16
      $region15: #{_lambda_.18} parent=11 // pred_region
        _
      $region16: #{_lambda_.18} parent=11 // pred_fallthru
        _
      // Predicated region
      $region17: #{_lambda_.18} parent=11 // pred_check
        %p167 = pneg %p93
      $region18: #{_lambda_.18} parent=11 // pred_check_branch
        %169 = sbr.rel (%p167) target = $region20
      $region19: #{_lambda_.18} parent=11 // pred_region
        _
      $region20: #{_lambda_.18} parent=11 // pred_fallthru
        _
    $region12: #{_lambda_.18} parent=5 // pred_fallthru
      _
    %p170 = scmp.lt.s32.totalorder %s11, 2
    // Predicated region
    $region21: #{_lambda_.18} parent=5 // pred_check
      %p171 = pneg %p170
    $region22: #{_lambda_.18} parent=5 // pred_check_branch
      %173 = sbr.rel (%p171) target = $region24
    $region23: #{_lambda_.18} parent=5 // pred_region
      // Predicated region
      $region25: #{_lambda_.18} parent=23 // pred_check
        %p174 = pneg %p45
      $region26: #{_lambda_.18} parent=23 // pred_check_branch
        %176 = sbr.rel (%p174) target = $region28
      $region27: #{_lambda_.18} parent=23 // pred_region
        %s177 = smul.u32 2, %s19
        %p178 = scmp.lt.s32.totalorder %s18, 1
        %s179 = scalar_select %p178, %s18, 1
        %p180 = scmp.lt.s32.totalorder %s177, 1
        %s181 = scalar_select %p180, %s177, 1
        %s182 = smul.addr %s179, 2
        %s183 = sadd.s32 %s181, %s182
        %s184 = smul.addr %s183, 4
        %s185 = scalar_lea.vmem %s0, %s184
        %s186 = smul.u32 2, %s19
      $region28: #{_lambda_.18} parent=23 // pred_fallthru
        _
    $region24: #{_lambda_.18} parent=5 // pred_fallthru
      _
    %p187 = scmp.le.s32.totalorder 1, %s11
    %p188 = scmp.lt.s32.totalorder %s11, 3
    %p189 = pnand %p187, %p188
    %p190 = pneg %p189
    // Predicated region
    $region29: #{_lambda_.18} parent=5 // pred_check
      _
    $region30: #{_lambda_.18} parent=5 // pred_check_branch
      %192 = sbr.rel (%p189) target = $region32
    $region31: #{_lambda_.18} parent=5 // pred_region
      %s193 = ssub.s32 %s11, 1
      %s194 = smul.u32 2, %s21
      %p195 = scmp.lt.s32.totalorder %s20, 1
      %s196 = scalar_select %p195, %s20, 1
      %p197 = scmp.lt.s32.totalorder %s194, 1
      %s198 = scalar_select %p197, %s194, 1
      %s199 = smul.addr %s196, 2
      %s200 = sadd.s32 %s198, %s199
      %s201 = smul.addr %s200, 4
      %s202 = scalar_lea.vmem %s0, %s201
      %p203 = pneg %p51
      %p204 = pneg %p48
      %p205 = pneg %p72
      %p206 = pneg %p69
      %p207 = pneg %p93
      %p208 = pneg %p90
      %p209 = pneg %p121
      %p210 = pneg %p118
      %s211 = smul.u32 2, %s21
      %p212 = scmp.lt.s32.totalorder %s20, 1
      %s213 = scalar_select %p212, %s20, 1
      %p214 = scmp.lt.s32.totalorder %s211, 1
      %s215 = scalar_select %p214, %s211, 1
      %s216 = smul.addr %s213, 2
      %s217 = sadd.s32 %s215, %s216
      %s218 = smul.addr %s217, 4
      %s219 = scalar_lea.vmem %s3, %s218
      %p220 = pneg %p149
      %p221 = pneg %p146
      %p222 = scmp.lt.s32.totalorder %s20, 1
      %s223 = scalar_select %p222, %s20, 1
      %p224 = scmp.lt.s32.totalorder %s21, 0
      %s225 = scalar_select %p224, %s21, 0
      %s226 = sadd.s32 %s225, %s223
      %s227 = smul.addr %s226, 8
      %s228 = scalar_lea.vmem %s4, %s227
      %s229 = smul.u32 2, %s21
      %p230 = scmp.lt.s32.totalorder %s20, 1
      %s231 = scalar_select %p230, %s20, 1
      %p232 = scmp.lt.s32.totalorder %s229, 1
      %s233 = scalar_select %p232, %s229, 1
      %s234 = smul.addr %s231, 2
      %s235 = sadd.s32 %s233, %s234
      %s236 = smul.addr %s235, 4
      %s237 = scalar_lea.vmem %s0, %s236
      %s238 = smul.u32 2, %s21
      %s239 = smul.u32 2, %s21
      %p240 = scmp.lt.s32.totalorder %s20, 1
      %s241 = scalar_select %p240, %s20, 1
      %p242 = scmp.lt.s32.totalorder %s239, 1
      %s243 = scalar_select %p242, %s239, 1
      %s244 = smul.addr %s241, 2
      %s245 = sadd.s32 %s243, %s244
      %s246 = smul.addr %s245, 4
      %s247 = scalar_lea.vmem %s3, %s246
      %s248 = smul.u32 2, %s21
      %p249 = scmp.lt.s32.totalorder %s20, 1
      %s250 = scalar_select %p249, %s20, 1
      %p251 = scmp.lt.s32.totalorder %s21, 0
      %s252 = scalar_select %p251, %s21, 0
      %s253 = sadd.s32 %s252, %s250
      %s254 = smul.addr %s253, 8
      %s255 = scalar_lea.vmem %s4, %s254
      %v257 = vld [vmem:[%s237] sm:$0xf]
      %v258 = vld [vmem:[%s237 + $0x4] sm:$0xf]
      %v259 = vld [vmem:[%s1] sm:$0xf]
      %v260 = vld [vmem:[%s1 + $0x4] sm:$0xf]
      %v261 = vld [vmem:[%s1 + $0x8] sm:$0xf]
      %v262 = vld [vmem:[%s1 + $0xc] sm:$0xf]
      %v263 = vld [vmem:[%s1 + $0x10] sm:$0xf]
      %v264 = vld [vmem:[%s1 + $0x14] sm:$0xf]
      %v265 = vld [vmem:[%s1 + $0x18] sm:$0xf]
      %v266 = vld [vmem:[%s1 + $0x1c] sm:$0xf]
      %v267 = vld [vmem:[%s1 + $0x20] sm:$0xf]
      %v268 = vld [vmem:[%s1 + $0x24] sm:$0xf]
      %v269 = vld [vmem:[%s1 + $0x28] sm:$0xf]
      %v270 = vld [vmem:[%s1 + $0x2c] sm:$0xf]
      %v271 = vld [vmem:[%s1 + $0x30] sm:$0xf]
      %v272 = vld [vmem:[%s1 + $0x34] sm:$0xf]
      %v273 = vld [vmem:[%s1 + $0x38] sm:$0xf]
      %v274 = vld [vmem:[%s1 + $0x3c] sm:$0xf]
      %v277 = vunpack.c.l.b16 %v257
      %v278 = vunpack.c.l.b16 %v258
      %v279 = vpack.c.b16 %v278, %v277
      %v297 = vunpack.c.l.b16 %v259
      %v298 = vunpack.c.l.b16 %v260
      %v299 = vunpack.c.l.b16 %v261
      %v300 = vunpack.c.l.b16 %v262
      %v301 = vunpack.c.l.b16 %v263
      %v302 = vunpack.c.l.b16 %v264
      %v303 = vunpack.c.l.b16 %v265
      %v304 = vunpack.c.l.b16 %v266
      %v305 = vunpack.c.l.b16 %v267
      %v306 = vunpack.c.l.b16 %v268
      %v307 = vunpack.c.l.b16 %v269
      %v308 = vunpack.c.l.b16 %v270
      %v309 = vunpack.c.l.b16 %v271
      %v310 = vunpack.c.l.b16 %v272
      %v311 = vunpack.c.l.b16 %v273
      %v312 = vunpack.c.l.b16 %v274
      %v313 = vpack.c.b16 %v298, %v297
      %v314 = vpack.c.b16 %v300, %v299
      %v315 = vpack.c.b16 %v302, %v301
      %v316 = vpack.c.b16 %v304, %v303
      %v317 = vpack.c.b16 %v306, %v305
      %v318 = vpack.c.b16 %v308, %v307
      %v319 = vpack.c.b16 %v310, %v309
      %v320 = vpack.c.b16 %v312, %v311
      %329 = vmatprep.subr.bf16.mxu0 0
      %330 = vmatpush1.bf16.msra.mxu0 %v313
      %331 = vmatprep.subr.bf16.mxu0 0
      %332 = vmatpush1.bf16.msra.mxu0 %v314
      %333 = vmatprep.subr.bf16.mxu0 0
      %334 = vmatpush1.bf16.msra.mxu0 %v315
      %335 = vmatprep.subr.bf16.mxu0 0
      %336 = vmatpush1.bf16.msra.mxu0 %v316
      %337 = vmatprep.subr.bf16.mxu0 0
      %338 = vmatpush1.bf16.msra.mxu0 %v317
      %339 = vmatprep.subr.bf16.mxu0 0
      %340 = vmatpush1.bf16.msra.mxu0 %v318
      %341 = vmatprep.subr.bf16.mxu0 0
      %342 = vmatpush1.bf16.msra.mxu0 %v319
      %343 = vmatprep.subr.bf16.mxu0 0
      %344 = vmatpush1.bf16.msra.mxu0 %v320
      %345 = vmatprep.subr.bf16.mxu0 0
      %346 = vmatpush1.bf16.msra.mxu0 0
      %347 = vmatprep.subr.bf16.mxu0 0
      %348 = vmatpush1.bf16.msra.mxu0 0
      %349 = vmatprep.subr.bf16.mxu0 0
      %350 = vmatpush1.bf16.msra.mxu0 0
      %351 = vmatprep.subr.bf16.mxu0 0
      %352 = vmatpush1.bf16.msra.mxu0 0
      %353 = vmatprep.subr.bf16.mxu0 0
      %354 = vmatpush1.bf16.msra.mxu0 0
      %355 = vmatprep.subr.bf16.mxu0 0
      %356 = vmatpush1.bf16.msra.mxu0 0
      %357 = vmatprep.subr.bf16.mxu0 0
      %358 = vmatpush1.bf16.msra.mxu0 0
      %359 = vmatprep.subr.bf16.mxu0 0
      %360 = vmatpush1.bf16.msra.mxu0 0
      %361 = vmatprep.mubr.bf16.mxu0 0
      %362 = vmatmul.mubr.bf16.gmra.mrb[0].mxu0 %v279
      %v363 = vpop.f32.mrb[0].mxu0
      %v364 = vadd.f32 0.0, %v363
      %v365 = vpop.f32.mrb[0].mxu0
      %v366 = vpop.f32.mrb[0].mxu0
      %v367 = vadd.f32 0.0, %v366
      %v368 = vpop.f32.mrb[0].mxu0
      %369 = vdwg.mxu0
      %v370 = vpack.c.bf16 %v367, %v364
      %v372 = vunpack.c.l.b16 %v370
      %v373 = vunpack.c.h.b16 %v370
      %v374 = vpack.c.b16 %v372, %v372
      %v375 = vpack.c.b16 %v373, %v373
      %vm378 = vcmask 125952
      %379 = vst.msk [vmem:[%s247] sm:$0xf] %vm378, %v374
      %380 = vst.msk [vmem:[%s247 + $0x4] sm:$0xf] %vm378, %v375
      %vm381 = vcmask 130048
      %v382 = vsel %vm381, %v364, 0.0
      %v383 = vsel %vm381, %v367, 0.0
      %v384 = vadd.f32 %v382, %v383
      %v385 = vrot.slane %v384, 4
      %v386 = vadd.f32 %v384, %v385
      %v387 = vrot.slane %v386, 2
      %v388 = vadd.f32 %v386, %v387
      %v389 = vrot.slane %v388, 1
      %v390 = vadd.f32 %v388, %v389
      %v391 = vmul.f32 %v364, %v364
      %v392 = vmul.f32 %v367, %v367
      %v393 = vsel %vm381, %v391, 0.0
      %v394 = vsel %vm381, %v392, 0.0
      %v395 = vadd.f32 %v393, %v394
      %v396 = vrot.slane %v395, 4
      %v397 = vadd.f32 %v395, %v396
      %v398 = vrot.slane %v397, 2
      %v399 = vadd.f32 %v397, %v398
      %v400 = vrot.slane %v399, 1
      %v401 = vadd.f32 %v399, %v400
      %v402 = vlaneseq
      %v403 = vshrl.u32 %v402, 7
      %vm404 = vcmp.eq.s32.totalorder %v403, 0
      %vm405 = vcmp.eq.s32.totalorder %v403, 1
      %v406 = vsel %vm405, %v401, 0.0
      %v407 = vsel %vm404, %v390, %v406
      %408 = vst.msk [vmem:[%s255] sm:$0xff] %vm381, %v407
      %s409 = smul.u32 2, %s21
      %p410 = scmp.lt.s32.totalorder %s20, 1
      %s411 = scalar_select %p410, %s20, 1
      %p412 = scmp.lt.s32.totalorder %s409, 1
      %s413 = scalar_select %p412, %s409, 1
      %s414 = smul.addr %s411, 2
      %s415 = sadd.s32 %s413, %s414
      %s416 = smul.addr %s415, 4
      %s417 = scalar_lea.vmem %s3, %s416
      %p418 = scmp.lt.s32.totalorder %s20, 1
      %s419 = scalar_select %p418, %s20, 1
      %p420 = scmp.lt.s32.totalorder %s21, 0
      %s421 = scalar_select %p420, %s21, 0
      %s422 = sadd.s32 %s421, %s419
      %s423 = smul.addr %s422, 8
      %s424 = scalar_lea.vmem %s4, %s423
      // Predicated region
      $region33: #{_lambda_.18} parent=31 // pred_check
        %p425 = pneg %p118
      $region34: #{_lambda_.18} parent=31 // pred_check_branch
        %427 = sbr.rel (%p425) target = $region36
      $region35: #{_lambda_.18} parent=31 // pred_region
        %s428 = smul.u32 2, %s21
      $region36: #{_lambda_.18} parent=31 // pred_fallthru
        _
      // Predicated region
      $region37: #{_lambda_.18} parent=31 // pred_check
        %p429 = pneg %p146
      $region38: #{_lambda_.18} parent=31 // pred_check_branch
        %431 = sbr.rel (%p429) target = $region40
      $region39: #{_lambda_.18} parent=31 // pred_region
        _
      $region40: #{_lambda_.18} parent=31 // pred_fallthru
        _
    $region32: #{_lambda_.18} parent=5 // pred_fallthru
      _
    %p432 = scmp.le.s32.totalorder 2, %s11
    // Predicated region
    $region41: #{_lambda_.18} parent=5 // pred_check
      %p433 = pneg %p432
    $region42: #{_lambda_.18} parent=5 // pred_check_branch
      %435 = sbr.rel (%p433) target = $region44
    $region43: #{_lambda_.18} parent=5 // pred_region
      %s436 = ssub.s32 %s11, 2
      // Predicated region
      $region45: #{_lambda_.18} parent=43 // pred_check
        %p437 = pneg %p124
      $region46: #{_lambda_.18} parent=43 // pred_check_branch
        %439 = sbr.rel (%p437) target = $region48
      $region47: #{_lambda_.18} parent=43 // pred_region
        %s440 = smul.u32 2, %s23
        %p441 = scmp.lt.s32.totalorder %s22, 1
        %s442 = scalar_select %p441, %s22, 1
        %p443 = scmp.lt.s32.totalorder %s440, 1
        %s444 = scalar_select %p443, %s440, 1
        %s445 = smul.addr %s442, 2
        %s446 = sadd.s32 %s444, %s445
        %s447 = smul.addr %s446, 4
        %s448 = scalar_lea.vmem %s3, %s447
      $region48: #{_lambda_.18} parent=43 // pred_fallthru
        _
      // Predicated region
      $region49: #{_lambda_.18} parent=43 // pred_check
        %p449 = pneg %p152
      $region50: #{_lambda_.18} parent=43 // pred_check_branch
        %451 = sbr.rel (%p449) target = $region52
      $region51: #{_lambda_.18} parent=43 // pred_region
        %p452 = scmp.lt.s32.totalorder %s22, 1
        %s453 = scalar_select %p452, %s22, 1
        %p454 = scmp.lt.s32.totalorder %s23, 0
        %s455 = scalar_select %p454, %s23, 0
        %s456 = sadd.s32 %s455, %s453
        %s457 = smul.addr %s456, 8
        %s458 = scalar_lea.vmem %s4, %s457
      $region52: #{_lambda_.18} parent=43 // pred_fallthru
        _
    $region44: #{_lambda_.18} parent=5 // pred_fallthru
      _
  $region6: #{_lambda_.18} parent=0 // loop_footer
    %s15 = sadd.s32 1, %s11
  $region7: #{_lambda_.18} parent=0 // loop_footer_branch
    %10 = sbr.rel target = $region3
  $region8: #{_lambda_.18} parent=0 // loop_exit
    _

// kernel: _lambda_.20
$region0: #{_lambda_.20}
  #allocation0 [shape = 'u32[]', space=smem, size = 0x4, offset = 0x4, fixed_abs, tag = 'smem constant byte address 0x4 - core index']
  #allocation1 [shape = 'u32[144,128]{1,0:T(1,128)}', space=vmem, size = 0x12000, scoped, tag = 'internal scratch']
  #allocation2 [shape = 'f32[1,1]{1,0:T(1,128)S(1)}', space=vmem, size = 0x200, scoped, tag = 'scoped memory for _lambda_.20']
  %s0 = inlined_call_operand.vmem [shape: bf16[2,16,512], index: 0, kind: input, shape index: {}]
  %s1 = inlined_call_operand.vmem [shape: bf16[512,1], index: 1, kind: input, shape index: {}]
  %s2 = inlined_call_operand.<no memory space> [shape: f32[1,1], index: 2, kind: input, shape index: {}]
  %s3 = inlined_call_operand.vmem [shape: f32[2,16,1], index: 3, kind: output, shape index: {}]
  %s4 = sld [smem:[#allocation0]]
  $region45: #{_lambda_.20} parent=0
    _
  %s6 = ssub.s32 1, %s4
  %s7 = scalar_select 0, %s6, %s4
  %v8 = vstv %s2
  %9 = vst [vmem:[#allocation2] sm:$0x1] %v8
  loop: start=0, step=1, limit=4
  $region2: #{_lambda_.20} parent=0 // loop_pre_header
    _
  $region3: #{_lambda_.20} parent=0 // loop_header
    %s11 = sphi 0, %s15
    %p12 = scmp.ge.s32.totalorder %s11, 4
    %s18 = sphi 0, %s30
    %s19 = sphi 0, %s26
    %s20 = sphi 0, %s18
    %s21 = sphi 0, %s19
    %s22 = sphi 0, %s20
    %s23 = sphi 0, %s21
    %s35 = sphi 0, %s37
    %s38 = sphi 0, %s35
    %s39 = sphi 0, %s38
    %s55 = sphi 0, %s39
    %s59 = sphi 0, %s59
    %s61 = sphi 0, %s59
    %s62 = sphi 0, %s61
    %s76 = sphi 0, %s62
    %s80 = sphi 0, %s80
    %s82 = sphi 0, %s80
    %s83 = sphi 0, %s82
    %s97 = sphi 0, %s83
    %s105 = sphi 0, %s107
    %s108 = sphi 0, %s105
    %s109 = sphi 0, %s108
    %s125 = sphi 0, %s109
  $region4: #{_lambda_.20} parent=0 // loop_header_branch
    %14 = sbr.rel (%p12) target = $region8
  $region5: #{_lambda_.20} parent=0 // loop_body
    %s16 = ssub.s32 %s11, 1
    %s17 = ssub.s32 %s11, 2
    %s24 = sadd.s32 1, %s19
    %p25 = scmp.ge.s32.totalorder %s24, 1
    %s26 = scalar_select %p25, 0, %s24
    %s27 = sadd.s32 1, %s18
    %s28 = scalar_select %p25, %s27, %s18
    %p29 = scmp.ge.s32.totalorder %s28, 2
    %s30 = scalar_select %p29, 0, %s28
    %s31 = ssub.s32 %s18, %s30
    %s32 = ssub.s32 %s19, %s26
    %s33 = sor.u32 %s31, %s32
    %p34 = scmp.eq.s32.totalorder %s33, 0
    %s36 = sadd.s32 %s35, 1
    %s37 = scalar_select %p34, %s35, %s36
    %p40 = pneg %p34
    %p41 = scmp.eq.s32.totalorder %s11, 1
    %p42 = por %p40, %p41
    %p43 = scmp.ne.s32.totalorder %s35, %s38
    %p44 = scmp.eq.s32.totalorder %s11, 0
    %p45 = por %p43, %p44
    %p46 = scmp.ne.s32.totalorder %s35, %s38
    %p47 = scmp.eq.s32.totalorder %s16, 1
    %p48 = por %p46, %p47
    %p49 = scmp.ne.s32.totalorder %s38, %s39
    %p50 = scmp.eq.s32.totalorder %s16, 0
    %p51 = por %p49, %p50
    %p52 = scmp.ne.s32.totalorder %s38, %s39
    %p53 = scmp.eq.s32.totalorder %s17, 1
    %p54 = por %p52, %p53
    %p56 = scmp.ne.s32.totalorder %s39, %s55
    %p57 = scmp.eq.s32.totalorder %s17, 0
    %p58 = por %p56, %p57
    %s60 = sadd.s32 %s59, 1
    %p63 = scmp.eq.s32.totalorder %s11, 1
    %p64 = scmp.ne.s32.totalorder %s59, %s61
    %p65 = scmp.eq.s32.totalorder %s11, 0
    %p66 = por %p64, %p65
    %p67 = scmp.ne.s32.totalorder %s59, %s61
    %p68 = scmp.eq.s32.totalorder %s16, 1
    %p69 = por %p67, %p68
    %p70 = scmp.ne.s32.totalorder %s61, %s62
    %p71 = scmp.eq.s32.totalorder %s16, 0
    %p72 = por %p70, %p71
    %p73 = scmp.ne.s32.totalorder %s61, %s62
    %p74 = scmp.eq.s32.totalorder %s17, 1
    %p75 = por %p73, %p74
    %p77 = scmp.ne.s32.totalorder %s62, %s76
    %p78 = scmp.eq.s32.totalorder %s17, 0
    %p79 = por %p77, %p78
    %s81 = sadd.s32 %s80, 1
    %p84 = scmp.eq.s32.totalorder %s11, 1
    %p85 = scmp.ne.s32.totalorder %s80, %s82
    %p86 = scmp.eq.s32.totalorder %s11, 0
    %p87 = por %p85, %p86
    %p88 = scmp.ne.s32.totalorder %s80, %s82
    %p89 = scmp.eq.s32.totalorder %s16, 1
    %p90 = por %p88, %p89
    %p91 = scmp.ne.s32.totalorder %s82, %s83
    %p92 = scmp.eq.s32.totalorder %s16, 0
    %p93 = por %p91, %p92
    %p94 = scmp.ne.s32.totalorder %s82, %s83
    %p95 = scmp.eq.s32.totalorder %s17, 1
    %p96 = por %p94, %p95
    %p98 = scmp.ne.s32.totalorder %s83, %s97
    %p99 = scmp.eq.s32.totalorder %s17, 0
    %p100 = por %p98, %p99
    %s101 = ssub.s32 %s18, %s30
    %s102 = ssub.s32 %s19, %s26
    %s103 = sor.u32 %s101, %s102
    %p104 = scmp.eq.s32.totalorder %s103, 0
    %s106 = sadd.s32 %s105, 1
    %s107 = scalar_select %p104, %s105, %s106
    %p110 = pneg %p104
    %p111 = scmp.eq.s32.totalorder %s11, 1
    %p112 = por %p110, %p111
    %p113 = scmp.ne.s32.totalorder %s105, %s108
    %p114 = scmp.eq.s32.totalorder %s11, 0
    %p115 = por %p113, %p114
    %p116 = scmp.ne.s32.totalorder %s105, %s108
    %p117 = scmp.eq.s32.totalorder %s16, 1
    %p118 = por %p116, %p117
    %p119 = scmp.ne.s32.totalorder %s108, %s109
    %p120 = scmp.eq.s32.totalorder %s16, 0
    %p121 = por %p119, %p120
    %p122 = scmp.ne.s32.totalorder %s108, %s109
    %p123 = scmp.eq.s32.totalorder %s17, 1
    %p124 = por %p122, %p123
    %p126 = scmp.ne.s32.totalorder %s109, %s125
    %p127 = scmp.eq.s32.totalorder %s17, 0
    %p128 = por %p126, %p127
    %p129 = scmp.le.s32.totalorder 1, %s11
    %p130 = scmp.lt.s32.totalorder %s11, 3
    %p131 = pnand %p129, %p130
    %p132 = pneg %p131
    // Predicated region
    $region9: #{_lambda_.20} parent=5 // pred_check
      _
    $region10: #{_lambda_.20} parent=5 // pred_check_branch
      %134 = sbr.rel (%p131) target = $region12
    $region11: #{_lambda_.20} parent=5 // pred_region
      %s135 = ssub.s32 %s11, 1
      // Predicated region
      $region13: #{_lambda_.20} parent=11 // pred_check
        %p136 = pneg %p72
      $region14: #{_lambda_.20} parent=11 // pred_check_branch
        %138 = sbr.rel (%p136) target = $region16
      $region15: #{_lambda_.20} parent=11 // pred_region
        _
      $region16: #{_lambda_.20} parent=11 // pred_fallthru
        _
      // Predicated region
      $region17: #{_lambda_.20} parent=11 // pred_check
        %p139 = pneg %p93
      $region18: #{_lambda_.20} parent=11 // pred_check_branch
        %141 = sbr.rel (%p139) target = $region20
      $region19: #{_lambda_.20} parent=11 // pred_region
        _
      $region20: #{_lambda_.20} parent=11 // pred_fallthru
        _
    $region12: #{_lambda_.20} parent=5 // pred_fallthru
      _
    %p142 = scmp.lt.s32.totalorder %s11, 2
    // Predicated region
    $region21: #{_lambda_.20} parent=5 // pred_check
      %p143 = pneg %p142
    $region22: #{_lambda_.20} parent=5 // pred_check_branch
      %145 = sbr.rel (%p143) target = $region24
    $region23: #{_lambda_.20} parent=5 // pred_region
      // Predicated region
      $region25: #{_lambda_.20} parent=23 // pred_check
        %p146 = pneg %p45
      $region26: #{_lambda_.20} parent=23 // pred_check_branch
        %148 = sbr.rel (%p146) target = $region28
      $region27: #{_lambda_.20} parent=23 // pred_region
        %s149 = smul.u32 2, %s19
        %p150 = scmp.lt.s32.totalorder %s18, 1
        %s151 = scalar_select %p150, %s18, 1
        %p152 = scmp.lt.s32.totalorder %s149, 1
        %s153 = scalar_select %p152, %s149, 1
        %s154 = smul.addr %s153, 4
        %s155 = smul.addr %s151, 8
        %s156 = sadd.s32 %s154, %s155
        %s157 = smul.addr %s156, 4
        %s158 = scalar_lea.vmem %s0, %s157
        %s159 = smul.u32 2, %s19
      $region28: #{_lambda_.20} parent=23 // pred_fallthru
        _
    $region24: #{_lambda_.20} parent=5 // pred_fallthru
      _
    %p160 = scmp.le.s32.totalorder 1, %s11
    %p161 = scmp.lt.s32.totalorder %s11, 3
    %p162 = pnand %p160, %p161
    %p163 = pneg %p162
    // Predicated region
    $region29: #{_lambda_.20} parent=5 // pred_check
      _
    $region30: #{_lambda_.20} parent=5 // pred_check_branch
      %165 = sbr.rel (%p162) target = $region32
    $region31: #{_lambda_.20} parent=5 // pred_region
      %s166 = ssub.s32 %s11, 1
      %s167 = smul.u32 2, %s21
      %p168 = scmp.lt.s32.totalorder %s20, 1
      %s169 = scalar_select %p168, %s20, 1
      %p170 = scmp.lt.s32.totalorder %s167, 1
      %s171 = scalar_select %p170, %s167, 1
      %s172 = smul.addr %s171, 4
      %s173 = smul.addr %s169, 8
      %s174 = sadd.s32 %s172, %s173
      %s175 = smul.addr %s174, 4
      %s176 = scalar_lea.vmem %s0, %s175
      %p177 = pneg %p51
      %p178 = pneg %p48
      %p179 = pneg %p72
      %p180 = pneg %p69
      %p181 = pneg %p93
      %p182 = pneg %p90
      %p183 = pneg %p121
      %p184 = pneg %p118
      %s185 = smul.u32 2, %s21
      %p186 = scmp.lt.s32.totalorder %s20, 1
      %s187 = scalar_select %p186, %s20, 1
      %p188 = scmp.lt.s32.totalorder %s185, 1
      %s189 = scalar_select %p188, %s185, 1
      %s190 = smul.addr %s187, 2
      %s191 = sadd.s32 %s189, %s190
      %s192 = smul.addr %s191, 8
      %s193 = scalar_lea.vmem %s3, %s192
      %s194 = smul.u32 2, %s21
      %p195 = scmp.lt.s32.totalorder %s20, 1
      %s196 = scalar_select %p195, %s20, 1
      %p197 = scmp.lt.s32.totalorder %s194, 1
      %s198 = scalar_select %p197, %s194, 1
      %s199 = smul.addr %s198, 4
      %s200 = smul.addr %s196, 8
      %s201 = sadd.s32 %s199, %s200
      %s202 = smul.addr %s201, 4
      %s203 = scalar_lea.vmem %s0, %s202
      %s204 = smul.u32 2, %s21
      %s205 = smul.u32 2, %s21
      %p206 = scmp.lt.s32.totalorder %s20, 1
      %s207 = scalar_select %p206, %s20, 1
      %p208 = scmp.lt.s32.totalorder %s205, 1
      %s209 = scalar_select %p208, %s205, 1
      %s210 = smul.addr %s207, 2
      %s211 = sadd.s32 %s209, %s210
      %s212 = smul.addr %s211, 8
      %s213 = scalar_lea.vmem %s3, %s212
      %s214 = smul.u32 2, %s21
      %v216 = vld [vmem:[%s203] sm:$0xff]
      %v217 = vld [vmem:[%s203 + $0x8] sm:$0xff]
      %v218 = vld [vmem:[%s203 + $0x10] sm:$0xff]
      %v219 = vld [vmem:[%s203 + $0x18] sm:$0xff]
      %v220 = vld [vmem:[%s1] sm:$0xf]
      %v221 = vld [vmem:[%s1 + $0x4] sm:$0xf]
      %v222 = vld [vmem:[%s1 + $0x8] sm:$0xf]
      %v223 = vld [vmem:[%s1 + $0xc] sm:$0xf]
      %v224 = vld [vmem:[%s1 + $0x10] sm:$0xf]
      %v225 = vld [vmem:[%s1 + $0x14] sm:$0xf]
      %v226 = vld [vmem:[%s1 + $0x18] sm:$0xf]
      %v227 = vld [vmem:[%s1 + $0x1c] sm:$0xf]
      %v228 = vld [vmem:[%s1 + $0x20] sm:$0xf]
      %v229 = vld [vmem:[%s1 + $0x24] sm:$0xf]
      %v230 = vld [vmem:[%s1 + $0x28] sm:$0xf]
      %v231 = vld [vmem:[%s1 + $0x2c] sm:$0xf]
      %v232 = vld [vmem:[%s1 + $0x30] sm:$0xf]
      %v233 = vld [vmem:[%s1 + $0x34] sm:$0xf]
      %v234 = vld [vmem:[%s1 + $0x38] sm:$0xf]
      %v235 = vld [vmem:[%s1 + $0x3c] sm:$0xf]
      %v236 = vld [vmem:[%s1 + $0x40] sm:$0xf]
      %v237 = vld [vmem:[%s1 + $0x44] sm:$0xf]
      %v238 = vld [vmem:[%s1 + $0x48] sm:$0xf]
      %v239 = vld [vmem:[%s1 + $0x4c] sm:$0xf]
      %v240 = vld [vmem:[%s1 + $0x50] sm:$0xf]
      %v241 = vld [vmem:[%s1 + $0x54] sm:$0xf]
      %v242 = vld [vmem:[%s1 + $0x58] sm:$0xf]
      %v243 = vld [vmem:[%s1 + $0x5c] sm:$0xf]
      %v244 = vld [vmem:[%s1 + $0x60] sm:$0xf]
      %v245 = vld [vmem:[%s1 + $0x64] sm:$0xf]
      %v246 = vld [vmem:[%s1 + $0x68] sm:$0xf]
      %v247 = vld [vmem:[%s1 + $0x6c] sm:$0xf]
      %v248 = vld [vmem:[%s1 + $0x70] sm:$0xf]
      %v249 = vld [vmem:[%s1 + $0x74] sm:$0xf]
      %v250 = vld [vmem:[%s1 + $0x78] sm:$0xf]
      %v251 = vld [vmem:[%s1 + $0x7c] sm:$0xf]
      %v252 = vld [vmem:[%s1 + $0x80] sm:$0xf]
      %v253 = vld [vmem:[%s1 + $0x84] sm:$0xf]
      %v254 = vld [vmem:[%s1 + $0x88] sm:$0xf]
      %v255 = vld [vmem:[%s1 + $0x8c] sm:$0xf]
      %v256 = vld [vmem:[%s1 + $0x90] sm:$0xf]
      %v257 = vld [vmem:[%s1 + $0x94] sm:$0xf]
      %v258 = vld [vmem:[%s1 + $0x98] sm:$0xf]
      %v259 = vld [vmem:[%s1 + $0x9c] sm:$0xf]
      %v260 = vld [vmem:[%s1 + $0xa0] sm:$0xf]
      %v261 = vld [vmem:[%s1 + $0xa4] sm:$0xf]
      %v262 = vld [vmem:[%s1 + $0xa8] sm:$0xf]
      %v263 = vld [vmem:[%s1 + $0xac] sm:$0xf]
      %v264 = vld [vmem:[%s1 + $0xb0] sm:$0xf]
      %v265 = vld [vmem:[%s1 + $0xb4] sm:$0xf]
      %v266 = vld [vmem:[%s1 + $0xb8] sm:$0xf]
      %v267 = vld [vmem:[%s1 + $0xbc] sm:$0xf]
      %v268 = vld [vmem:[%s1 + $0xc0] sm:$0xf]
      %v269 = vld [vmem:[%s1 + $0xc4] sm:$0xf]
      %v270 = vld [vmem:[%s1 + $0xc8] sm:$0xf]
      %v271 = vld [vmem:[%s1 + $0xcc] sm:$0xf]
      %v272 = vld [vmem:[%s1 + $0xd0] sm:$0xf]
      %v273 = vld [vmem:[%s1 + $0xd4] sm:$0xf]
      %v274 = vld [vmem:[%s1 + $0xd8] sm:$0xf]
      %v275 = vld [vmem:[%s1 + $0xdc] sm:$0xf]
      %v276 = vld [vmem:[%s1 + $0xe0] sm:$0xf]
      %v277 = vld [vmem:[%s1 + $0xe4] sm:$0xf]
      %v278 = vld [vmem:[%s1 + $0xe8] sm:$0xf]
      %v279 = vld [vmem:[%s1 + $0xec] sm:$0xf]
      %v280 = vld [vmem:[%s1 + $0xf0] sm:$0xf]
      %v281 = vld [vmem:[%s1 + $0xf4] sm:$0xf]
      %v282 = vld [vmem:[%s1 + $0xf8] sm:$0xf]
      %v283 = vld [vmem:[%s1 + $0xfc] sm:$0xf]
      %v284 = vld [vmem:[#allocation2] sm:$0x1]
      %v286 = vlaneseq
      %v287 = vshrl.u32 %v286, 7
      %v288 = vsub.s32 0, %v287
      %v289 = vrot.slane %v284, %v288
      %v295 = vunpack.c.l.b16 %v216
      %v296 = vunpack.c.h.b16 %v216
      %v297 = vunpack.c.l.b16 %v217
      %v298 = vunpack.c.h.b16 %v217
      %v299 = vunpack.c.l.b16 %v218
      %v300 = vunpack.c.h.b16 %v218
      %v301 = vunpack.c.l.b16 %v219
      %v302 = vunpack.c.h.b16 %v219
      %v303 = vpack.c.b16 %v299, %v295
      %v304 = vpack.c.b16 %v300, %v296
      %v305 = vpack.c.b16 %v301, %v297
      %v306 = vpack.c.b16 %v302, %v298
      %v375 = vunpack.c.l.b16 %v220
      %v376 = vunpack.c.l.b16 %v221
      %v377 = vunpack.c.l.b16 %v222
      %v378 = vunpack.c.l.b16 %v223
      %v379 = vunpack.c.l.b16 %v224
      %v380 = vunpack.c.l.b16 %v225
      %v381 = vunpack.c.l.b16 %v226
      %v382 = vunpack.c.l.b16 %v227
      %v383 = vunpack.c.l.b16 %v228
      %v384 = vunpack.c.l.b16 %v229
      %v385 = vunpack.c.l.b16 %v230
      %v386 = vunpack.c.l.b16 %v231
      %v387 = vunpack.c.l.b16 %v232
      %v388 = vunpack.c.l.b16 %v233
      %v389 = vunpack.c.l.b16 %v234
      %v390 = vunpack.c.l.b16 %v235
      %v391 = vunpack.c.l.b16 %v236
      %v392 = vunpack.c.l.b16 %v237
      %v393 = vunpack.c.l.b16 %v238
      %v394 = vunpack.c.l.b16 %v239
      %v395 = vunpack.c.l.b16 %v240
      %v396 = vunpack.c.l.b16 %v241
      %v397 = vunpack.c.l.b16 %v242
      %v398 = vunpack.c.l.b16 %v243
      %v399 = vunpack.c.l.b16 %v244
      %v400 = vunpack.c.l.b16 %v245
      %v401 = vunpack.c.l.b16 %v246
      %v402 = vunpack.c.l.b16 %v247
      %v403 = vunpack.c.l.b16 %v248
      %v404 = vunpack.c.l.b16 %v249
      %v405 = vunpack.c.l.b16 %v250
      %v406 = vunpack.c.l.b16 %v251
      %v407 = vunpack.c.l.b16 %v252
      %v408 = vunpack.c.l.b16 %v253
      %v409 = vunpack.c.l.b16 %v254
      %v410 = vunpack.c.l.b16 %v255
      %v411 = vunpack.c.l.b16 %v256
      %v412 = vunpack.c.l.b16 %v257
      %v413 = vunpack.c.l.b16 %v258
      %v414 = vunpack.c.l.b16 %v259
      %v415 = vunpack.c.l.b16 %v260
      %v416 = vunpack.c.l.b16 %v261
      %v417 = vunpack.c.l.b16 %v262
      %v418 = vunpack.c.l.b16 %v263
      %v419 = vunpack.c.l.b16 %v264
      %v420 = vunpack.c.l.b16 %v265
      %v421 = vunpack.c.l.b16 %v266
      %v422 = vunpack.c.l.b16 %v267
      %v423 = vunpack.c.l.b16 %v268
      %v424 = vunpack.c.l.b16 %v269
      %v425 = vunpack.c.l.b16 %v270
      %v426 = vunpack.c.l.b16 %v271
      %v427 = vunpack.c.l.b16 %v272
      %v428 = vunpack.c.l.b16 %v273
      %v429 = vunpack.c.l.b16 %v274
      %v430 = vunpack.c.l.b16 %v275
      %v431 = vunpack.c.l.b16 %v276
      %v432 = vunpack.c.l.b16 %v277
      %v433 = vunpack.c.l.b16 %v278
      %v434 = vunpack.c.l.b16 %v279
      %v435 = vunpack.c.l.b16 %v280
      %v436 = vunpack.c.l.b16 %v281
      %v437 = vunpack.c.l.b16 %v282
      %v438 = vunpack.c.l.b16 %v283
      %v439 = vpack.c.b16 %v376, %v375
      %v440 = vpack.c.b16 %v378, %v377
      %v441 = vpack.c.b16 %v380, %v379
      %v442 = vpack.c.b16 %v382, %v381
      %v443 = vpack.c.b16 %v384, %v383
      %v444 = vpack.c.b16 %v386, %v385
      %v445 = vpack.c.b16 %v388, %v387
      %v446 = vpack.c.b16 %v390, %v389
      %v447 = vpack.c.b16 %v392, %v391
      %v448 = vpack.c.b16 %v394, %v393
      %v449 = vpack.c.b16 %v396, %v395
      %v450 = vpack.c.b16 %v398, %v397
      %v451 = vpack.c.b16 %v400, %v399
      %v452 = vpack.c.b16 %v402, %v401
      %v453 = vpack.c.b16 %v404, %v403
      %v454 = vpack.c.b16 %v406, %v405
      %v455 = vpack.c.b16 %v408, %v407
      %v456 = vpack.c.b16 %v410, %v409
      %v457 = vpack.c.b16 %v412, %v411
      %v458 = vpack.c.b16 %v414, %v413
      %v459 = vpack.c.b16 %v416, %v415
      %v460 = vpack.c.b16 %v418, %v417
      %v461 = vpack.c.b16 %v420, %v419
      %v462 = vpack.c.b16 %v422, %v421
      %v463 = vpack.c.b16 %v424, %v423
      %v464 = vpack.c.b16 %v426, %v425
      %v465 = vpack.c.b16 %v428, %v427
      %v466 = vpack.c.b16 %v430, %v429
      %v467 = vpack.c.b16 %v432, %v431
      %v468 = vpack.c.b16 %v434, %v433
      %v469 = vpack.c.b16 %v436, %v435
      %v470 = vpack.c.b16 %v438, %v437
      %503 = vmatprep.subr.bf16.mxu0 0
      %504 = vmatpush1.bf16.msra.mxu0 %v439
      %505 = vmatprep.subr.bf16.mxu0 0
      %506 = vmatpush1.bf16.msra.mxu0 %v440
      %507 = vmatprep.subr.bf16.mxu0 0
      %508 = vmatpush1.bf16.msra.mxu0 %v441
      %509 = vmatprep.subr.bf16.mxu0 0
      %510 = vmatpush1.bf16.msra.mxu0 %v442
      %511 = vmatprep.subr.bf16.mxu0 0
      %512 = vmatpush1.bf16.msra.mxu0 %v443
      %513 = vmatprep.subr.bf16.mxu0 0
      %514 = vmatpush1.bf16.msra.mxu0 %v444
      %515 = vmatprep.subr.bf16.mxu0 0
      %516 = vmatpush1.bf16.msra.mxu0 %v445
      %517 = vmatprep.subr.bf16.mxu0 0
      %518 = vmatpush1.bf16.msra.mxu0 %v446
      %519 = vmatprep.subr.bf16.mxu0 0
      %520 = vmatpush1.bf16.msra.mxu0 %v447
      %521 = vmatprep.subr.bf16.mxu0 0
      %522 = vmatpush1.bf16.msra.mxu0 %v448
      %523 = vmatprep.subr.bf16.mxu0 0
      %524 = vmatpush1.bf16.msra.mxu0 %v449
      %525 = vmatprep.subr.bf16.mxu0 0
      %526 = vmatpush1.bf16.msra.mxu0 %v450
      %527 = vmatprep.subr.bf16.mxu0 0
      %528 = vmatpush1.bf16.msra.mxu0 %v451
      %529 = vmatprep.subr.bf16.mxu0 0
      %530 = vmatpush1.bf16.msra.mxu0 %v452
      %531 = vmatprep.subr.bf16.mxu0 0
      %532 = vmatpush1.bf16.msra.mxu0 %v453
      %533 = vmatprep.subr.bf16.mxu0 0
      %534 = vmatpush1.bf16.msra.mxu0 %v454
      %535 = vmatprep.mubr.bf16.mxu0 %v304
      %536 = vmatmul.mubr.bf16.gmra.mrb[0].mxu0 %v303
      %v537 = vpop.f32.mrb[0].mxu0
      %v538 = vadd.f32 %v289, %v537
      %v539 = vpop.f32.mrb[0].mxu0
      %v540 = vpop.f32.mrb[0].mxu0
      %v541 = vadd.f32 %v289, %v540
      %v542 = vpop.f32.mrb[0].mxu0
      %543 = vdwg.mxu0
      %544 = vmatprep.subr.bf16.mxu0 0
      %545 = vmatpush1.bf16.msra.mxu0 %v455
      %546 = vmatprep.subr.bf16.mxu0 0
      %547 = vmatpush1.bf16.msra.mxu0 %v456
      %548 = vmatprep.subr.bf16.mxu0 0
      %549 = vmatpush1.bf16.msra.mxu0 %v457
      %550 = vmatprep.subr.bf16.mxu0 0
      %551 = vmatpush1.bf16.msra.mxu0 %v458
      %552 = vmatprep.subr.bf16.mxu0 0
      %553 = vmatpush1.bf16.msra.mxu0 %v459
      %554 = vmatprep.subr.bf16.mxu0 0
      %555 = vmatpush1.bf16.msra.mxu0 %v460
      %556 = vmatprep.subr.bf16.mxu0 0
      %557 = vmatpush1.bf16.msra.mxu0 %v461
      %558 = vmatprep.subr.bf16.mxu0 0
      %559 = vmatpush1.bf16.msra.mxu0 %v462
      %560 = vmatprep.subr.bf16.mxu0 0
      %561 = vmatpush1.bf16.msra.mxu0 %v463
      %562 = vmatprep.subr.bf16.mxu0 0
      %563 = vmatpush1.bf16.msra.mxu0 %v464
      %564 = vmatprep.subr.bf16.mxu0 0
      %565 = vmatpush1.bf16.msra.mxu0 %v465
      %566 = vmatprep.subr.bf16.mxu0 0
      %567 = vmatpush1.bf16.msra.mxu0 %v466
      %568 = vmatprep.subr.bf16.mxu0 0
      %569 = vmatpush1.bf16.msra.mxu0 %v467
      %570 = vmatprep.subr.bf16.mxu0 0
      %571 = vmatpush1.bf16.msra.mxu0 %v468
      %572 = vmatprep.subr.bf16.mxu0 0
      %573 = vmatpush1.bf16.msra.mxu0 %v469
      %574 = vmatprep.subr.bf16.mxu0 0
      %575 = vmatpush1.bf16.msra.mxu0 %v470
      %576 = vmatprep.mubr.bf16.mxu0 %v306
      %577 = vmatmul.mubr.bf16.gmra.mrb[0].mxu0 %v305
      %v578 = vpop.f32.mrb[0].mxu0
      %v579 = vadd.f32 %v538, %v578
      %v580 = vpop.f32.mrb[0].mxu0
      %v581 = vpop.f32.mrb[0].mxu0
      %v582 = vadd.f32 %v541, %v581
      %v583 = vpop.f32.mrb[0].mxu0
      %584 = vdwg.mxu0
      %vm585 = vcmask 7168
      %586 = vst.msk [vmem:[%s213] sm:$0xff] %vm585, %v579
      %587 = vst.msk [vmem:[%s213 + $0x8] sm:$0xff] %vm585, %v582
      %s588 = smul.u32 2, %s21
      %p589 = scmp.lt.s32.totalorder %s20, 1
      %s590 = scalar_select %p589, %s20, 1
      %p591 = scmp.lt.s32.totalorder %s588, 1
      %s592 = scalar_select %p591, %s588, 1
      %s593 = smul.addr %s590, 2
      %s594 = sadd.s32 %s592, %s593
      %s595 = smul.addr %s594, 8
      %s596 = scalar_lea.vmem %s3, %s595
      // Predicated region
      $region33: #{_lambda_.20} parent=31 // pred_check
        %p597 = pneg %p118
      $region34: #{_lambda_.20} parent=31 // pred_check_branch
        %599 = sbr.rel (%p597) target = $region36
      $region35: #{_lambda_.20} parent=31 // pred_region
        %s600 = smul.u32 2, %s21
      $region36: #{_lambda_.20} parent=31 // pred_fallthru
        _
    $region32: #{_lambda_.20} parent=5 // pred_fallthru
      _
    %p601 = scmp.le.s32.totalorder 2, %s11
    // Predicated region
    $region37: #{_lambda_.20} parent=5 // pred_check
      %p602 = pneg %p601
    $region38: #{_lambda_.20} parent=5 // pred_check_branch
      %604 = sbr.rel (%p602) target = $region40
    $region39: #{_lambda_.20} parent=5 // pred_region
      %s605 = ssub.s32 %s11, 2
      // Predicated region
      $region41: #{_lambda_.20} parent=39 // pred_check
        %p606 = pneg %p124
      $region42: #{_lambda_.20} parent=39 // pred_check_branch
        %608 = sbr.rel (%p606) target = $region44
      $region43: #{_lambda_.20} parent=39 // pred_region
        %s609 = smul.u32 2, %s23
        %p610 = scmp.lt.s32.totalorder %s22, 1
        %s611 = scalar_select %p610, %s22, 1
        %p612 = scmp.lt.s32.totalorder %s609, 1
        %s613 = scalar_select %p612, %s609, 1
        %s614 = smul.addr %s611, 2
        %s615 = sadd.s32 %s613, %s614
        %s616 = smul.addr %s615, 8
        %s617 = scalar_lea.vmem %s3, %s616
      $region44: #{_lambda_.20} parent=39 // pred_fallthru
        _
    $region40: #{_lambda_.20} parent=5 // pred_fallthru
      _
  $region6: #{_lambda_.20} parent=0 // loop_footer
    %s15 = sadd.s32 1, %s11
  $region7: #{_lambda_.20} parent=0 // loop_footer_branch
    %10 = sbr.rel target = $region3
  $region8: #{_lambda_.20} parent=0 // loop_exit
    _

// kernel: _lambda_.21
$region0: #{_lambda_.21}
  #allocation0 [shape = 'u32[]', space=smem, size = 0x4, offset = 0x4, fixed_abs, tag = 'smem constant byte address 0x4 - core index']
  #allocation1 [shape = 'u32[144,128]{1,0:T(1,128)}', space=vmem, size = 0x12000, scoped, tag = 'internal scratch']
  %s0 = inlined_call_operand.vmem [shape: bf16[2,16,128], index: 0, kind: input, shape index: {}]
  %s1 = inlined_call_operand.vmem [shape: bf16[128,8], index: 1, kind: input, shape index: {}]
  %s2 = inlined_call_operand.vmem [shape: f32[1,8], index: 2, kind: input, shape index: {}]
  %s3 = inlined_call_operand.vmem [shape: bf16[2,16,8], index: 3, kind: output, shape index: {}]
  %s4 = sld [smem:[#allocation0]]
  $region45: #{_lambda_.21} parent=0
    _
  %s6 = ssub.s32 1, %s4
  %s7 = scalar_select 0, %s6, %s4
  loop: start=0, step=1, limit=4
  $region2: #{_lambda_.21} parent=0 // loop_pre_header
    _
  $region3: #{_lambda_.21} parent=0 // loop_header
    %s9 = sphi 0, %s13
    %p10 = scmp.ge.s32.totalorder %s9, 4
    %s16 = sphi 0, %s28
    %s17 = sphi 0, %s24
    %s18 = sphi 0, %s16
    %s19 = sphi 0, %s17
    %s20 = sphi 0, %s18
    %s21 = sphi 0, %s19
    %s33 = sphi 0, %s35
    %s36 = sphi 0, %s33
    %s37 = sphi 0, %s36
    %s53 = sphi 0, %s37
    %s57 = sphi 0, %s57
    %s59 = sphi 0, %s57
    %s60 = sphi 0, %s59
    %s74 = sphi 0, %s60
    %s78 = sphi 0, %s78
    %s80 = sphi 0, %s78
    %s81 = sphi 0, %s80
    %s95 = sphi 0, %s81
    %s103 = sphi 0, %s105
    %s106 = sphi 0, %s103
    %s107 = sphi 0, %s106
    %s123 = sphi 0, %s107
  $region4: #{_lambda_.21} parent=0 // loop_header_branch
    %12 = sbr.rel (%p10) target = $region8
  $region5: #{_lambda_.21} parent=0 // loop_body
    %s14 = ssub.s32 %s9, 1
    %s15 = ssub.s32 %s9, 2
    %s22 = sadd.s32 1, %s17
    %p23 = scmp.ge.s32.totalorder %s22, 1
    %s24 = scalar_select %p23, 0, %s22
    %s25 = sadd.s32 1, %s16
    %s26 = scalar_select %p23, %s25, %s16
    %p27 = scmp.ge.s32.totalorder %s26, 2
    %s28 = scalar_select %p27, 0, %s26
    %s29 = ssub.s32 %s16, %s28
    %s30 = ssub.s32 %s17, %s24
    %s31 = sor.u32 %s29, %s30
    %p32 = scmp.eq.s32.totalorder %s31, 0
    %s34 = sadd.s32 %s33, 1
    %s35 = scalar_select %p32, %s33, %s34
    %p38 = pneg %p32
    %p39 = scmp.eq.s32.totalorder %s9, 1
    %p40 = por %p38, %p39
    %p41 = scmp.ne.s32.totalorder %s33, %s36
    %p42 = scmp.eq.s32.totalorder %s9, 0
    %p43 = por %p41, %p42
    %p44 = scmp.ne.s32.totalorder %s33, %s36
    %p45 = scmp.eq.s32.totalorder %s14, 1
    %p46 = por %p44, %p45
    %p47 = scmp.ne.s32.totalorder %s36, %s37
    %p48 = scmp.eq.s32.totalorder %s14, 0
    %p49 = por %p47, %p48
    %p50 = scmp.ne.s32.totalorder %s36, %s37
    %p51 = scmp.eq.s32.totalorder %s15, 1
    %p52 = por %p50, %p51
    %p54 = scmp.ne.s32.totalorder %s37, %s53
    %p55 = scmp.eq.s32.totalorder %s15, 0
    %p56 = por %p54, %p55
    %s58 = sadd.s32 %s57, 1
    %p61 = scmp.eq.s32.totalorder %s9, 1
    %p62 = scmp.ne.s32.totalorder %s57, %s59
    %p63 = scmp.eq.s32.totalorder %s9, 0
    %p64 = por %p62, %p63
    %p65 = scmp.ne.s32.totalorder %s57, %s59
    %p66 = scmp.eq.s32.totalorder %s14, 1
    %p67 = por %p65, %p66
    %p68 = scmp.ne.s32.totalorder %s59, %s60
    %p69 = scmp.eq.s32.totalorder %s14, 0
    %p70 = por %p68, %p69
    %p71 = scmp.ne.s32.totalorder %s59, %s60
    %p72 = scmp.eq.s32.totalorder %s15, 1
    %p73 = por %p71, %p72
    %p75 = scmp.ne.s32.totalorder %s60, %s74
    %p76 = scmp.eq.s32.totalorder %s15, 0
    %p77 = por %p75, %p76
    %s79 = sadd.s32 %s78, 1
    %p82 = scmp.eq.s32.totalorder %s9, 1
    %p83 = scmp.ne.s32.totalorder %s78, %s80
    %p84 = scmp.eq.s32.totalorder %s9, 0
    %p85 = por %p83, %p84
    %p86 = scmp.ne.s32.totalorder %s78, %s80
    %p87 = scmp.eq.s32.totalorder %s14, 1
    %p88 = por %p86, %p87
    %p89 = scmp.ne.s32.totalorder %s80, %s81
    %p90 = scmp.eq.s32.totalorder %s14, 0
    %p91 = por %p89, %p90
    %p92 = scmp.ne.s32.totalorder %s80, %s81
    %p93 = scmp.eq.s32.totalorder %s15, 1
    %p94 = por %p92, %p93
    %p96 = scmp.ne.s32.totalorder %s81, %s95
    %p97 = scmp.eq.s32.totalorder %s15, 0
    %p98 = por %p96, %p97
    %s99 = ssub.s32 %s16, %s28
    %s100 = ssub.s32 %s17, %s24
    %s101 = sor.u32 %s99, %s100
    %p102 = scmp.eq.s32.totalorder %s101, 0
    %s104 = sadd.s32 %s103, 1
    %s105 = scalar_select %p102, %s103, %s104
    %p108 = pneg %p102
    %p109 = scmp.eq.s32.totalorder %s9, 1
    %p110 = por %p108, %p109
    %p111 = scmp.ne.s32.totalorder %s103, %s106
    %p112 = scmp.eq.s32.totalorder %s9, 0
    %p113 = por %p111, %p112
    %p114 = scmp.ne.s32.totalorder %s103, %s106
    %p115 = scmp.eq.s32.totalorder %s14, 1
    %p116 = por %p114, %p115
    %p117 = scmp.ne.s32.totalorder %s106, %s107
    %p118 = scmp.eq.s32.totalorder %s14, 0
    %p119 = por %p117, %p118
    %p120 = scmp.ne.s32.totalorder %s106, %s107
    %p121 = scmp.eq.s32.totalorder %s15, 1
    %p122 = por %p120, %p121
    %p124 = scmp.ne.s32.totalorder %s107, %s123
    %p125 = scmp.eq.s32.totalorder %s15, 0
    %p126 = por %p124, %p125
    %p127 = scmp.le.s32.totalorder 1, %s9
    %p128 = scmp.lt.s32.totalorder %s9, 3
    %p129 = pnand %p127, %p128
    %p130 = pneg %p129
    // Predicated region
    $region9: #{_lambda_.21} parent=5 // pred_check
      _
    $region10: #{_lambda_.21} parent=5 // pred_check_branch
      %132 = sbr.rel (%p129) target = $region12
    $region11: #{_lambda_.21} parent=5 // pred_region
      %s133 = ssub.s32 %s9, 1
      // Predicated region
      $region13: #{_lambda_.21} parent=11 // pred_check
        %p134 = pneg %p70
      $region14: #{_lambda_.21} parent=11 // pred_check_branch
        %136 = sbr.rel (%p134) target = $region16
      $region15: #{_lambda_.21} parent=11 // pred_region
        _
      $region16: #{_lambda_.21} parent=11 // pred_fallthru
        _
      // Predicated region
      $region17: #{_lambda_.21} parent=11 // pred_check
        %p137 = pneg %p91
      $region18: #{_lambda_.21} parent=11 // pred_check_branch
        %139 = sbr.rel (%p137) target = $region20
      $region19: #{_lambda_.21} parent=11 // pred_region
        _
      $region20: #{_lambda_.21} parent=11 // pred_fallthru
        _
    $region12: #{_lambda_.21} parent=5 // pred_fallthru
      _
    %p140 = scmp.lt.s32.totalorder %s9, 2
    // Predicated region
    $region21: #{_lambda_.21} parent=5 // pred_check
      %p141 = pneg %p140
    $region22: #{_lambda_.21} parent=5 // pred_check_branch
      %143 = sbr.rel (%p141) target = $region24
    $region23: #{_lambda_.21} parent=5 // pred_region
      // Predicated region
      $region25: #{_lambda_.21} parent=23 // pred_check
        %p144 = pneg %p43
      $region26: #{_lambda_.21} parent=23 // pred_check_branch
        %146 = sbr.rel (%p144) target = $region28
      $region27: #{_lambda_.21} parent=23 // pred_region
        %s147 = smul.u32 2, %s17
        %p148 = scmp.lt.s32.totalorder %s16, 1
        %s149 = scalar_select %p148, %s16, 1
        %p150 = scmp.lt.s32.totalorder %s147, 1
        %s151 = scalar_select %p150, %s147, 1
        %s152 = smul.addr %s149, 2
        %s153 = sadd.s32 %s151, %s152
        %s154 = smul.addr %s153, 4
        %s155 = scalar_lea.vmem %s0, %s154
        %s156 = smul.u32 2, %s17
      $region28: #{_lambda_.21} parent=23 // pred_fallthru
        _
    $region24: #{_lambda_.21} parent=5 // pred_fallthru
      _
    %p157 = scmp.le.s32.totalorder 1, %s9
    %p158 = scmp.lt.s32.totalorder %s9, 3
    %p159 = pnand %p157, %p158
    %p160 = pneg %p159
    // Predicated region
    $region29: #{_lambda_.21} parent=5 // pred_check
      _
    $region30: #{_lambda_.21} parent=5 // pred_check_branch
      %162 = sbr.rel (%p159) target = $region32
    $region31: #{_lambda_.21} parent=5 // pred_region
      %s163 = ssub.s32 %s9, 1
      %s164 = smul.u32 2, %s19
      %p165 = scmp.lt.s32.totalorder %s18, 1
      %s166 = scalar_select %p165, %s18, 1
      %p167 = scmp.lt.s32.totalorder %s164, 1
      %s168 = scalar_select %p167, %s164, 1
      %s169 = smul.addr %s166, 2
      %s170 = sadd.s32 %s168, %s169
      %s171 = smul.addr %s170, 4
      %s172 = scalar_lea.vmem %s0, %s171
      %p173 = pneg %p49
      %p174 = pneg %p46
      %p175 = pneg %p70
      %p176 = pneg %p67
      %p177 = pneg %p91
      %p178 = pneg %p88
      %p179 = pneg %p119
      %p180 = pneg %p116
      %s181 = smul.u32 2, %s19
      %p182 = scmp.lt.s32.totalorder %s18, 1
      %s183 = scalar_select %p182, %s18, 1
      %p184 = scmp.lt.s32.totalorder %s181, 1
      %s185 = scalar_select %p184, %s181, 1
      %s186 = smul.addr %s183, 2
      %s187 = sadd.s32 %s185, %s186
      %s188 = smul.addr %s187, 4
      %s189 = scalar_lea.vmem %s3, %s188
      %s190 = smul.u32 2, %s19
      %p191 = scmp.lt.s32.totalorder %s18, 1
      %s192 = scalar_select %p191, %s18, 1
      %p193 = scmp.lt.s32.totalorder %s190, 1
      %s194 = scalar_select %p193, %s190, 1
      %s195 = smul.addr %s192, 2
      %s196 = sadd.s32 %s194, %s195
      %s197 = smul.addr %s196, 4
      %s198 = scalar_lea.vmem %s0, %s197
      %s199 = smul.u32 2, %s19
      %s200 = smul.u32 2, %s19
      %p201 = scmp.lt.s32.totalorder %s18, 1
      %s202 = scalar_select %p201, %s18, 1
      %p203 = scmp.lt.s32.totalorder %s200, 1
      %s204 = scalar_select %p203, %s200, 1
      %s205 = smul.addr %s202, 2
      %s206 = sadd.s32 %s204, %s205
      %s207 = smul.addr %s206, 4
      %s208 = scalar_lea.vmem %s3, %s207
      %s209 = smul.u32 2, %s19
      %v211 = vld [vmem:[%s198] sm:$0xf]
      %v212 = vld [vmem:[%s198 + $0x4] sm:$0xf]
      %v213 = vld [vmem:[%s1] sm:$0xf]
      %v214 = vld [vmem:[%s1 + $0x4] sm:$0xf]
      %v215 = vld [vmem:[%s1 + $0x8] sm:$0xf]
      %v216 = vld [vmem:[%s1 + $0xc] sm:$0xf]
      %v217 = vld [vmem:[%s1 + $0x10] sm:$0xf]
      %v218 = vld [vmem:[%s1 + $0x14] sm:$0xf]
      %v219 = vld [vmem:[%s1 + $0x18] sm:$0xf]
      %v220 = vld [vmem:[%s1 + $0x1c] sm:$0xf]
      %v221 = vld [vmem:[%s1 + $0x20] sm:$0xf]
      %v222 = vld [vmem:[%s1 + $0x24] sm:$0xf]
      %v223 = vld [vmem:[%s1 + $0x28] sm:$0xf]
      %v224 = vld [vmem:[%s1 + $0x2c] sm:$0xf]
      %v225 = vld [vmem:[%s1 + $0x30] sm:$0xf]
      %v226 = vld [vmem:[%s1 + $0x34] sm:$0xf]
      %v227 = vld [vmem:[%s1 + $0x38] sm:$0xf]
      %v228 = vld [vmem:[%s1 + $0x3c] sm:$0xf]
      %v229 = vld [vmem:[%s2] sm:$0x1]
      %v231 = vlaneseq
      %v232 = vshrl.u32 %v231, 7
      %v233 = vsub.s32 0, %v232
      %v234 = vrot.slane %v229, %v233
      %v238 = vunpack.c.l.b16 %v211
      %v239 = vunpack.c.l.b16 %v212
      %v240 = vpack.c.b16 %v239, %v238
      %v258 = vunpack.c.l.b16 %v213
      %v259 = vunpack.c.l.b16 %v214
      %v260 = vunpack.c.l.b16 %v215
      %v261 = vunpack.c.l.b16 %v216
      %v262 = vunpack.c.l.b16 %v217
      %v263 = vunpack.c.l.b16 %v218
      %v264 = vunpack.c.l.b16 %v219
      %v265 = vunpack.c.l.b16 %v220
      %v266 = vunpack.c.l.b16 %v221
      %v267 = vunpack.c.l.b16 %v222
      %v268 = vunpack.c.l.b16 %v223
      %v269 = vunpack.c.l.b16 %v224
      %v270 = vunpack.c.l.b16 %v225
      %v271 = vunpack.c.l.b16 %v226
      %v272 = vunpack.c.l.b16 %v227
      %v273 = vunpack.c.l.b16 %v228
      %v274 = vpack.c.b16 %v259, %v258
      %v275 = vpack.c.b16 %v261, %v260
      %v276 = vpack.c.b16 %v263, %v262
      %v277 = vpack.c.b16 %v265, %v264
      %v278 = vpack.c.b16 %v267, %v266
      %v279 = vpack.c.b16 %v269, %v268
      %v280 = vpack.c.b16 %v271, %v270
      %v281 = vpack.c.b16 %v273, %v272
      %290 = vmatprep.subr.bf16.mxu0 0
      %291 = vmatpush1.bf16.msra.mxu0 %v274
      %292 = vmatprep.subr.bf16.mxu0 0
      %293 = vmatpush1.bf16.msra.mxu0 %v275
      %294 = vmatprep.subr.bf16.mxu0 0
      %295 = vmatpush1.bf16.msra.mxu0 %v276
      %296 = vmatprep.subr.bf16.mxu0 0
      %297 = vmatpush1.bf16.msra.mxu0 %v277
      %298 = vmatprep.subr.bf16.mxu0 0
      %299 = vmatpush1.bf16.msra.mxu0 %v278
      %300 = vmatprep.subr.bf16.mxu0 0
      %301 = vmatpush1.bf16.msra.mxu0 %v279
      %302 = vmatprep.subr.bf16.mxu0 0
      %303 = vmatpush1.bf16.msra.mxu0 %v280
      %304 = vmatprep.subr.bf16.mxu0 0
      %305 = vmatpush1.bf16.msra.mxu0 %v281
      %306 = vmatprep.subr.bf16.mxu0 0
      %307 = vmatpush1.bf16.msra.mxu0 0
      %308 = vmatprep.subr.bf16.mxu0 0
      %309 = vmatpush1.bf16.msra.mxu0 0
      %310 = vmatprep.subr.bf16.mxu0 0
      %311 = vmatpush1.bf16.msra.mxu0 0
      %312 = vmatprep.subr.bf16.mxu0 0
      %313 = vmatpush1.bf16.msra.mxu0 0
      %314 = vmatprep.subr.bf16.mxu0 0
      %315 = vmatpush1.bf16.msra.mxu0 0
      %316 = vmatprep.subr.bf16.mxu0 0
      %317 = vmatpush1.bf16.msra.mxu0 0
      %318 = vmatprep.subr.bf16.mxu0 0
      %319 = vmatpush1.bf16.msra.mxu0 0
      %320 = vmatprep.subr.bf16.mxu0 0
      %321 = vmatpush1.bf16.msra.mxu0 0
      %322 = vmatprep.mubr.bf16.mxu0 0
      %323 = vmatmul.mubr.bf16.gmra.mrb[0].mxu0 %v240
      %v324 = vpop.f32.mrb[0].mxu0
      %v325 = vadd.f32 %v234, %v324
      %v326 = vpop.f32.mrb[0].mxu0
      %v327 = vpop.f32.mrb[0].mxu0
      %v328 = vadd.f32 %v234, %v327
      %v329 = vpop.f32.mrb[0].mxu0
      %330 = vdwg.mxu0
      %vm331 = vcmp.ge.f32.partialorder %v325, 0.0
      %vm332 = vcmp.ge.f32.partialorder %v328, 0.0
      %v333 = vmul.f32 %v325, 0.2
      %v334 = vmul.f32 %v328, 0.2
      %v335 = vsel %vm331, %v325, %v333
      %v336 = vsel %vm332, %v328, %v334
      %v337 = vpack.c.bf16 %v336, %v335
      %v339 = vunpack.c.l.b16 %v337
      %v340 = vunpack.c.h.b16 %v337
      %v341 = vpack.c.b16 %v339, %v339
      %v342 = vpack.c.b16 %v340, %v340
      %vm345 = vcmask 60416
      %346 = vst.msk [vmem:[%s208] sm:$0xf] %vm345, %v341
      %347 = vst.msk [vmem:[%s208 + $0x4] sm:$0xf] %vm345, %v342
      %s348 = smul.u32 2, %s19
      %p349 = scmp.lt.s32.totalorder %s18, 1
      %s350 = scalar_select %p349, %s18, 1
      %p351 = scmp.lt.s32.totalorder %s348, 1
      %s352 = scalar_select %p351, %s348, 1
      %s353 = smul.addr %s350, 2
      %s354 = sadd.s32 %s352, %s353
      %s355 = smul.addr %s354, 4
      %s356 = scalar_lea.vmem %s3, %s355
      // Predicated region
      $region33: #{_lambda_.21} parent=31 // pred_check
        %p357 = pneg %p116
      $region34: #{_lambda_.21} parent=31 // pred_check_branch
        %359 = sbr.rel (%p357) target = $region36
      $region35: #{_lambda_.21} parent=31 // pred_region
        %s360 = smul.u32 2, %s19
      $region36: #{_lambda_.21} parent=31 // pred_fallthru
        _
    $region32: #{_lambda_.21} parent=5 // pred_fallthru
      _
    %p361 = scmp.le.s32.totalorder 2, %s9
    // Predicated region
    $region37: #{_lambda_.21} parent=5 // pred_check
      %p362 = pneg %p361
    $region38: #{_lambda_.21} parent=5 // pred_check_branch
      %364 = sbr.rel (%p362) target = $region40
    $region39: #{_lambda_.21} parent=5 // pred_region
      %s365 = ssub.s32 %s9, 2
      // Predicated region
      $region41: #{_lambda_.21} parent=39 // pred_check
        %p366 = pneg %p122
      $region42: #{_lambda_.21} parent=39 // pred_check_branch
        %368 = sbr.rel (%p366) target = $region44
      $region43: #{_lambda_.21} parent=39 // pred_region
        %s369 = smul.u32 2, %s21
        %p370 = scmp.lt.s32.totalorder %s20, 1
        %s371 = scalar_select %p370, %s20, 1
        %p372 = scmp.lt.s32.totalorder %s369, 1
        %s373 = scalar_select %p372, %s369, 1
        %s374 = smul.addr %s371, 2
        %s375 = sadd.s32 %s373, %s374
        %s376 = smul.addr %s375, 4
        %s377 = scalar_lea.vmem %s3, %s376
      $region44: #{_lambda_.21} parent=39 // pred_fallthru
        _
    $region40: #{_lambda_.21} parent=5 // pred_fallthru
      _
  $region6: #{_lambda_.21} parent=0 // loop_footer
    %s13 = sadd.s32 1, %s9
  $region7: #{_lambda_.21} parent=0 // loop_footer_branch
    %8 = sbr.rel target = $region3
  $region8: #{_lambda_.21} parent=0 // loop_exit
    _

// kernel: _lambda_.23
$region0: #{_lambda_.23}
  #allocation0 [shape = 'u32[]', space=smem, size = 0x4, offset = 0x4, fixed_abs, tag = 'smem constant byte address 0x4 - core index']
  #allocation1 [shape = 'u32[144,128]{1,0:T(1,128)}', space=vmem, size = 0x12000, scoped, tag = 'internal scratch']
  #allocation2 [shape = 'f32[1,1]{1,0:T(1,128)S(1)}', space=vmem, size = 0x200, scoped, tag = 'scoped memory for _lambda_.23']
  %s0 = inlined_call_operand.vmem [shape: bf16[2,16,256], index: 0, kind: input, shape index: {}]
  %s1 = inlined_call_operand.vmem [shape: bf16[256,1], index: 1, kind: input, shape index: {}]
  %s2 = inlined_call_operand.<no memory space> [shape: f32[1,1], index: 2, kind: input, shape index: {}]
  %s3 = inlined_call_operand.vmem [shape: f32[2,16,1], index: 3, kind: output, shape index: {}]
  %s4 = sld [smem:[#allocation0]]
  $region45: #{_lambda_.23} parent=0
    _
  %s6 = ssub.s32 1, %s4
  %s7 = scalar_select 0, %s6, %s4
  %v8 = vstv %s2
  %9 = vst [vmem:[#allocation2] sm:$0x1] %v8
  loop: start=0, step=1, limit=4
  $region2: #{_lambda_.23} parent=0 // loop_pre_header
    _
  $region3: #{_lambda_.23} parent=0 // loop_header
    %s11 = sphi 0, %s15
    %p12 = scmp.ge.s32.totalorder %s11, 4
    %s18 = sphi 0, %s30
    %s19 = sphi 0, %s26
    %s20 = sphi 0, %s18
    %s21 = sphi 0, %s19
    %s22 = sphi 0, %s20
    %s23 = sphi 0, %s21
    %s35 = sphi 0, %s37
    %s38 = sphi 0, %s35
    %s39 = sphi 0, %s38
    %s55 = sphi 0, %s39
    %s59 = sphi 0, %s59
    %s61 = sphi 0, %s59
    %s62 = sphi 0, %s61
    %s76 = sphi 0, %s62
    %s80 = sphi 0, %s80
    %s82 = sphi 0, %s80
    %s83 = sphi 0, %s82
    %s97 = sphi 0, %s83
    %s105 = sphi 0, %s107
    %s108 = sphi 0, %s105
    %s109 = sphi 0, %s108
    %s125 = sphi 0, %s109
  $region4: #{_lambda_.23} parent=0 // loop_header_branch
    %14 = sbr.rel (%p12) target = $region8
  $region5: #{_lambda_.23} parent=0 // loop_body
    %s16 = ssub.s32 %s11, 1
    %s17 = ssub.s32 %s11, 2
    %s24 = sadd.s32 1, %s19
    %p25 = scmp.ge.s32.totalorder %s24, 1
    %s26 = scalar_select %p25, 0, %s24
    %s27 = sadd.s32 1, %s18
    %s28 = scalar_select %p25, %s27, %s18
    %p29 = scmp.ge.s32.totalorder %s28, 2
    %s30 = scalar_select %p29, 0, %s28
    %s31 = ssub.s32 %s18, %s30
    %s32 = ssub.s32 %s19, %s26
    %s33 = sor.u32 %s31, %s32
    %p34 = scmp.eq.s32.totalorder %s33, 0
    %s36 = sadd.s32 %s35, 1
    %s37 = scalar_select %p34, %s35, %s36
    %p40 = pneg %p34
    %p41 = scmp.eq.s32.totalorder %s11, 1
    %p42 = por %p40, %p41
    %p43 = scmp.ne.s32.totalorder %s35, %s38
    %p44 = scmp.eq.s32.totalorder %s11, 0
    %p45 = por %p43, %p44
    %p46 = scmp.ne.s32.totalorder %s35, %s38
    %p47 = scmp.eq.s32.totalorder %s16, 1
    %p48 = por %p46, %p47
    %p49 = scmp.ne.s32.totalorder %s38, %s39
    %p50 = scmp.eq.s32.totalorder %s16, 0
    %p51 = por %p49, %p50
    %p52 = scmp.ne.s32.totalorder %s38, %s39
    %p53 = scmp.eq.s32.totalorder %s17, 1
    %p54 = por %p52, %p53
    %p56 = scmp.ne.s32.totalorder %s39, %s55
    %p57 = scmp.eq.s32.totalorder %s17, 0
    %p58 = por %p56, %p57
    %s60 = sadd.s32 %s59, 1
    %p63 = scmp.eq.s32.totalorder %s11, 1
    %p64 = scmp.ne.s32.totalorder %s59, %s61
    %p65 = scmp.eq.s32.totalorder %s11, 0
    %p66 = por %p64, %p65
    %p67 = scmp.ne.s32.totalorder %s59, %s61
    %p68 = scmp.eq.s32.totalorder %s16, 1
    %p69 = por %p67, %p68
    %p70 = scmp.ne.s32.totalorder %s61, %s62
    %p71 = scmp.eq.s32.totalorder %s16, 0
    %p72 = por %p70, %p71
    %p73 = scmp.ne.s32.totalorder %s61, %s62
    %p74 = scmp.eq.s32.totalorder %s17, 1
    %p75 = por %p73, %p74
    %p77 = scmp.ne.s32.totalorder %s62, %s76
    %p78 = scmp.eq.s32.totalorder %s17, 0
    %p79 = por %p77, %p78
    %s81 = sadd.s32 %s80, 1
    %p84 = scmp.eq.s32.totalorder %s11, 1
    %p85 = scmp.ne.s32.totalorder %s80, %s82
    %p86 = scmp.eq.s32.totalorder %s11, 0
    %p87 = por %p85, %p86
    %p88 = scmp.ne.s32.totalorder %s80, %s82
    %p89 = scmp.eq.s32.totalorder %s16, 1
    %p90 = por %p88, %p89
    %p91 = scmp.ne.s32.totalorder %s82, %s83
    %p92 = scmp.eq.s32.totalorder %s16, 0
    %p93 = por %p91, %p92
    %p94 = scmp.ne.s32.totalorder %s82, %s83
    %p95 = scmp.eq.s32.totalorder %s17, 1
    %p96 = por %p94, %p95
    %p98 = scmp.ne.s32.totalorder %s83, %s97
    %p99 = scmp.eq.s32.totalorder %s17, 0
    %p100 = por %p98, %p99
    %s101 = ssub.s32 %s18, %s30
    %s102 = ssub.s32 %s19, %s26
    %s103 = sor.u32 %s101, %s102
    %p104 = scmp.eq.s32.totalorder %s103, 0
    %s106 = sadd.s32 %s105, 1
    %s107 = scalar_select %p104, %s105, %s106
    %p110 = pneg %p104
    %p111 = scmp.eq.s32.totalorder %s11, 1
    %p112 = por %p110, %p111
    %p113 = scmp.ne.s32.totalorder %s105, %s108
    %p114 = scmp.eq.s32.totalorder %s11, 0
    %p115 = por %p113, %p114
    %p116 = scmp.ne.s32.totalorder %s105, %s108
    %p117 = scmp.eq.s32.totalorder %s16, 1
    %p118 = por %p116, %p117
    %p119 = scmp.ne.s32.totalorder %s108, %s109
    %p120 = scmp.eq.s32.totalorder %s16, 0
    %p121 = por %p119, %p120
    %p122 = scmp.ne.s32.totalorder %s108, %s109
    %p123 = scmp.eq.s32.totalorder %s17, 1
    %p124 = por %p122, %p123
    %p126 = scmp.ne.s32.totalorder %s109, %s125
    %p127 = scmp.eq.s32.totalorder %s17, 0
    %p128 = por %p126, %p127
    %p129 = scmp.le.s32.totalorder 1, %s11
    %p130 = scmp.lt.s32.totalorder %s11, 3
    %p131 = pnand %p129, %p130
    %p132 = pneg %p131
    // Predicated region
    $region9: #{_lambda_.23} parent=5 // pred_check
      _
    $region10: #{_lambda_.23} parent=5 // pred_check_branch
      %134 = sbr.rel (%p131) target = $region12
    $region11: #{_lambda_.23} parent=5 // pred_region
      %s135 = ssub.s32 %s11, 1
      // Predicated region
      $region13: #{_lambda_.23} parent=11 // pred_check
        %p136 = pneg %p72
      $region14: #{_lambda_.23} parent=11 // pred_check_branch
        %138 = sbr.rel (%p136) target = $region16
      $region15: #{_lambda_.23} parent=11 // pred_region
        _
      $region16: #{_lambda_.23} parent=11 // pred_fallthru
        _
      // Predicated region
      $region17: #{_lambda_.23} parent=11 // pred_check
        %p139 = pneg %p93
      $region18: #{_lambda_.23} parent=11 // pred_check_branch
        %141 = sbr.rel (%p139) target = $region20
      $region19: #{_lambda_.23} parent=11 // pred_region
        _
      $region20: #{_lambda_.23} parent=11 // pred_fallthru
        _
    $region12: #{_lambda_.23} parent=5 // pred_fallthru
      _
    %p142 = scmp.lt.s32.totalorder %s11, 2
    // Predicated region
    $region21: #{_lambda_.23} parent=5 // pred_check
      %p143 = pneg %p142
    $region22: #{_lambda_.23} parent=5 // pred_check_branch
      %145 = sbr.rel (%p143) target = $region24
    $region23: #{_lambda_.23} parent=5 // pred_region
      // Predicated region
      $region25: #{_lambda_.23} parent=23 // pred_check
        %p146 = pneg %p45
      $region26: #{_lambda_.23} parent=23 // pred_check_branch
        %148 = sbr.rel (%p146) target = $region28
      $region27: #{_lambda_.23} parent=23 // pred_region
        %s149 = smul.u32 2, %s19
        %p150 = scmp.lt.s32.totalorder %s18, 1
        %s151 = scalar_select %p150, %s18, 1
        %p152 = scmp.lt.s32.totalorder %s149, 1
        %s153 = scalar_select %p152, %s149, 1
        %s154 = smul.addr %s153, 2
        %s155 = smul.addr %s151, 4
        %s156 = sadd.s32 %s154, %s155
        %s157 = smul.addr %s156, 4
        %s158 = scalar_lea.vmem %s0, %s157
        %s159 = smul.u32 2, %s19
      $region28: #{_lambda_.23} parent=23 // pred_fallthru
        _
    $region24: #{_lambda_.23} parent=5 // pred_fallthru
      _
    %p160 = scmp.le.s32.totalorder 1, %s11
    %p161 = scmp.lt.s32.totalorder %s11, 3
    %p162 = pnand %p160, %p161
    %p163 = pneg %p162
    // Predicated region
    $region29: #{_lambda_.23} parent=5 // pred_check
      _
    $region30: #{_lambda_.23} parent=5 // pred_check_branch
      %165 = sbr.rel (%p162) target = $region32
    $region31: #{_lambda_.23} parent=5 // pred_region
      %s166 = ssub.s32 %s11, 1
      %s167 = smul.u32 2, %s21
      %p168 = scmp.lt.s32.totalorder %s20, 1
      %s169 = scalar_select %p168, %s20, 1
      %p170 = scmp.lt.s32.totalorder %s167, 1
      %s171 = scalar_select %p170, %s167, 1
      %s172 = smul.addr %s171, 2
      %s173 = smul.addr %s169, 4
      %s174 = sadd.s32 %s172, %s173
      %s175 = smul.addr %s174, 4
      %s176 = scalar_lea.vmem %s0, %s175
      %p177 = pneg %p51
      %p178 = pneg %p48
      %p179 = pneg %p72
      %p180 = pneg %p69
      %p181 = pneg %p93
      %p182 = pneg %p90
      %p183 = pneg %p121
      %p184 = pneg %p118
      %s185 = smul.u32 2, %s21
      %p186 = scmp.lt.s32.totalorder %s20, 1
      %s187 = scalar_select %p186, %s20, 1
      %p188 = scmp.lt.s32.totalorder %s185, 1
      %s189 = scalar_select %p188, %s185, 1
      %s190 = smul.addr %s187, 2
      %s191 = sadd.s32 %s189, %s190
      %s192 = smul.addr %s191, 8
      %s193 = scalar_lea.vmem %s3, %s192
      %s194 = smul.u32 2, %s21
      %p195 = scmp.lt.s32.totalorder %s20, 1
      %s196 = scalar_select %p195, %s20, 1
      %p197 = scmp.lt.s32.totalorder %s194, 1
      %s198 = scalar_select %p197, %s194, 1
      %s199 = smul.addr %s198, 2
      %s200 = smul.addr %s196, 4
      %s201 = sadd.s32 %s199, %s200
      %s202 = smul.addr %s201, 4
      %s203 = scalar_lea.vmem %s0, %s202
      %s204 = smul.u32 2, %s21
      %s205 = smul.u32 2, %s21
      %p206 = scmp.lt.s32.totalorder %s20, 1
      %s207 = scalar_select %p206, %s20, 1
      %p208 = scmp.lt.s32.totalorder %s205, 1
      %s209 = scalar_select %p208, %s205, 1
      %s210 = smul.addr %s207, 2
      %s211 = sadd.s32 %s209, %s210
      %s212 = smul.addr %s211, 8
      %s213 = scalar_lea.vmem %s3, %s212
      %s214 = smul.u32 2, %s21
      %v216 = vld [vmem:[%s203] sm:$0xff]
      %v217 = vld [vmem:[%s203 + $0x8] sm:$0xff]
      %v218 = vld [vmem:[%s1] sm:$0xf]
      %v219 = vld [vmem:[%s1 + $0x4] sm:$0xf]
      %v220 = vld [vmem:[%s1 + $0x8] sm:$0xf]
      %v221 = vld [vmem:[%s1 + $0xc] sm:$0xf]
      %v222 = vld [vmem:[%s1 + $0x10] sm:$0xf]
      %v223 = vld [vmem:[%s1 + $0x14] sm:$0xf]
      %v224 = vld [vmem:[%s1 + $0x18] sm:$0xf]
      %v225 = vld [vmem:[%s1 + $0x1c] sm:$0xf]
      %v226 = vld [vmem:[%s1 + $0x20] sm:$0xf]
      %v227 = vld [vmem:[%s1 + $0x24] sm:$0xf]
      %v228 = vld [vmem:[%s1 + $0x28] sm:$0xf]
      %v229 = vld [vmem:[%s1 + $0x2c] sm:$0xf]
      %v230 = vld [vmem:[%s1 + $0x30] sm:$0xf]
      %v231 = vld [vmem:[%s1 + $0x34] sm:$0xf]
      %v232 = vld [vmem:[%s1 + $0x38] sm:$0xf]
      %v233 = vld [vmem:[%s1 + $0x3c] sm:$0xf]
      %v234 = vld [vmem:[%s1 + $0x40] sm:$0xf]
      %v235 = vld [vmem:[%s1 + $0x44] sm:$0xf]
      %v236 = vld [vmem:[%s1 + $0x48] sm:$0xf]
      %v237 = vld [vmem:[%s1 + $0x4c] sm:$0xf]
      %v238 = vld [vmem:[%s1 + $0x50] sm:$0xf]
      %v239 = vld [vmem:[%s1 + $0x54] sm:$0xf]
      %v240 = vld [vmem:[%s1 + $0x58] sm:$0xf]
      %v241 = vld [vmem:[%s1 + $0x5c] sm:$0xf]
      %v242 = vld [vmem:[%s1 + $0x60] sm:$0xf]
      %v243 = vld [vmem:[%s1 + $0x64] sm:$0xf]
      %v244 = vld [vmem:[%s1 + $0x68] sm:$0xf]
      %v245 = vld [vmem:[%s1 + $0x6c] sm:$0xf]
      %v246 = vld [vmem:[%s1 + $0x70] sm:$0xf]
      %v247 = vld [vmem:[%s1 + $0x74] sm:$0xf]
      %v248 = vld [vmem:[%s1 + $0x78] sm:$0xf]
      %v249 = vld [vmem:[%s1 + $0x7c] sm:$0xf]
      %v250 = vld [vmem:[#allocation2] sm:$0x1]
      %v252 = vlaneseq
      %v253 = vshrl.u32 %v252, 7
      %v254 = vsub.s32 0, %v253
      %v255 = vrot.slane %v250, %v254
      %v259 = vunpack.c.l.b16 %v216
      %v260 = vunpack.c.h.b16 %v216
      %v261 = vunpack.c.l.b16 %v217
      %v262 = vunpack.c.h.b16 %v217
      %v263 = vpack.c.b16 %v261, %v259
      %v264 = vpack.c.b16 %v262, %v260
      %v299 = vunpack.c.l.b16 %v218
      %v300 = vunpack.c.l.b16 %v219
      %v301 = vunpack.c.l.b16 %v220
      %v302 = vunpack.c.l.b16 %v221
      %v303 = vunpack.c.l.b16 %v222
      %v304 = vunpack.c.l.b16 %v223
      %v305 = vunpack.c.l.b16 %v224
      %v306 = vunpack.c.l.b16 %v225
      %v307 = vunpack.c.l.b16 %v226
      %v308 = vunpack.c.l.b16 %v227
      %v309 = vunpack.c.l.b16 %v228
      %v310 = vunpack.c.l.b16 %v229
      %v311 = vunpack.c.l.b16 %v230
      %v312 = vunpack.c.l.b16 %v231
      %v313 = vunpack.c.l.b16 %v232
      %v314 = vunpack.c.l.b16 %v233
      %v315 = vunpack.c.l.b16 %v234
      %v316 = vunpack.c.l.b16 %v235
      %v317 = vunpack.c.l.b16 %v236
      %v318 = vunpack.c.l.b16 %v237
      %v319 = vunpack.c.l.b16 %v238
      %v320 = vunpack.c.l.b16 %v239
      %v321 = vunpack.c.l.b16 %v240
      %v322 = vunpack.c.l.b16 %v241
      %v323 = vunpack.c.l.b16 %v242
      %v324 = vunpack.c.l.b16 %v243
      %v325 = vunpack.c.l.b16 %v244
      %v326 = vunpack.c.l.b16 %v245
      %v327 = vunpack.c.l.b16 %v246
      %v328 = vunpack.c.l.b16 %v247
      %v329 = vunpack.c.l.b16 %v248
      %v330 = vunpack.c.l.b16 %v249
      %v331 = vpack.c.b16 %v300, %v299
      %v332 = vpack.c.b16 %v302, %v301
      %v333 = vpack.c.b16 %v304, %v303
      %v334 = vpack.c.b16 %v306, %v305
      %v335 = vpack.c.b16 %v308, %v307
      %v336 = vpack.c.b16 %v310, %v309
      %v337 = vpack.c.b16 %v312, %v311
      %v338 = vpack.c.b16 %v314, %v313
      %v339 = vpack.c.b16 %v316, %v315
      %v340 = vpack.c.b16 %v318, %v317
      %v341 = vpack.c.b16 %v320, %v319
      %v342 = vpack.c.b16 %v322, %v321
      %v343 = vpack.c.b16 %v324, %v323
      %v344 = vpack.c.b16 %v326, %v325
      %v345 = vpack.c.b16 %v328, %v327
      %v346 = vpack.c.b16 %v330, %v329
      %363 = vmatprep.subr.bf16.mxu0 0
      %364 = vmatpush1.bf16.msra.mxu0 %v331
      %365 = vmatprep.subr.bf16.mxu0 0
      %366 = vmatpush1.bf16.msra.mxu0 %v332
      %367 = vmatprep.subr.bf16.mxu0 0
      %368 = vmatpush1.bf16.msra.mxu0 %v333
      %369 = vmatprep.subr.bf16.mxu0 0
      %370 = vmatpush1.bf16.msra.mxu0 %v334
      %371 = vmatprep.subr.bf16.mxu0 0
      %372 = vmatpush1.bf16.msra.mxu0 %v335
      %373 = vmatprep.subr.bf16.mxu0 0
      %374 = vmatpush1.bf16.msra.mxu0 %v336
      %375 = vmatprep.subr.bf16.mxu0 0
      %376 = vmatpush1.bf16.msra.mxu0 %v337
      %377 = vmatprep.subr.bf16.mxu0 0
      %378 = vmatpush1.bf16.msra.mxu0 %v338
      %379 = vmatprep.subr.bf16.mxu0 0
      %380 = vmatpush1.bf16.msra.mxu0 %v339
      %381 = vmatprep.subr.bf16.mxu0 0
      %382 = vmatpush1.bf16.msra.mxu0 %v340
      %383 = vmatprep.subr.bf16.mxu0 0
      %384 = vmatpush1.bf16.msra.mxu0 %v341
      %385 = vmatprep.subr.bf16.mxu0 0
      %386 = vmatpush1.bf16.msra.mxu0 %v342
      %387 = vmatprep.subr.bf16.mxu0 0
      %388 = vmatpush1.bf16.msra.mxu0 %v343
      %389 = vmatprep.subr.bf16.mxu0 0
      %390 = vmatpush1.bf16.msra.mxu0 %v344
      %391 = vmatprep.subr.bf16.mxu0 0
      %392 = vmatpush1.bf16.msra.mxu0 %v345
      %393 = vmatprep.subr.bf16.mxu0 0
      %394 = vmatpush1.bf16.msra.mxu0 %v346
      %395 = vmatprep.mubr.bf16.mxu0 %v264
      %396 = vmatmul.mubr.bf16.gmra.mrb[0].mxu0 %v263
      %v397 = vpop.f32.mrb[0].mxu0
      %v398 = vadd.f32 %v255, %v397
      %v399 = vpop.f32.mrb[0].mxu0
      %v400 = vpop.f32.mrb[0].mxu0
      %v401 = vadd.f32 %v255, %v400
      %v402 = vpop.f32.mrb[0].mxu0
      %403 = vdwg.mxu0
      %vm404 = vcmask 7168
      %405 = vst.msk [vmem:[%s213] sm:$0xff] %vm404, %v398
      %406 = vst.msk [vmem:[%s213 + $0x8] sm:$0xff] %vm404, %v401
      %s407 = smul.u32 2, %s21
      %p408 = scmp.lt.s32.totalorder %s20, 1
      %s409 = scalar_select %p408, %s20, 1
      %p410 = scmp.lt.s32.totalorder %s407, 1
      %s411 = scalar_select %p410, %s407, 1
      %s412 = smul.addr %s409, 2
      %s413 = sadd.s32 %s411, %s412
      %s414 = smul.addr %s413, 8
      %s415 = scalar_lea.vmem %s3, %s414
      // Predicated region
      $region33: #{_lambda_.23} parent=31 // pred_check
        %p416 = pneg %p118
      $region34: #{_lambda_.23} parent=31 // pred_check_branch
        %418 = sbr.rel (%p416) target = $region36
      $region35: #{_lambda_.23} parent=31 // pred_region
        %s419 = smul.u32 2, %s21
      $region36: #{_lambda_.23} parent=31 // pred_fallthru
        _
    $region32: #{_lambda_.23} parent=5 // pred_fallthru
      _
    %p420 = scmp.le.s32.totalorder 2, %s11
    // Predicated region
    $region37: #{_lambda_.23} parent=5 // pred_check
      %p421 = pneg %p420
    $region38: #{_lambda_.23} parent=5 // pred_check_branch
      %423 = sbr.rel (%p421) target = $region40
    $region39: #{_lambda_.23} parent=5 // pred_region
      %s424 = ssub.s32 %s11, 2
      // Predicated region
      $region41: #{_lambda_.23} parent=39 // pred_check
        %p425 = pneg %p124
      $region42: #{_lambda_.23} parent=39 // pred_check_branch
        %427 = sbr.rel (%p425) target = $region44
      $region43: #{_lambda_.23} parent=39 // pred_region
        %s428 = smul.u32 2, %s23
        %p429 = scmp.lt.s32.totalorder %s22, 1
        %s430 = scalar_select %p429, %s22, 1
        %p431 = scmp.lt.s32.totalorder %s428, 1
        %s432 = scalar_select %p431, %s428, 1
        %s433 = smul.addr %s430, 2
        %s434 = sadd.s32 %s432, %s433
        %s435 = smul.addr %s434, 8
        %s436 = scalar_lea.vmem %s3, %s435
      $region44: #{_lambda_.23} parent=39 // pred_fallthru
        _
    $region40: #{_lambda_.23} parent=5 // pred_fallthru
      _
  $region6: #{_lambda_.23} parent=0 // loop_footer
    %s15 = sadd.s32 1, %s11
  $region7: #{_lambda_.23} parent=0 // loop_footer_branch
    %10 = sbr.rel target = $region3
  $region8: #{_lambda_.23} parent=0 // loop_exit
    _

</llo_original>
